<compile_context>
chip_gen: v5e
topology: v5e:2x2
jax: 0.10.0
libtpu: 0.0.40
codegen_flags: <defaults>
</compile_context>

<pallas_src>
import jax
import jax.numpy as jnp
from jax import lax
from jax.experimental import pallas as pl
from jax.experimental.pallas import tpu as pltpu

# ----------------------------- config ---------------------------------------
INPUT_SIZE = 4
HIDDEN = 32
NUM_LAYERS = 2          # kernel below is written for exactly 2 layers
OUTPUT_SIZE = 1
BATCH = 2
SEQ = 8
LN_EPS = 1e-5


# --------------------- fused forward-pass kernel ----------------------------
def fused_forward_kernel(x_ref, wih0_ref, wih1_ref, whh_ref, bias_ref,
                         hmat_ref, hvec_ref, pred_ref, state_ref):
    """Entire LSTMModel forward in one kernel (everything VMEM resident).

    x_ref     : (T, B, D_in)      time-major input (transposed in the wrapper)
    wih0_ref  : (2, D_in, 4H)     layer-0 W_ih^T, gates packed i|f|g|o on lanes
    wih1_ref  : (2, 2H, 4H)       layer-1 W_ih^T (contracts over [fwd|bwd] 2H)
    whh_ref   : (2, 2, H, 4H)     [layer, dir] packed recurrent weights
    bias_ref  : (2, 2, 1, 4H)     [layer, dir] b_ih + b_hh, gate-packed
    hmat_ref  : (4H, H) = (128,32)  rows 0:2H = attention W1^T, 2H:4H = fc1^T
    hvec_ref  : (8, H)            rows: ba1, wa2, bf1, ln_g, ln_b, wf2, ba2, bf2
    pred_ref  : (B, OUT)
    state_ref : (B, 8H)           lane-packed [hf0|hb0|hf1|hb1|cf0|cb0|cf1|cb1]
    The g-gate columns of wih/whh/bias are prescaled by 2 at init so a single
    sigmoid over the packed gates recovers tanh via 2*sigmoid(2x) - 1.
    """
    f32 = jnp.float32
    T, B, _ = x_ref.shape
    H = HIDDEN

    x = x_ref[...]                  # (T, B, D_in)
    wih0 = wih0_ref[...]            # (2, D_in, 4H)
    wih1 = wih1_ref[...]            # (2, 2H, 4H)
    whh = whh_ref[...]              # (2, 2, H, 4H)
    bias = bias_ref[...]            # (2, 2, 1, 4H)

    def run_bilstm(xp_f, xp_b, whh_f, whh_b):
        """Fully unrolled bidirectional recurrence with packed gates.

        xp_f/xp_b : (T, B, 4H) gate-packed input projections (+bias)
        whh_f/whh_b: (H, 4H) packed recurrent weights
        Only one (B,128) matmul + one full-vreg sigmoid + the cell update sit
        on the serial chain per direction per step.
        """
        hf = jnp.zeros((B, H), f32)
        cf = jnp.zeros((B, H), f32)
        hb = jnp.zeros((B, H), f32)
        cb = jnp.zeros((B, H), f32)
        ys_f = [None] * T
        ys_b = [None] * T
        for t in range(T):                      # fully unrolled (T static, small)
            tb = T - 1 - t
            # ---- forward direction: sequence position t ----
            zf = jax.nn.sigmoid(xp_f[t] + jnp.dot(hf, whh_f, preferred_element_type=f32))
            i_, f_ = zf[:, 0:H], zf[:, H:2 * H]
            g_ = 2.0 * zf[:, 2 * H:3 * H] - 1.0       # tanh via prescaled sigmoid
            o_ = zf[:, 3 * H:4 * H]
            cf = f_ * cf + i_ * g_
            hf = o_ * jnp.tanh(cf)
            ys_f[t] = hf
            # ---- backward direction: sequence position T-1-t ----
            zb = jax.nn.sigmoid(xp_b[tb] + jnp.dot(hb, whh_b, preferred_element_type=f32))
            i_, f_ = zb[:, 0:H], zb[:, H:2 * H]
            g_ = 2.0 * zb[:, 2 * H:3 * H] - 1.0
            o_ = zb[:, 3 * H:4 * H]
            cb = f_ * cb + i_ * g_
            hb = o_ * jnp.tanh(cb)
            ys_b[tb] = hb
        # layer output = concat([fwd, bwd], feature) per time step (off critical path)
        y_cat = jnp.stack(
            [jnp.concatenate([ys_f[t], ys_b[t]], axis=-1) for t in range(T)],
            axis=0)                                               # (T, B, 2H)
        return y_cat, (hf, cf), (hb, cb)

    # -------------------- layer 0 --------------------
    # gate-fused input projections: one (T*B, D_in) x (D_in, 4H) matmul per direction
    xp0_f = jnp.einsum('tbd,dg->tbg', x, wih0[0], preferred_element_type=f32) + bias[0, 0]
    xp0_b = jnp.einsum('tbd,dg->tbg', x, wih0[1], preferred_element_type=f32) + bias[0, 1]
    y0, (hf0, cf0), (hb0, cb0) = run_bilstm(xp0_f, xp0_b, whh[0, 0], whh[0, 1])
    # (inter-layer LSTM dropout is identity in eval mode)

    # -------------------- layer 1 --------------------
    xp1_f = jnp.einsum('tbd,dg->tbg', y0, wih1[0], preferred_element_type=f32) + bias[1, 0]
    xp1_b = jnp.einsum('tbd,dg->tbg', y0, wih1[1], preferred_element_type=f32) + bias[1, 1]
    y1, (hf1, cf1), (hb1, cb1) = run_bilstm(xp1_f, xp1_b, whh[1, 0], whh[1, 1])

    # -------------------- attention + fc1 + LayerNorm + ReLU + fc2 ----------
    hm = hmat_ref[...]              # (4H, H)
    hv = hvec_ref[...]              # (8, H)
    wa1 = hm[0:2 * H]               # (2H, H) attention Linear(2H->H)^T
    wf1 = hm[2 * H:4 * H]           # (2H, H) fc1^T
    ba1 = hv[0:1]                   # (1, H)
    wa2 = hv[1:2]                   # (1, H) attention Linear(H->1) row
    bf1 = hv[2:3]
    ln_g = hv[3:4]
    ln_b = hv[4:5]
    wf2 = hv[5:6]                   # (1, H) fc2 row (OUTPUT_SIZE == 1)
    ba2 = hv[6:7, 0:1]              # (1, 1)
    bf2 = hv[7:8, 0:1]              # (1, 1)

    a = jnp.tanh(jnp.einsum('tbd,dh->tbh', y1, wa1, preferred_element_type=f32) + ba1)   # (T, B, H)
    # Linear(H -> 1) score projection as VPU multiply + lane reduction
    s = jnp.sum(a * wa2, axis=-1, keepdims=True) + ba2            # (T, B, 1)
    # softmax over the sequence axis (PyTorch Softmax(dim=1) on (B, T, 1))
    m = jnp.max(s, axis=0, keepdims=True)
    e = jnp.exp(s - m)
    attw = e * pl.reciprocal(jnp.sum(e, axis=0, keepdims=True), approx=True)  # (T, B, 1)
    ctx = jnp.sum(attw * y1, axis=0)                              # (B, 2H)

    out = jnp.dot(ctx, wf1, preferred_element_type=f32) + bf1     # (B, H)
    mu = jnp.mean(out, axis=-1, keepdims=True)
    var = jnp.mean((out - mu) ** 2, axis=-1, keepdims=True)
    out = (out - mu) * lax.rsqrt(var + LN_EPS) * ln_g + ln_b
    out = jnp.maximum(out, 0.0)
    # TODO(synk): nn.Dropout omitted (eval-mode identity; no RNG mask applied).
    pred_ref[...] = jnp.sum(out * wf2, axis=-1, keepdims=True) + bf2

    # final states, lane-packed into one dense (B, 8H) slab; wrapper reshapes
    # back to PyTorch order [l0_fwd, l0_bwd, l1_fwd, l1_bwd] for h_n and c_n.
    state_ref[...] = jnp.concatenate(
        [hf0, hb0, hf1, hb1, cf0, cb0, cf1, cb1], axis=-1)


# ------------------------------ full forward ---------------------------------
@jax.jit
def lstm_model_forward(x, params):
    """x: (B, T, input_size). Returns (predictions, (h_n, c_n)) like PyTorch."""
    B = x.shape[0]
    x_tm = jnp.transpose(x, (1, 0, 2))        # (T, B, D) layout plumbing in XLA
    vmem = pl.BlockSpec(memory_space=pltpu.MemorySpace.VMEM)
    args = (x_tm,
            params['wih0'], params['wih1'], params['whh'], params['bias'],
            params['head_mat'], params['head_vec'])
    pred, state = pl.pallas_call(
        fused_forward_kernel,
        out_shape=(jax.ShapeDtypeStruct((B, OUTPUT_SIZE), jnp.float32),
                   jax.ShapeDtypeStruct((B, 2 * 2 * NUM_LAYERS * HIDDEN), jnp.float32)),
        in_specs=[vmem] * len(args),
        out_specs=(vmem, vmem),
    )(*args)
    st = state.reshape(B, 2 * 2 * NUM_LAYERS, HIDDEN).transpose(1, 0, 2)  # (8, B, H)
    h_n = st[:2 * NUM_LAYERS]
    c_n = st[2 * NUM_LAYERS:]
    return pred, (h_n, c_n)


# ------------------------- deterministic parameter init ----------------------
def init_params(key):
    """Random weights created in PyTorch layout, packed once into the kernel layout."""
    assert NUM_LAYERS == 2, "fused kernel is written for exactly 2 LSTM layers"
    H = HIDDEN
    k = 1.0 / jnp.sqrt(H)

    def uni(key, shape):
        return jax.random.uniform(key, shape, jnp.float32, -k, k)

    def prescale_g(a):
        # x2 on the g-gate block so a single sigmoid recovers tanh (2*sig(2x)-1)
        return a.at[..., 2 * H:3 * H].multiply(2.0)

    keys = iter(jax.random.split(key, 64))
    wih_layers, whh_layers, bias_layers = [], [], []
    for l in range(NUM_LAYERS):
        d_in = INPUT_SIZE if l == 0 else 2 * H
        wih_d, whh_d, b_d = [], [], []
        for _ in range(2):                                  # forward, backward
            w_ih = uni(next(keys), (4 * H, d_in))           # PyTorch weight_ih (i|f|g|o rows)
            w_hh = uni(next(keys), (4 * H, H))              # PyTorch weight_hh
            b_ih = uni(next(keys), (4 * H,))
            b_hh = uni(next(keys), (4 * H,))
            wih_d.append(prescale_g(w_ih.T))                        # (d_in, 4H)
            whh_d.append(prescale_g(w_hh.T))                        # (H, 4H)
            b_d.append(prescale_g((b_ih + b_hh).reshape(1, 4 * H))) # (1, 4H)
        wih_layers.append(jnp.stack(wih_d))     # (2, d_in, 4H)
        whh_layers.append(jnp.stack(whh_d))     # (2, H, 4H)
        bias_layers.append(jnp.stack(b_d))      # (2, 1, 4H)

    P = {'wih0': wih_layers[0],                 # (2, D_in, 4H)
         'wih1': wih_layers[1],                 # (2, 2H, 4H)
         'whh': jnp.stack(whh_layers),          # (2, 2, H, 4H)
         'bias': jnp.stack(bias_layers)}        # (2, 2, 1, 4H)

    wa1 = uni(next(keys), (H, 2 * H))           # attention Linear(2H -> H) weight
    ba1 = uni(next(keys), (H,))
    wa2 = uni(next(keys), (1, H))               # attention Linear(H -> 1) weight
    ba2 = uni(next(keys), (1,))
    wf1 = uni(next(keys), (H, 2 * H))           # fc1 weight
    bf1 = uni(next(keys), (H,))
    ln_g = jnp.ones((H,), jnp.float32)
    ln_b = jnp.zeros((H,), jnp.float32)
    wf2 = uni(next(keys), (OUTPUT_SIZE, H))     # fc2 weight (OUT=1)
    bf2 = uni(next(keys), (OUTPUT_SIZE,))

    P['head_mat'] = jnp.concatenate([wa1.T, wf1.T], axis=0)   # (4H, H) = (128, 32)
    P['head_vec'] = jnp.stack([
        ba1,
        wa2[0],
        bf1,
        ln_g,
        ln_b,
        wf2[0],
        jnp.full((H,), ba2[0], jnp.float32),
        jnp.full((H,), bf2[0], jnp.float32),
    ])                                                        # (8, H)
    return P


# ----------------------------------- main ------------------------------------
if __name__ == "__main__":
    key = jax.random.PRNGKey(0)
    pkey, xkey = jax.random.split(key)
    params = init_params(pkey)
    x = jax.random.normal(xkey, (BATCH, SEQ, INPUT_SIZE), jnp.float32)

    pred, (h_n, c_n) = lstm_model_forward(x, params)
    jax.block_until_ready(pred)
    jax.block_until_ready(h_n)
    jax.block_until_ready(c_n)

    assert pred.shape == (BATCH, OUTPUT_SIZE)
    assert h_n.shape == (NUM_LAYERS * 2, BATCH, HIDDEN)
    assert c_n.shape == (NUM_LAYERS * 2, BATCH, HIDDEN)
    assert bool(jnp.all(jnp.isfinite(pred)))
    assert bool(jnp.all(jnp.isfinite(h_n)))
    assert bool(jnp.all(jnp.isfinite(c_n)))
    print("KERNEL_OK")
</pallas_src>

<mosaic_0001>
module attributes {stable_mosaic.version = 11 : i64} {
  func.func @fused_forward_kernel(%arg0: memref<8x2x4xf32, #tpu.memory_space<vmem>>, %arg1: memref<2x4x128xf32, #tpu.memory_space<vmem>>, %arg2: memref<2x64x128xf32, #tpu.memory_space<vmem>>, %arg3: memref<2x2x32x128xf32, #tpu.memory_space<vmem>>, %arg4: memref<2x2x1x128xf32, #tpu.memory_space<vmem>>, %arg5: memref<128x32xf32, #tpu.memory_space<vmem>>, %arg6: memref<8x32xf32, #tpu.memory_space<vmem>>, %arg7: memref<2x1xf32, #tpu.memory_space<vmem>>, %arg8: memref<2x256xf32, #tpu.memory_space<vmem>>) attributes {dimension_semantics = [], scalar_prefetch = 0 : i64, scratch_operands = 0 : i64, tpu.core_type = #tpu.core_type<tc>} {
    %c0 = arith.constant 0 : index
    %c0_0 = arith.constant 0 : index
    %c0_1 = arith.constant 0 : index
    %0 = vector.load %arg0[%c0, %c0_0, %c0_1] : memref<8x2x4xf32, #tpu.memory_space<vmem>>, vector<8x2x4xf32>
    %c0_2 = arith.constant 0 : index
    %c0_3 = arith.constant 0 : index
    %c0_4 = arith.constant 0 : index
    %1 = vector.load %arg1[%c0_2, %c0_3, %c0_4] : memref<2x4x128xf32, #tpu.memory_space<vmem>>, vector<2x4x128xf32>
    %c0_5 = arith.constant 0 : index
    %c0_6 = arith.constant 0 : index
    %c0_7 = arith.constant 0 : index
    %2 = vector.load %arg2[%c0_5, %c0_6, %c0_7] : memref<2x64x128xf32, #tpu.memory_space<vmem>>, vector<2x64x128xf32>
    %c0_8 = arith.constant 0 : index
    %c0_9 = arith.constant 0 : index
    %c0_10 = arith.constant 0 : index
    %c0_11 = arith.constant 0 : index
    %3 = vector.load %arg3[%c0_8, %c0_9, %c0_10, %c0_11] : memref<2x2x32x128xf32, #tpu.memory_space<vmem>>, vector<2x2x32x128xf32>
    %c0_12 = arith.constant 0 : index
    %c0_13 = arith.constant 0 : index
    %c0_14 = arith.constant 0 : index
    %c0_15 = arith.constant 0 : index
    %4 = vector.load %arg4[%c0_12, %c0_13, %c0_14, %c0_15] : memref<2x2x1x128xf32, #tpu.memory_space<vmem>>, vector<2x2x1x128xf32>
    %5 = vector.extract_strided_slice %1 {offsets = [0, 0, 0], sizes = [1, 4, 128], strides = [1, 1, 1]} : vector<2x4x128xf32> to vector<1x4x128xf32>
    %6 = vector.shape_cast %5 : vector<1x4x128xf32> to vector<4x128xf32>
    "tpu.trace_start"() <{level = 10 : i32, message = "tbd,dg->tbg"}> : () -> ()
    %cst = arith.constant dense<0.000000e+00> : vector<8x2x128xf32>
    %7 = tpu.matmul %0, %6, %cst {dimension_numbers = #tpu.dot_dimension_numbers<[2], [0], [0, 1], [1], [0, 0, 0, 1, 1, 1], [], []>} : vector<8x2x4xf32>, vector<4x128xf32>, vector<8x2x128xf32> -> vector<8x2x128xf32>
    "tpu.trace_stop"() : () -> ()
    %8 = vector.extract_strided_slice %4 {offsets = [0, 0, 0, 0], sizes = [1, 1, 1, 128], strides = [1, 1, 1, 1]} : vector<2x2x1x128xf32> to vector<1x1x1x128xf32>
    %9 = vector.shape_cast %8 : vector<1x1x1x128xf32> to vector<1x128xf32>
    %10 = vector.shape_cast %9 : vector<1x128xf32> to vector<1x1x128xf32>
    %11 = vector.broadcast %10 : vector<1x1x128xf32> to vector<8x2x128xf32>
    %12 = arith.addf %7, %11 : vector<8x2x128xf32>
    %13 = vector.extract_strided_slice %1 {offsets = [1, 0, 0], sizes = [1, 4, 128], strides = [1, 1, 1]} : vector<2x4x128xf32> to vector<1x4x128xf32>
    %14 = vector.shape_cast %13 : vector<1x4x128xf32> to vector<4x128xf32>
    "tpu.trace_start"() <{level = 10 : i32, message = "tbd,dg->tbg"}> : () -> ()
    %cst_16 = arith.constant dense<0.000000e+00> : vector<8x2x128xf32>
    %15 = tpu.matmul %0, %14, %cst_16 {dimension_numbers = #tpu.dot_dimension_numbers<[2], [0], [0, 1], [1], [0, 0, 0, 1, 1, 1], [], []>} : vector<8x2x4xf32>, vector<4x128xf32>, vector<8x2x128xf32> -> vector<8x2x128xf32>
    "tpu.trace_stop"() : () -> ()
    %16 = vector.extract_strided_slice %4 {offsets = [0, 1, 0, 0], sizes = [1, 1, 1, 128], strides = [1, 1, 1, 1]} : vector<2x2x1x128xf32> to vector<1x1x1x128xf32>
    %17 = vector.shape_cast %16 : vector<1x1x1x128xf32> to vector<1x128xf32>
    %18 = vector.shape_cast %17 : vector<1x128xf32> to vector<1x1x128xf32>
    %19 = vector.broadcast %18 : vector<1x1x128xf32> to vector<8x2x128xf32>
    %20 = arith.addf %15, %19 : vector<8x2x128xf32>
    %21 = vector.extract_strided_slice %3 {offsets = [0, 0, 0, 0], sizes = [1, 1, 32, 128], strides = [1, 1, 1, 1]} : vector<2x2x32x128xf32> to vector<1x1x32x128xf32>
    %22 = vector.shape_cast %21 : vector<1x1x32x128xf32> to vector<32x128xf32>
    %23 = vector.extract_strided_slice %3 {offsets = [0, 1, 0, 0], sizes = [1, 1, 32, 128], strides = [1, 1, 1, 1]} : vector<2x2x32x128xf32> to vector<1x1x32x128xf32>
    %24 = vector.shape_cast %23 : vector<1x1x32x128xf32> to vector<32x128xf32>
    %cst_17 = arith.constant 0.000000e+00 : f32
    %25 = vector.broadcast %cst_17 : f32 to vector<2x32xf32>
    %cst_18 = arith.constant 0.000000e+00 : f32
    %26 = vector.broadcast %cst_18 : f32 to vector<2x32xf32>
    %cst_19 = arith.constant 0.000000e+00 : f32
    %27 = vector.broadcast %cst_19 : f32 to vector<2x32xf32>
    %cst_20 = arith.constant 0.000000e+00 : f32
    %28 = vector.broadcast %cst_20 : f32 to vector<2x32xf32>
    %29 = vector.extract_strided_slice %12 {offsets = [0, 0, 0], sizes = [1, 2, 128], strides = [1, 1, 1]} : vector<8x2x128xf32> to vector<1x2x128xf32>
    %30 = vector.shape_cast %29 : vector<1x2x128xf32> to vector<2x128xf32>
    %cst_21 = arith.constant dense<0.000000e+00> : vector<2x128xf32>
    %31 = tpu.matmul %25, %22, %cst_21 {dimension_numbers = #tpu.dot_dimension_numbers<[1], [0], [0], [1], [0, 0, 1, 1], [], []>} : vector<2x32xf32>, vector<32x128xf32>, vector<2x128xf32> -> vector<2x128xf32>
    %32 = arith.addf %30, %31 : vector<2x128xf32>
    %33 = arith.negf %32 : vector<2x128xf32>
    %34 = math.exp %33 : vector<2x128xf32>
    %cst_22 = arith.constant 1.000000e+00 : f32
    %35 = vector.broadcast %cst_22 : f32 to vector<2x128xf32>
    %36 = arith.addf %35, %34 : vector<2x128xf32>
    %37 = arith.divf %35, %36 : vector<2x128xf32>
    %38 = vector.extract_strided_slice %37 {offsets = [0, 0], sizes = [2, 32], strides = [1, 1]} : vector<2x128xf32> to vector<2x32xf32>
    %39 = vector.extract_strided_slice %37 {offsets = [0, 32], sizes = [2, 32], strides = [1, 1]} : vector<2x128xf32> to vector<2x32xf32>
    %40 = vector.extract_strided_slice %37 {offsets = [0, 64], sizes = [2, 32], strides = [1, 1]} : vector<2x128xf32> to vector<2x32xf32>
    %cst_23 = arith.constant 2.000000e+00 : f32
    %41 = vector.broadcast %cst_23 : f32 to vector<2x32xf32>
    %42 = arith.mulf %41, %40 : vector<2x32xf32>
    %cst_24 = arith.constant 1.000000e+00 : f32
    %43 = vector.broadcast %cst_24 : f32 to vector<2x32xf32>
    %44 = arith.subf %42, %43 : vector<2x32xf32>
    %45 = vector.extract_strided_slice %37 {offsets = [0, 96], sizes = [2, 32], strides = [1, 1]} : vector<2x128xf32> to vector<2x32xf32>
    %46 = arith.mulf %39, %26 : vector<2x32xf32>
    %47 = arith.mulf %38, %44 : vector<2x32xf32>
    %48 = arith.addf %46, %47 : vector<2x32xf32>
    %49 = math.tanh %48 : vector<2x32xf32>
    %50 = arith.mulf %45, %49 : vector<2x32xf32>
    %51 = vector.extract_strided_slice %20 {offsets = [7, 0, 0], sizes = [1, 2, 128], strides = [1, 1, 1]} : vector<8x2x128xf32> to vector<1x2x128xf32>
    %52 = vector.shape_cast %51 : vector<1x2x128xf32> to vector<2x128xf32>
    %cst_25 = arith.constant dense<0.000000e+00> : vector<2x128xf32>
    %53 = tpu.matmul %27, %24, %cst_25 {dimension_numbers = #tpu.dot_dimension_numbers<[1], [0], [0], [1], [0, 0, 1, 1], [], []>} : vector<2x32xf32>, vector<32x128xf32>, vector<2x128xf32> -> vector<2x128xf32>
    %54 = arith.addf %52, %53 : vector<2x128xf32>
    %55 = arith.negf %54 : vector<2x128xf32>
    %56 = math.exp %55 : vector<2x128xf32>
    %cst_26 = arith.constant 1.000000e+00 : f32
    %57 = vector.broadcast %cst_26 : f32 to vector<2x128xf32>
    %58 = arith.addf %57, %56 : vector<2x128xf32>
    %59 = arith.divf %57, %58 : vector<2x128xf32>
    %60 = vector.extract_strided_slice %59 {offsets = [0, 0], sizes = [2, 32], strides = [1, 1]} : vector<2x128xf32> to vector<2x32xf32>
    %61 = vector.extract_strided_slice %59 {offsets = [0, 32], sizes = [2, 32], strides = [1, 1]} : vector<2x128xf32> to vector<2x32xf32>
    %62 = vector.extract_strided_slice %59 {offsets = [0, 64], sizes = [2, 32], strides = [1, 1]} : vector<2x128xf32> to vector<2x32xf32>
    %cst_27 = arith.constant 2.000000e+00 : f32
    %63 = vector.broadcast %cst_27 : f32 to vector<2x32xf32>
    %64 = arith.mulf %63, %62 : vector<2x32xf32>
    %cst_28 = arith.constant 1.000000e+00 : f32
    %65 = vector.broadcast %cst_28 : f32 to vector<2x32xf32>
    %66 = arith.subf %64, %65 : vector<2x32xf32>
    %67 = vector.extract_strided_slice %59 {offsets = [0, 96], sizes = [2, 32], strides = [1, 1]} : vector<2x128xf32> to vector<2x32xf32>
    %68 = arith.mulf %61, %28 : vector<2x32xf32>
    %69 = arith.mulf %60, %66 : vector<2x32xf32>
    %70 = arith.addf %68, %69 : vector<2x32xf32>
    %71 = math.tanh %70 : vector<2x32xf32>
    %72 = arith.mulf %67, %71 : vector<2x32xf32>
    %73 = vector.extract_strided_slice %12 {offsets = [1, 0, 0], sizes = [1, 2, 128], strides = [1, 1, 1]} : vector<8x2x128xf32> to vector<1x2x128xf32>
    %74 = vector.shape_cast %73 : vector<1x2x128xf32> to vector<2x128xf32>
    %cst_29 = arith.constant dense<0.000000e+00> : vector<2x128xf32>
    %75 = tpu.matmul %50, %22, %cst_29 {dimension_numbers = #tpu.dot_dimension_numbers<[1], [0], [0], [1], [0, 0, 1, 1], [], []>} : vector<2x32xf32>, vector<32x128xf32>, vector<2x128xf32> -> vector<2x128xf32>
    %76 = arith.addf %74, %75 : vector<2x128xf32>
    %77 = arith.negf %76 : vector<2x128xf32>
    %78 = math.exp %77 : vector<2x128xf32>
    %cst_30 = arith.constant 1.000000e+00 : f32
    %79 = vector.broadcast %cst_30 : f32 to vector<2x128xf32>
    %80 = arith.addf %79, %78 : vector<2x128xf32>
    %81 = arith.divf %79, %80 : vector<2x128xf32>
    %82 = vector.extract_strided_slice %81 {offsets = [0, 0], sizes = [2, 32], strides = [1, 1]} : vector<2x128xf32> to vector<2x32xf32>
    %83 = vector.extract_strided_slice %81 {offsets = [0, 32], sizes = [2, 32], strides = [1, 1]} : vector<2x128xf32> to vector<2x32xf32>
    %84 = vector.extract_strided_slice %81 {offsets = [0, 64], sizes = [2, 32], strides = [1, 1]} : vector<2x128xf32> to vector<2x32xf32>
    %cst_31 = arith.constant 2.000000e+00 : f32
    %85 = vector.broadcast %cst_31 : f32 to vector<2x32xf32>
    %86 = arith.mulf %85, %84 : vector<2x32xf32>
    %cst_32 = arith.constant 1.000000e+00 : f32
    %87 = vector.broadcast %cst_32 : f32 to vector<2x32xf32>
    %88 = arith.subf %86, %87 : vector<2x32xf32>
    %89 = vector.extract_strided_slice %81 {offsets = [0, 96], sizes = [2, 32], strides = [1, 1]} : vector<2x128xf32> to vector<2x32xf32>
    %90 = arith.mulf %83, %48 : vector<2x32xf32>
    %91 = arith.mulf %82, %88 : vector<2x32xf32>
    %92 = arith.addf %90, %91 : vector<2x32xf32>
    %93 = math.tanh %92 : vector<2x32xf32>
    %94 = arith.mulf %89, %93 : vector<2x32xf32>
    %95 = vector.extract_strided_slice %20 {offsets = [6, 0, 0], sizes = [1, 2, 128], strides = [1, 1, 1]} : vector<8x2x128xf32> to vector<1x2x128xf32>
    %96 = vector.shape_cast %95 : vector<1x2x128xf32> to vector<2x128xf32>
    %cst_33 = arith.constant dense<0.000000e+00> : vector<2x128xf32>
    %97 = tpu.matmul %72, %24, %cst_33 {dimension_numbers = #tpu.dot_dimension_numbers<[1], [0], [0], [1], [0, 0, 1, 1], [], []>} : vector<2x32xf32>, vector<32x128xf32>, vector<2x128xf32> -> vector<2x128xf32>
    %98 = arith.addf %96, %97 : vector<2x128xf32>
    %99 = arith.negf %98 : vector<2x128xf32>
    %100 = math.exp %99 : vector<2x128xf32>
    %cst_34 = arith.constant 1.000000e+00 : f32
    %101 = vector.broadcast %cst_34 : f32 to vector<2x128xf32>
    %102 = arith.addf %101, %100 : vector<2x128xf32>
    %103 = arith.divf %101, %102 : vector<2x128xf32>
    %104 = vector.extract_strided_slice %103 {offsets = [0, 0], sizes = [2, 32], strides = [1, 1]} : vector<2x128xf32> to vector<2x32xf32>
    %105 = vector.extract_strided_slice %103 {offsets = [0, 32], sizes = [2, 32], strides = [1, 1]} : vector<2x128xf32> to vector<2x32xf32>
    %106 = vector.extract_strided_slice %103 {offsets = [0, 64], sizes = [2, 32], strides = [1, 1]} : vector<2x128xf32> to vector<2x32xf32>
    %cst_35 = arith.constant 2.000000e+00 : f32
    %107 = vector.broadcast %cst_35 : f32 to vector<2x32xf32>
    %108 = arith.mulf %107, %106 : vector<2x32xf32>
    %cst_36 = arith.constant 1.000000e+00 : f32
    %109 = vector.broadcast %cst_36 : f32 to vector<2x32xf32>
    %110 = arith.subf %108, %109 : vector<2x32xf32>
    %111 = vector.extract_strided_slice %103 {offsets = [0, 96], sizes = [2, 32], strides = [1, 1]} : vector<2x128xf32> to vector<2x32xf32>
    %112 = arith.mulf %105, %70 : vector<2x32xf32>
    %113 = arith.mulf %104, %110 : vector<2x32xf32>
    %114 = arith.addf %112, %113 : vector<2x32xf32>
    %115 = math.tanh %114 : vector<2x32xf32>
    %116 = arith.mulf %111, %115 : vector<2x32xf32>
    %117 = vector.extract_strided_slice %12 {offsets = [2, 0, 0], sizes = [1, 2, 128], strides = [1, 1, 1]} : vector<8x2x128xf32> to vector<1x2x128xf32>
    %118 = vector.shape_cast %117 : vector<1x2x128xf32> to vector<2x128xf32>
    %cst_37 = arith.constant dense<0.000000e+00> : vector<2x128xf32>
    %119 = tpu.matmul %94, %22, %cst_37 {dimension_numbers = #tpu.dot_dimension_numbers<[1], [0], [0], [1], [0, 0, 1, 1], [], []>} : vector<2x32xf32>, vector<32x128xf32>, vector<2x128xf32> -> vector<2x128xf32>
    %120 = arith.addf %118, %119 : vector<2x128xf32>
    %121 = arith.negf %120 : vector<2x128xf32>
    %122 = math.exp %121 : vector<2x128xf32>
    %cst_38 = arith.constant 1.000000e+00 : f32
    %123 = vector.broadcast %cst_38 : f32 to vector<2x128xf32>
    %124 = arith.addf %123, %122 : vector<2x128xf32>
    %125 = arith.divf %123, %124 : vector<2x128xf32>
    %126 = vector.extract_strided_slice %125 {offsets = [0, 0], sizes = [2, 32], strides = [1, 1]} : vector<2x128xf32> to vector<2x32xf32>
    %127 = vector.extract_strided_slice %125 {offsets = [0, 32], sizes = [2, 32], strides = [1, 1]} : vector<2x128xf32> to vector<2x32xf32>
    %128 = vector.extract_strided_slice %125 {offsets = [0, 64], sizes = [2, 32], strides = [1, 1]} : vector<2x128xf32> to vector<2x32xf32>
    %cst_39 = arith.constant 2.000000e+00 : f32
    %129 = vector.broadcast %cst_39 : f32 to vector<2x32xf32>
    %130 = arith.mulf %129, %128 : vector<2x32xf32>
    %cst_40 = arith.constant 1.000000e+00 : f32
    %131 = vector.broadcast %cst_40 : f32 to vector<2x32xf32>
    %132 = arith.subf %130, %131 : vector<2x32xf32>
    %133 = vector.extract_strided_slice %125 {offsets = [0, 96], sizes = [2, 32], strides = [1, 1]} : vector<2x128xf32> to vector<2x32xf32>
    %134 = arith.mulf %127, %92 : vector<2x32xf32>
    %135 = arith.mulf %126, %132 : vector<2x32xf32>
    %136 = arith.addf %134, %135 : vector<2x32xf32>
    %137 = math.tanh %136 : vector<2x32xf32>
    %138 = arith.mulf %133, %137 : vector<2x32xf32>
    %139 = vector.extract_strided_slice %20 {offsets = [5, 0, 0], sizes = [1, 2, 128], strides = [1, 1, 1]} : vector<8x2x128xf32> to vector<1x2x128xf32>
    %140 = vector.shape_cast %139 : vector<1x2x128xf32> to vector<2x128xf32>
    %cst_41 = arith.constant dense<0.000000e+00> : vector<2x128xf32>
    %141 = tpu.matmul %116, %24, %cst_41 {dimension_numbers = #tpu.dot_dimension_numbers<[1], [0], [0], [1], [0, 0, 1, 1], [], []>} : vector<2x32xf32>, vector<32x128xf32>, vector<2x128xf32> -> vector<2x128xf32>
    %142 = arith.addf %140, %141 : vector<2x128xf32>
    %143 = arith.negf %142 : vector<2x128xf32>
    %144 = math.exp %143 : vector<2x128xf32>
    %cst_42 = arith.constant 1.000000e+00 : f32
    %145 = vector.broadcast %cst_42 : f32 to vector<2x128xf32>
    %146 = arith.addf %145, %144 : vector<2x128xf32>
    %147 = arith.divf %145, %146 : vector<2x128xf32>
    %148 = vector.extract_strided_slice %147 {offsets = [0, 0], sizes = [2, 32], strides = [1, 1]} : vector<2x128xf32> to vector<2x32xf32>
    %149 = vector.extract_strided_slice %147 {offsets = [0, 32], sizes = [2, 32], strides = [1, 1]} : vector<2x128xf32> to vector<2x32xf32>
    %150 = vector.extract_strided_slice %147 {offsets = [0, 64], sizes = [2, 32], strides = [1, 1]} : vector<2x128xf32> to vector<2x32xf32>
    %cst_43 = arith.constant 2.000000e+00 : f32
    %151 = vector.broadcast %cst_43 : f32 to vector<2x32xf32>
    %152 = arith.mulf %151, %150 : vector<2x32xf32>
    %cst_44 = arith.constant 1.000000e+00 : f32
    %153 = vector.broadcast %cst_44 : f32 to vector<2x32xf32>
    %154 = arith.subf %152, %153 : vector<2x32xf32>
    %155 = vector.extract_strided_slice %147 {offsets = [0, 96], sizes = [2, 32], strides = [1, 1]} : vector<2x128xf32> to vector<2x32xf32>
    %156 = arith.mulf %149, %114 : vector<2x32xf32>
    %157 = arith.mulf %148, %154 : vector<2x32xf32>
    %158 = arith.addf %156, %157 : vector<2x32xf32>
    %159 = math.tanh %158 : vector<2x32xf32>
    %160 = arith.mulf %155, %159 : vector<2x32xf32>
    %161 = vector.extract_strided_slice %12 {offsets = [3, 0, 0], sizes = [1, 2, 128], strides = [1, 1, 1]} : vector<8x2x128xf32> to vector<1x2x128xf32>
    %162 = vector.shape_cast %161 : vector<1x2x128xf32> to vector<2x128xf32>
    %cst_45 = arith.constant dense<0.000000e+00> : vector<2x128xf32>
    %163 = tpu.matmul %138, %22, %cst_45 {dimension_numbers = #tpu.dot_dimension_numbers<[1], [0], [0], [1], [0, 0, 1, 1], [], []>} : vector<2x32xf32>, vector<32x128xf32>, vector<2x128xf32> -> vector<2x128xf32>
    %164 = arith.addf %162, %163 : vector<2x128xf32>
    %165 = arith.negf %164 : vector<2x128xf32>
    %166 = math.exp %165 : vector<2x128xf32>
    %cst_46 = arith.constant 1.000000e+00 : f32
    %167 = vector.broadcast %cst_46 : f32 to vector<2x128xf32>
    %168 = arith.addf %167, %166 : vector<2x128xf32>
    %169 = arith.divf %167, %168 : vector<2x128xf32>
    %170 = vector.extract_strided_slice %169 {offsets = [0, 0], sizes = [2, 32], strides = [1, 1]} : vector<2x128xf32> to vector<2x32xf32>
    %171 = vector.extract_strided_slice %169 {offsets = [0, 32], sizes = [2, 32], strides = [1, 1]} : vector<2x128xf32> to vector<2x32xf32>
    %172 = vector.extract_strided_slice %169 {offsets = [0, 64], sizes = [2, 32], strides = [1, 1]} : vector<2x128xf32> to vector<2x32xf32>
    %cst_47 = arith.constant 2.000000e+00 : f32
    %173 = vector.broadcast %cst_47 : f32 to vector<2x32xf32>
    %174 = arith.mulf %173, %172 : vector<2x32xf32>
    %cst_48 = arith.constant 1.000000e+00 : f32
    %175 = vector.broadcast %cst_48 : f32 to vector<2x32xf32>
    %176 = arith.subf %174, %175 : vector<2x32xf32>
    %177 = vector.extract_strided_slice %169 {offsets = [0, 96], sizes = [2, 32], strides = [1, 1]} : vector<2x128xf32> to vector<2x32xf32>
    %178 = arith.mulf %171, %136 : vector<2x32xf32>
    %179 = arith.mulf %170, %176 : vector<2x32xf32>
    %180 = arith.addf %178, %179 : vector<2x32xf32>
    %181 = math.tanh %180 : vector<2x32xf32>
    %182 = arith.mulf %177, %181 : vector<2x32xf32>
    %183 = vector.extract_strided_slice %20 {offsets = [4, 0, 0], sizes = [1, 2, 128], strides = [1, 1, 1]} : vector<8x2x128xf32> to vector<1x2x128xf32>
    %184 = vector.shape_cast %183 : vector<1x2x128xf32> to vector<2x128xf32>
    %cst_49 = arith.constant dense<0.000000e+00> : vector<2x128xf32>
    %185 = tpu.matmul %160, %24, %cst_49 {dimension_numbers = #tpu.dot_dimension_numbers<[1], [0], [0], [1], [0, 0, 1, 1], [], []>} : vector<2x32xf32>, vector<32x128xf32>, vector<2x128xf32> -> vector<2x128xf32>
    %186 = arith.addf %184, %185 : vector<2x128xf32>
    %187 = arith.negf %186 : vector<2x128xf32>
    %188 = math.exp %187 : vector<2x128xf32>
    %cst_50 = arith.constant 1.000000e+00 : f32
    %189 = vector.broadcast %cst_50 : f32 to vector<2x128xf32>
    %190 = arith.addf %189, %188 : vector<2x128xf32>
    %191 = arith.divf %189, %190 : vector<2x128xf32>
    %192 = vector.extract_strided_slice %191 {offsets = [0, 0], sizes = [2, 32], strides = [1, 1]} : vector<2x128xf32> to vector<2x32xf32>
    %193 = vector.extract_strided_slice %191 {offsets = [0, 32], sizes = [2, 32], strides = [1, 1]} : vector<2x128xf32> to vector<2x32xf32>
    %194 = vector.extract_strided_slice %191 {offsets = [0, 64], sizes = [2, 32], strides = [1, 1]} : vector<2x128xf32> to vector<2x32xf32>
    %cst_51 = arith.constant 2.000000e+00 : f32
    %195 = vector.broadcast %cst_51 : f32 to vector<2x32xf32>
    %196 = arith.mulf %195, %194 : vector<2x32xf32>
    %cst_52 = arith.constant 1.000000e+00 : f32
    %197 = vector.broadcast %cst_52 : f32 to vector<2x32xf32>
    %198 = arith.subf %196, %197 : vector<2x32xf32>
    %199 = vector.extract_strided_slice %191 {offsets = [0, 96], sizes = [2, 32], strides = [1, 1]} : vector<2x128xf32> to vector<2x32xf32>
    %200 = arith.mulf %193, %158 : vector<2x32xf32>
    %201 = arith.mulf %192, %198 : vector<2x32xf32>
    %202 = arith.addf %200, %201 : vector<2x32xf32>
    %203 = math.tanh %202 : vector<2x32xf32>
    %204 = arith.mulf %199, %203 : vector<2x32xf32>
    %205 = vector.extract_strided_slice %12 {offsets = [4, 0, 0], sizes = [1, 2, 128], strides = [1, 1, 1]} : vector<8x2x128xf32> to vector<1x2x128xf32>
    %206 = vector.shape_cast %205 : vector<1x2x128xf32> to vector<2x128xf32>
    %cst_53 = arith.constant dense<0.000000e+00> : vector<2x128xf32>
    %207 = tpu.matmul %182, %22, %cst_53 {dimension_numbers = #tpu.dot_dimension_numbers<[1], [0], [0], [1], [0, 0, 1, 1], [], []>} : vector<2x32xf32>, vector<32x128xf32>, vector<2x128xf32> -> vector<2x128xf32>
    %208 = arith.addf %206, %207 : vector<2x128xf32>
    %209 = arith.negf %208 : vector<2x128xf32>
    %210 = math.exp %209 : vector<2x128xf32>
    %cst_54 = arith.constant 1.000000e+00 : f32
    %211 = vector.broadcast %cst_54 : f32 to vector<2x128xf32>
    %212 = arith.addf %211, %210 : vector<2x128xf32>
    %213 = arith.divf %211, %212 : vector<2x128xf32>
    %214 = vector.extract_strided_slice %213 {offsets = [0, 0], sizes = [2, 32], strides = [1, 1]} : vector<2x128xf32> to vector<2x32xf32>
    %215 = vector.extract_strided_slice %213 {offsets = [0, 32], sizes = [2, 32], strides = [1, 1]} : vector<2x128xf32> to vector<2x32xf32>
    %216 = vector.extract_strided_slice %213 {offsets = [0, 64], sizes = [2, 32], strides = [1, 1]} : vector<2x128xf32> to vector<2x32xf32>
    %cst_55 = arith.constant 2.000000e+00 : f32
    %217 = vector.broadcast %cst_55 : f32 to vector<2x32xf32>
    %218 = arith.mulf %217, %216 : vector<2x32xf32>
    %cst_56 = arith.constant 1.000000e+00 : f32
    %219 = vector.broadcast %cst_56 : f32 to vector<2x32xf32>
    %220 = arith.subf %218, %219 : vector<2x32xf32>
    %221 = vector.extract_strided_slice %213 {offsets = [0, 96], sizes = [2, 32], strides = [1, 1]} : vector<2x128xf32> to vector<2x32xf32>
    %222 = arith.mulf %215, %180 : vector<2x32xf32>
    %223 = arith.mulf %214, %220 : vector<2x32xf32>
    %224 = arith.addf %222, %223 : vector<2x32xf32>
    %225 = math.tanh %224 : vector<2x32xf32>
    %226 = arith.mulf %221, %225 : vector<2x32xf32>
    %227 = vector.extract_strided_slice %20 {offsets = [3, 0, 0], sizes = [1, 2, 128], strides = [1, 1, 1]} : vector<8x2x128xf32> to vector<1x2x128xf32>
    %228 = vector.shape_cast %227 : vector<1x2x128xf32> to vector<2x128xf32>
    %cst_57 = arith.constant dense<0.000000e+00> : vector<2x128xf32>
    %229 = tpu.matmul %204, %24, %cst_57 {dimension_numbers = #tpu.dot_dimension_numbers<[1], [0], [0], [1], [0, 0, 1, 1], [], []>} : vector<2x32xf32>, vector<32x128xf32>, vector<2x128xf32> -> vector<2x128xf32>
    %230 = arith.addf %228, %229 : vector<2x128xf32>
    %231 = arith.negf %230 : vector<2x128xf32>
    %232 = math.exp %231 : vector<2x128xf32>
    %cst_58 = arith.constant 1.000000e+00 : f32
    %233 = vector.broadcast %cst_58 : f32 to vector<2x128xf32>
    %234 = arith.addf %233, %232 : vector<2x128xf32>
    %235 = arith.divf %233, %234 : vector<2x128xf32>
    %236 = vector.extract_strided_slice %235 {offsets = [0, 0], sizes = [2, 32], strides = [1, 1]} : vector<2x128xf32> to vector<2x32xf32>
    %237 = vector.extract_strided_slice %235 {offsets = [0, 32], sizes = [2, 32], strides = [1, 1]} : vector<2x128xf32> to vector<2x32xf32>
    %238 = vector.extract_strided_slice %235 {offsets = [0, 64], sizes = [2, 32], strides = [1, 1]} : vector<2x128xf32> to vector<2x32xf32>
    %cst_59 = arith.constant 2.000000e+00 : f32
    %239 = vector.broadcast %cst_59 : f32 to vector<2x32xf32>
    %240 = arith.mulf %239, %238 : vector<2x32xf32>
    %cst_60 = arith.constant 1.000000e+00 : f32
    %241 = vector.broadcast %cst_60 : f32 to vector<2x32xf32>
    %242 = arith.subf %240, %241 : vector<2x32xf32>
    %243 = vector.extract_strided_slice %235 {offsets = [0, 96], sizes = [2, 32], strides = [1, 1]} : vector<2x128xf32> to vector<2x32xf32>
    %244 = arith.mulf %237, %202 : vector<2x32xf32>
    %245 = arith.mulf %236, %242 : vector<2x32xf32>
    %246 = arith.addf %244, %245 : vector<2x32xf32>
    %247 = math.tanh %246 : vector<2x32xf32>
    %248 = arith.mulf %243, %247 : vector<2x32xf32>
    %249 = vector.extract_strided_slice %12 {offsets = [5, 0, 0], sizes = [1, 2, 128], strides = [1, 1, 1]} : vector<8x2x128xf32> to vector<1x2x128xf32>
    %250 = vector.shape_cast %249 : vector<1x2x128xf32> to vector<2x128xf32>
    %cst_61 = arith.constant dense<0.000000e+00> : vector<2x128xf32>
    %251 = tpu.matmul %226, %22, %cst_61 {dimension_numbers = #tpu.dot_dimension_numbers<[1], [0], [0], [1], [0, 0, 1, 1], [], []>} : vector<2x32xf32>, vector<32x128xf32>, vector<2x128xf32> -> vector<2x128xf32>
    %252 = arith.addf %250, %251 : vector<2x128xf32>
    %253 = arith.negf %252 : vector<2x128xf32>
    %254 = math.exp %253 : vector<2x128xf32>
    %cst_62 = arith.constant 1.000000e+00 : f32
    %255 = vector.broadcast %cst_62 : f32 to vector<2x128xf32>
    %256 = arith.addf %255, %254 : vector<2x128xf32>
    %257 = arith.divf %255, %256 : vector<2x128xf32>
    %258 = vector.extract_strided_slice %257 {offsets = [0, 0], sizes = [2, 32], strides = [1, 1]} : vector<2x128xf32> to vector<2x32xf32>
    %259 = vector.extract_strided_slice %257 {offsets = [0, 32], sizes = [2, 32], strides = [1, 1]} : vector<2x128xf32> to vector<2x32xf32>
    %260 = vector.extract_strided_slice %257 {offsets = [0, 64], sizes = [2, 32], strides = [1, 1]} : vector<2x128xf32> to vector<2x32xf32>
    %cst_63 = arith.constant 2.000000e+00 : f32
    %261 = vector.broadcast %cst_63 : f32 to vector<2x32xf32>
    %262 = arith.mulf %261, %260 : vector<2x32xf32>
    %cst_64 = arith.constant 1.000000e+00 : f32
    %263 = vector.broadcast %cst_64 : f32 to vector<2x32xf32>
    %264 = arith.subf %262, %263 : vector<2x32xf32>
    %265 = vector.extract_strided_slice %257 {offsets = [0, 96], sizes = [2, 32], strides = [1, 1]} : vector<2x128xf32> to vector<2x32xf32>
    %266 = arith.mulf %259, %224 : vector<2x32xf32>
    %267 = arith.mulf %258, %264 : vector<2x32xf32>
    %268 = arith.addf %266, %267 : vector<2x32xf32>
    %269 = math.tanh %268 : vector<2x32xf32>
    %270 = arith.mulf %265, %269 : vector<2x32xf32>
    %271 = vector.extract_strided_slice %20 {offsets = [2, 0, 0], sizes = [1, 2, 128], strides = [1, 1, 1]} : vector<8x2x128xf32> to vector<1x2x128xf32>
    %272 = vector.shape_cast %271 : vector<1x2x128xf32> to vector<2x128xf32>
    %cst_65 = arith.constant dense<0.000000e+00> : vector<2x128xf32>
    %273 = tpu.matmul %248, %24, %cst_65 {dimension_numbers = #tpu.dot_dimension_numbers<[1], [0], [0], [1], [0, 0, 1, 1], [], []>} : vector<2x32xf32>, vector<32x128xf32>, vector<2x128xf32> -> vector<2x128xf32>
    %274 = arith.addf %272, %273 : vector<2x128xf32>
    %275 = arith.negf %274 : vector<2x128xf32>
    %276 = math.exp %275 : vector<2x128xf32>
    %cst_66 = arith.constant 1.000000e+00 : f32
    %277 = vector.broadcast %cst_66 : f32 to vector<2x128xf32>
    %278 = arith.addf %277, %276 : vector<2x128xf32>
    %279 = arith.divf %277, %278 : vector<2x128xf32>
    %280 = vector.extract_strided_slice %279 {offsets = [0, 0], sizes = [2, 32], strides = [1, 1]} : vector<2x128xf32> to vector<2x32xf32>
    %281 = vector.extract_strided_slice %279 {offsets = [0, 32], sizes = [2, 32], strides = [1, 1]} : vector<2x128xf32> to vector<2x32xf32>
    %282 = vector.extract_strided_slice %279 {offsets = [0, 64], sizes = [2, 32], strides = [1, 1]} : vector<2x128xf32> to vector<2x32xf32>
    %cst_67 = arith.constant 2.000000e+00 : f32
    %283 = vector.broadcast %cst_67 : f32 to vector<2x32xf32>
    %284 = arith.mulf %283, %282 : vector<2x32xf32>
    %cst_68 = arith.constant 1.000000e+00 : f32
    %285 = vector.broadcast %cst_68 : f32 to vector<2x32xf32>
    %286 = arith.subf %284, %285 : vector<2x32xf32>
    %287 = vector.extract_strided_slice %279 {offsets = [0, 96], sizes = [2, 32], strides = [1, 1]} : vector<2x128xf32> to vector<2x32xf32>
    %288 = arith.mulf %281, %246 : vector<2x32xf32>
    %289 = arith.mulf %280, %286 : vector<2x32xf32>
    %290 = arith.addf %288, %289 : vector<2x32xf32>
    %291 = math.tanh %290 : vector<2x32xf32>
    %292 = arith.mulf %287, %291 : vector<2x32xf32>
    %293 = vector.extract_strided_slice %12 {offsets = [6, 0, 0], sizes = [1, 2, 128], strides = [1, 1, 1]} : vector<8x2x128xf32> to vector<1x2x128xf32>
    %294 = vector.shape_cast %293 : vector<1x2x128xf32> to vector<2x128xf32>
    %cst_69 = arith.constant dense<0.000000e+00> : vector<2x128xf32>
    %295 = tpu.matmul %270, %22, %cst_69 {dimension_numbers = #tpu.dot_dimension_numbers<[1], [0], [0], [1], [0, 0, 1, 1], [], []>} : vector<2x32xf32>, vector<32x128xf32>, vector<2x128xf32> -> vector<2x128xf32>
    %296 = arith.addf %294, %295 : vector<2x128xf32>
    %297 = arith.negf %296 : vector<2x128xf32>
    %298 = math.exp %297 : vector<2x128xf32>
    %cst_70 = arith.constant 1.000000e+00 : f32
    %299 = vector.broadcast %cst_70 : f32 to vector<2x128xf32>
    %300 = arith.addf %299, %298 : vector<2x128xf32>
    %301 = arith.divf %299, %300 : vector<2x128xf32>
    %302 = vector.extract_strided_slice %301 {offsets = [0, 0], sizes = [2, 32], strides = [1, 1]} : vector<2x128xf32> to vector<2x32xf32>
    %303 = vector.extract_strided_slice %301 {offsets = [0, 32], sizes = [2, 32], strides = [1, 1]} : vector<2x128xf32> to vector<2x32xf32>
    %304 = vector.extract_strided_slice %301 {offsets = [0, 64], sizes = [2, 32], strides = [1, 1]} : vector<2x128xf32> to vector<2x32xf32>
    %cst_71 = arith.constant 2.000000e+00 : f32
    %305 = vector.broadcast %cst_71 : f32 to vector<2x32xf32>
    %306 = arith.mulf %305, %304 : vector<2x32xf32>
    %cst_72 = arith.constant 1.000000e+00 : f32
    %307 = vector.broadcast %cst_72 : f32 to vector<2x32xf32>
    %308 = arith.subf %306, %307 : vector<2x32xf32>
    %309 = vector.extract_strided_slice %301 {offsets = [0, 96], sizes = [2, 32], strides = [1, 1]} : vector<2x128xf32> to vector<2x32xf32>
    %310 = arith.mulf %303, %268 : vector<2x32xf32>
    %311 = arith.mulf %302, %308 : vector<2x32xf32>
    %312 = arith.addf %310, %311 : vector<2x32xf32>
    %313 = math.tanh %312 : vector<2x32xf32>
    %314 = arith.mulf %309, %313 : vector<2x32xf32>
    %315 = vector.extract_strided_slice %20 {offsets = [1, 0, 0], sizes = [1, 2, 128], strides = [1, 1, 1]} : vector<8x2x128xf32> to vector<1x2x128xf32>
    %316 = vector.shape_cast %315 : vector<1x2x128xf32> to vector<2x128xf32>
    %cst_73 = arith.constant dense<0.000000e+00> : vector<2x128xf32>
    %317 = tpu.matmul %292, %24, %cst_73 {dimension_numbers = #tpu.dot_dimension_numbers<[1], [0], [0], [1], [0, 0, 1, 1], [], []>} : vector<2x32xf32>, vector<32x128xf32>, vector<2x128xf32> -> vector<2x128xf32>
    %318 = arith.addf %316, %317 : vector<2x128xf32>
    %319 = arith.negf %318 : vector<2x128xf32>
    %320 = math.exp %319 : vector<2x128xf32>
    %cst_74 = arith.constant 1.000000e+00 : f32
    %321 = vector.broadcast %cst_74 : f32 to vector<2x128xf32>
    %322 = arith.addf %321, %320 : vector<2x128xf32>
    %323 = arith.divf %321, %322 : vector<2x128xf32>
    %324 = vector.extract_strided_slice %323 {offsets = [0, 0], sizes = [2, 32], strides = [1, 1]} : vector<2x128xf32> to vector<2x32xf32>
    %325 = vector.extract_strided_slice %323 {offsets = [0, 32], sizes = [2, 32], strides = [1, 1]} : vector<2x128xf32> to vector<2x32xf32>
    %326 = vector.extract_strided_slice %323 {offsets = [0, 64], sizes = [2, 32], strides = [1, 1]} : vector<2x128xf32> to vector<2x32xf32>
    %cst_75 = arith.constant 2.000000e+00 : f32
    %327 = vector.broadcast %cst_75 : f32 to vector<2x32xf32>
    %328 = arith.mulf %327, %326 : vector<2x32xf32>
    %cst_76 = arith.constant 1.000000e+00 : f32
    %329 = vector.broadcast %cst_76 : f32 to vector<2x32xf32>
    %330 = arith.subf %328, %329 : vector<2x32xf32>
    %331 = vector.extract_strided_slice %323 {offsets = [0, 96], sizes = [2, 32], strides = [1, 1]} : vector<2x128xf32> to vector<2x32xf32>
    %332 = arith.mulf %325, %290 : vector<2x32xf32>
    %333 = arith.mulf %324, %330 : vector<2x32xf32>
    %334 = arith.addf %332, %333 : vector<2x32xf32>
    %335 = math.tanh %334 : vector<2x32xf32>
    %336 = arith.mulf %331, %335 : vector<2x32xf32>
    %337 = vector.extract_strided_slice %12 {offsets = [7, 0, 0], sizes = [1, 2, 128], strides = [1, 1, 1]} : vector<8x2x128xf32> to vector<1x2x128xf32>
    %338 = vector.shape_cast %337 : vector<1x2x128xf32> to vector<2x128xf32>
    %cst_77 = arith.constant dense<0.000000e+00> : vector<2x128xf32>
    %339 = tpu.matmul %314, %22, %cst_77 {dimension_numbers = #tpu.dot_dimension_numbers<[1], [0], [0], [1], [0, 0, 1, 1], [], []>} : vector<2x32xf32>, vector<32x128xf32>, vector<2x128xf32> -> vector<2x128xf32>
    %340 = arith.addf %338, %339 : vector<2x128xf32>
    %341 = arith.negf %340 : vector<2x128xf32>
    %342 = math.exp %341 : vector<2x128xf32>
    %cst_78 = arith.constant 1.000000e+00 : f32
    %343 = vector.broadcast %cst_78 : f32 to vector<2x128xf32>
    %344 = arith.addf %343, %342 : vector<2x128xf32>
    %345 = arith.divf %343, %344 : vector<2x128xf32>
    %346 = vector.extract_strided_slice %345 {offsets = [0, 0], sizes = [2, 32], strides = [1, 1]} : vector<2x128xf32> to vector<2x32xf32>
    %347 = vector.extract_strided_slice %345 {offsets = [0, 32], sizes = [2, 32], strides = [1, 1]} : vector<2x128xf32> to vector<2x32xf32>
    %348 = vector.extract_strided_slice %345 {offsets = [0, 64], sizes = [2, 32], strides = [1, 1]} : vector<2x128xf32> to vector<2x32xf32>
    %cst_79 = arith.constant 2.000000e+00 : f32
    %349 = vector.broadcast %cst_79 : f32 to vector<2x32xf32>
    %350 = arith.mulf %349, %348 : vector<2x32xf32>
    %cst_80 = arith.constant 1.000000e+00 : f32
    %351 = vector.broadcast %cst_80 : f32 to vector<2x32xf32>
    %352 = arith.subf %350, %351 : vector<2x32xf32>
    %353 = vector.extract_strided_slice %345 {offsets = [0, 96], sizes = [2, 32], strides = [1, 1]} : vector<2x128xf32> to vector<2x32xf32>
    %354 = arith.mulf %347, %312 : vector<2x32xf32>
    %355 = arith.mulf %346, %352 : vector<2x32xf32>
    %356 = arith.addf %354, %355 : vector<2x32xf32>
    %357 = math.tanh %356 : vector<2x32xf32>
    %358 = arith.mulf %353, %357 : vector<2x32xf32>
    %359 = vector.extract_strided_slice %20 {offsets = [0, 0, 0], sizes = [1, 2, 128], strides = [1, 1, 1]} : vector<8x2x128xf32> to vector<1x2x128xf32>
    %360 = vector.shape_cast %359 : vector<1x2x128xf32> to vector<2x128xf32>
    %cst_81 = arith.constant dense<0.000000e+00> : vector<2x128xf32>
    %361 = tpu.matmul %336, %24, %cst_81 {dimension_numbers = #tpu.dot_dimension_numbers<[1], [0], [0], [1], [0, 0, 1, 1], [], []>} : vector<2x32xf32>, vector<32x128xf32>, vector<2x128xf32> -> vector<2x128xf32>
    %362 = arith.addf %360, %361 : vector<2x128xf32>
    %363 = arith.negf %362 : vector<2x128xf32>
    %364 = math.exp %363 : vector<2x128xf32>
    %cst_82 = arith.constant 1.000000e+00 : f32
    %365 = vector.broadcast %cst_82 : f32 to vector<2x128xf32>
    %366 = arith.addf %365, %364 : vector<2x128xf32>
    %367 = arith.divf %365, %366 : vector<2x128xf32>
    %368 = vector.extract_strided_slice %367 {offsets = [0, 0], sizes = [2, 32], strides = [1, 1]} : vector<2x128xf32> to vector<2x32xf32>
    %369 = vector.extract_strided_slice %367 {offsets = [0, 32], sizes = [2, 32], strides = [1, 1]} : vector<2x128xf32> to vector<2x32xf32>
    %370 = vector.extract_strided_slice %367 {offsets = [0, 64], sizes = [2, 32], strides = [1, 1]} : vector<2x128xf32> to vector<2x32xf32>
    %cst_83 = arith.constant 2.000000e+00 : f32
    %371 = vector.broadcast %cst_83 : f32 to vector<2x32xf32>
    %372 = arith.mulf %371, %370 : vector<2x32xf32>
    %cst_84 = arith.constant 1.000000e+00 : f32
    %373 = vector.broadcast %cst_84 : f32 to vector<2x32xf32>
    %374 = arith.subf %372, %373 : vector<2x32xf32>
    %375 = vector.extract_strided_slice %367 {offsets = [0, 96], sizes = [2, 32], strides = [1, 1]} : vector<2x128xf32> to vector<2x32xf32>
    %376 = arith.mulf %369, %334 : vector<2x32xf32>
    %377 = arith.mulf %368, %374 : vector<2x32xf32>
    %378 = arith.addf %376, %377 : vector<2x32xf32>
    %379 = math.tanh %378 : vector<2x32xf32>
    %380 = arith.mulf %375, %379 : vector<2x32xf32>
    %381 = tpu.concatenate %50, %380 in 1 : vector<2x32xf32>, vector<2x32xf32> -> vector<2x64xf32>
    %382 = tpu.concatenate %94, %336 in 1 : vector<2x32xf32>, vector<2x32xf32> -> vector<2x64xf32>
    %383 = tpu.concatenate %138, %292 in 1 : vector<2x32xf32>, vector<2x32xf32> -> vector<2x64xf32>
    %384 = tpu.concatenate %182, %248 in 1 : vector<2x32xf32>, vector<2x32xf32> -> vector<2x64xf32>
    %385 = tpu.concatenate %226, %204 in 1 : vector<2x32xf32>, vector<2x32xf32> -> vector<2x64xf32>
    %386 = tpu.concatenate %270, %160 in 1 : vector<2x32xf32>, vector<2x32xf32> -> vector<2x64xf32>
    %387 = tpu.concatenate %314, %116 in 1 : vector<2x32xf32>, vector<2x32xf32> -> vector<2x64xf32>
    %388 = tpu.concatenate %358, %72 in 1 : vector<2x32xf32>, vector<2x32xf32> -> vector<2x64xf32>
    %389 = vector.shape_cast %381 : vector<2x64xf32> to vector<1x2x64xf32>
    %390 = vector.shape_cast %382 : vector<2x64xf32> to vector<1x2x64xf32>
    %391 = vector.shape_cast %383 : vector<2x64xf32> to vector<1x2x64xf32>
    %392 = vector.shape_cast %384 : vector<2x64xf32> to vector<1x2x64xf32>
    %393 = vector.shape_cast %385 : vector<2x64xf32> to vector<1x2x64xf32>
    %394 = vector.shape_cast %386 : vector<2x64xf32> to vector<1x2x64xf32>
    %395 = vector.shape_cast %387 : vector<2x64xf32> to vector<1x2x64xf32>
    %396 = vector.shape_cast %388 : vector<2x64xf32> to vector<1x2x64xf32>
    %397 = tpu.concatenate %389, %390, %391, %392, %393, %394, %395, %396 in 0 : vector<1x2x64xf32>, vector<1x2x64xf32>, vector<1x2x64xf32>, vector<1x2x64xf32>, vector<1x2x64xf32>, vector<1x2x64xf32>, vector<1x2x64xf32>, vector<1x2x64xf32> -> vector<8x2x64xf32>
    %398 = vector.extract_strided_slice %2 {offsets = [0, 0, 0], sizes = [1, 64, 128], strides = [1, 1, 1]} : vector<2x64x128xf32> to vector<1x64x128xf32>
    %399 = vector.shape_cast %398 : vector<1x64x128xf32> to vector<64x128xf32>
    "tpu.trace_start"() <{level = 10 : i32, message = "tbd,dg->tbg"}> : () -> ()
    %cst_85 = arith.constant dense<0.000000e+00> : vector<8x2x128xf32>
    %400 = tpu.matmul %397, %399, %cst_85 {dimension_numbers = #tpu.dot_dimension_numbers<[2], [0], [0, 1], [1], [0, 0, 0, 1, 1, 1], [], []>} : vector<8x2x64xf32>, vector<64x128xf32>, vector<8x2x128xf32> -> vector<8x2x128xf32>
    "tpu.trace_stop"() : () -> ()
    %401 = vector.extract_strided_slice %4 {offsets = [1, 0, 0, 0], sizes = [1, 1, 1, 128], strides = [1, 1, 1, 1]} : vector<2x2x1x128xf32> to vector<1x1x1x128xf32>
    %402 = vector.shape_cast %401 : vector<1x1x1x128xf32> to vector<1x128xf32>
    %403 = vector.shape_cast %402 : vector<1x128xf32> to vector<1x1x128xf32>
    %404 = vector.broadcast %403 : vector<1x1x128xf32> to vector<8x2x128xf32>
    %405 = arith.addf %400, %404 : vector<8x2x128xf32>
    %406 = vector.extract_strided_slice %2 {offsets = [1, 0, 0], sizes = [1, 64, 128], strides = [1, 1, 1]} : vector<2x64x128xf32> to vector<1x64x128xf32>
    %407 = vector.shape_cast %406 : vector<1x64x128xf32> to vector<64x128xf32>
    "tpu.trace_start"() <{level = 10 : i32, message = "tbd,dg->tbg"}> : () -> ()
    %cst_86 = arith.constant dense<0.000000e+00> : vector<8x2x128xf32>
    %408 = tpu.matmul %397, %407, %cst_86 {dimension_numbers = #tpu.dot_dimension_numbers<[2], [0], [0, 1], [1], [0, 0, 0, 1, 1, 1], [], []>} : vector<8x2x64xf32>, vector<64x128xf32>, vector<8x2x128xf32> -> vector<8x2x128xf32>
    "tpu.trace_stop"() : () -> ()
    %409 = vector.extract_strided_slice %4 {offsets = [1, 1, 0, 0], sizes = [1, 1, 1, 128], strides = [1, 1, 1, 1]} : vector<2x2x1x128xf32> to vector<1x1x1x128xf32>
    %410 = vector.shape_cast %409 : vector<1x1x1x128xf32> to vector<1x128xf32>
    %411 = vector.shape_cast %410 : vector<1x128xf32> to vector<1x1x128xf32>
    %412 = vector.broadcast %411 : vector<1x1x128xf32> to vector<8x2x128xf32>
    %413 = arith.addf %408, %412 : vector<8x2x128xf32>
    %414 = vector.extract_strided_slice %3 {offsets = [1, 0, 0, 0], sizes = [1, 1, 32, 128], strides = [1, 1, 1, 1]} : vector<2x2x32x128xf32> to vector<1x1x32x128xf32>
    %415 = vector.shape_cast %414 : vector<1x1x32x128xf32> to vector<32x128xf32>
    %416 = vector.extract_strided_slice %3 {offsets = [1, 1, 0, 0], sizes = [1, 1, 32, 128], strides = [1, 1, 1, 1]} : vector<2x2x32x128xf32> to vector<1x1x32x128xf32>
    %417 = vector.shape_cast %416 : vector<1x1x32x128xf32> to vector<32x128xf32>
    %cst_87 = arith.constant 0.000000e+00 : f32
    %418 = vector.broadcast %cst_87 : f32 to vector<2x32xf32>
    %cst_88 = arith.constant 0.000000e+00 : f32
    %419 = vector.broadcast %cst_88 : f32 to vector<2x32xf32>
    %cst_89 = arith.constant 0.000000e+00 : f32
    %420 = vector.broadcast %cst_89 : f32 to vector<2x32xf32>
    %cst_90 = arith.constant 0.000000e+00 : f32
    %421 = vector.broadcast %cst_90 : f32 to vector<2x32xf32>
    %422 = vector.extract_strided_slice %405 {offsets = [0, 0, 0], sizes = [1, 2, 128], strides = [1, 1, 1]} : vector<8x2x128xf32> to vector<1x2x128xf32>
    %423 = vector.shape_cast %422 : vector<1x2x128xf32> to vector<2x128xf32>
    %cst_91 = arith.constant dense<0.000000e+00> : vector<2x128xf32>
    %424 = tpu.matmul %418, %415, %cst_91 {dimension_numbers = #tpu.dot_dimension_numbers<[1], [0], [0], [1], [0, 0, 1, 1], [], []>} : vector<2x32xf32>, vector<32x128xf32>, vector<2x128xf32> -> vector<2x128xf32>
    %425 = arith.addf %423, %424 : vector<2x128xf32>
    %426 = arith.negf %425 : vector<2x128xf32>
    %427 = math.exp %426 : vector<2x128xf32>
    %cst_92 = arith.constant 1.000000e+00 : f32
    %428 = vector.broadcast %cst_92 : f32 to vector<2x128xf32>
    %429 = arith.addf %428, %427 : vector<2x128xf32>
    %430 = arith.divf %428, %429 : vector<2x128xf32>
    %431 = vector.extract_strided_slice %430 {offsets = [0, 0], sizes = [2, 32], strides = [1, 1]} : vector<2x128xf32> to vector<2x32xf32>
    %432 = vector.extract_strided_slice %430 {offsets = [0, 32], sizes = [2, 32], strides = [1, 1]} : vector<2x128xf32> to vector<2x32xf32>
    %433 = vector.extract_strided_slice %430 {offsets = [0, 64], sizes = [2, 32], strides = [1, 1]} : vector<2x128xf32> to vector<2x32xf32>
    %cst_93 = arith.constant 2.000000e+00 : f32
    %434 = vector.broadcast %cst_93 : f32 to vector<2x32xf32>
    %435 = arith.mulf %434, %433 : vector<2x32xf32>
    %cst_94 = arith.constant 1.000000e+00 : f32
    %436 = vector.broadcast %cst_94 : f32 to vector<2x32xf32>
    %437 = arith.subf %435, %436 : vector<2x32xf32>
    %438 = vector.extract_strided_slice %430 {offsets = [0, 96], sizes = [2, 32], strides = [1, 1]} : vector<2x128xf32> to vector<2x32xf32>
    %439 = arith.mulf %432, %419 : vector<2x32xf32>
    %440 = arith.mulf %431, %437 : vector<2x32xf32>
    %441 = arith.addf %439, %440 : vector<2x32xf32>
    %442 = math.tanh %441 : vector<2x32xf32>
    %443 = arith.mulf %438, %442 : vector<2x32xf32>
    %444 = vector.extract_strided_slice %413 {offsets = [7, 0, 0], sizes = [1, 2, 128], strides = [1, 1, 1]} : vector<8x2x128xf32> to vector<1x2x128xf32>
    %445 = vector.shape_cast %444 : vector<1x2x128xf32> to vector<2x128xf32>
    %cst_95 = arith.constant dense<0.000000e+00> : vector<2x128xf32>
    %446 = tpu.matmul %420, %417, %cst_95 {dimension_numbers = #tpu.dot_dimension_numbers<[1], [0], [0], [1], [0, 0, 1, 1], [], []>} : vector<2x32xf32>, vector<32x128xf32>, vector<2x128xf32> -> vector<2x128xf32>
    %447 = arith.addf %445, %446 : vector<2x128xf32>
    %448 = arith.negf %447 : vector<2x128xf32>
    %449 = math.exp %448 : vector<2x128xf32>
    %cst_96 = arith.constant 1.000000e+00 : f32
    %450 = vector.broadcast %cst_96 : f32 to vector<2x128xf32>
    %451 = arith.addf %450, %449 : vector<2x128xf32>
    %452 = arith.divf %450, %451 : vector<2x128xf32>
    %453 = vector.extract_strided_slice %452 {offsets = [0, 0], sizes = [2, 32], strides = [1, 1]} : vector<2x128xf32> to vector<2x32xf32>
    %454 = vector.extract_strided_slice %452 {offsets = [0, 32], sizes = [2, 32], strides = [1, 1]} : vector<2x128xf32> to vector<2x32xf32>
    %455 = vector.extract_strided_slice %452 {offsets = [0, 64], sizes = [2, 32], strides = [1, 1]} : vector<2x128xf32> to vector<2x32xf32>
    %cst_97 = arith.constant 2.000000e+00 : f32
    %456 = vector.broadcast %cst_97 : f32 to vector<2x32xf32>
    %457 = arith.mulf %456, %455 : vector<2x32xf32>
    %cst_98 = arith.constant 1.000000e+00 : f32
    %458 = vector.broadcast %cst_98 : f32 to vector<2x32xf32>
    %459 = arith.subf %457, %458 : vector<2x32xf32>
    %460 = vector.extract_strided_slice %452 {offsets = [0, 96], sizes = [2, 32], strides = [1, 1]} : vector<2x128xf32> to vector<2x32xf32>
    %461 = arith.mulf %454, %421 : vector<2x32xf32>
    %462 = arith.mulf %453, %459 : vector<2x32xf32>
    %463 = arith.addf %461, %462 : vector<2x32xf32>
    %464 = math.tanh %463 : vector<2x32xf32>
    %465 = arith.mulf %460, %464 : vector<2x32xf32>
    %466 = vector.extract_strided_slice %405 {offsets = [1, 0, 0], sizes = [1, 2, 128], strides = [1, 1, 1]} : vector<8x2x128xf32> to vector<1x2x128xf32>
    %467 = vector.shape_cast %466 : vector<1x2x128xf32> to vector<2x128xf32>
    %cst_99 = arith.constant dense<0.000000e+00> : vector<2x128xf32>
    %468 = tpu.matmul %443, %415, %cst_99 {dimension_numbers = #tpu.dot_dimension_numbers<[1], [0], [0], [1], [0, 0, 1, 1], [], []>} : vector<2x32xf32>, vector<32x128xf32>, vector<2x128xf32> -> vector<2x128xf32>
    %469 = arith.addf %467, %468 : vector<2x128xf32>
    %470 = arith.negf %469 : vector<2x128xf32>
    %471 = math.exp %470 : vector<2x128xf32>
    %cst_100 = arith.constant 1.000000e+00 : f32
    %472 = vector.broadcast %cst_100 : f32 to vector<2x128xf32>
    %473 = arith.addf %472, %471 : vector<2x128xf32>
    %474 = arith.divf %472, %473 : vector<2x128xf32>
    %475 = vector.extract_strided_slice %474 {offsets = [0, 0], sizes = [2, 32], strides = [1, 1]} : vector<2x128xf32> to vector<2x32xf32>
    %476 = vector.extract_strided_slice %474 {offsets = [0, 32], sizes = [2, 32], strides = [1, 1]} : vector<2x128xf32> to vector<2x32xf32>
    %477 = vector.extract_strided_slice %474 {offsets = [0, 64], sizes = [2, 32], strides = [1, 1]} : vector<2x128xf32> to vector<2x32xf32>
    %cst_101 = arith.constant 2.000000e+00 : f32
    %478 = vector.broadcast %cst_101 : f32 to vector<2x32xf32>
    %479 = arith.mulf %478, %477 : vector<2x32xf32>
    %cst_102 = arith.constant 1.000000e+00 : f32
    %480 = vector.broadcast %cst_102 : f32 to vector<2x32xf32>
    %481 = arith.subf %479, %480 : vector<2x32xf32>
    %482 = vector.extract_strided_slice %474 {offsets = [0, 96], sizes = [2, 32], strides = [1, 1]} : vector<2x128xf32> to vector<2x32xf32>
    %483 = arith.mulf %476, %441 : vector<2x32xf32>
    %484 = arith.mulf %475, %481 : vector<2x32xf32>
    %485 = arith.addf %483, %484 : vector<2x32xf32>
    %486 = math.tanh %485 : vector<2x32xf32>
    %487 = arith.mulf %482, %486 : vector<2x32xf32>
    %488 = vector.extract_strided_slice %413 {offsets = [6, 0, 0], sizes = [1, 2, 128], strides = [1, 1, 1]} : vector<8x2x128xf32> to vector<1x2x128xf32>
    %489 = vector.shape_cast %488 : vector<1x2x128xf32> to vector<2x128xf32>
    %cst_103 = arith.constant dense<0.000000e+00> : vector<2x128xf32>
    %490 = tpu.matmul %465, %417, %cst_103 {dimension_numbers = #tpu.dot_dimension_numbers<[1], [0], [0], [1], [0, 0, 1, 1], [], []>} : vector<2x32xf32>, vector<32x128xf32>, vector<2x128xf32> -> vector<2x128xf32>
    %491 = arith.addf %489, %490 : vector<2x128xf32>
    %492 = arith.negf %491 : vector<2x128xf32>
    %493 = math.exp %492 : vector<2x128xf32>
    %cst_104 = arith.constant 1.000000e+00 : f32
    %494 = vector.broadcast %cst_104 : f32 to vector<2x128xf32>
    %495 = arith.addf %494, %493 : vector<2x128xf32>
    %496 = arith.divf %494, %495 : vector<2x128xf32>
    %497 = vector.extract_strided_slice %496 {offsets = [0, 0], sizes = [2, 32], strides = [1, 1]} : vector<2x128xf32> to vector<2x32xf32>
    %498 = vector.extract_strided_slice %496 {offsets = [0, 32], sizes = [2, 32], strides = [1, 1]} : vector<2x128xf32> to vector<2x32xf32>
    %499 = vector.extract_strided_slice %496 {offsets = [0, 64], sizes = [2, 32], strides = [1, 1]} : vector<2x128xf32> to vector<2x32xf32>
    %cst_105 = arith.constant 2.000000e+00 : f32
    %500 = vector.broadcast %cst_105 : f32 to vector<2x32xf32>
    %501 = arith.mulf %500, %499 : vector<2x32xf32>
    %cst_106 = arith.constant 1.000000e+00 : f32
    %502 = vector.broadcast %cst_106 : f32 to vector<2x32xf32>
    %503 = arith.subf %501, %502 : vector<2x32xf32>
    %504 = vector.extract_strided_slice %496 {offsets = [0, 96], sizes = [2, 32], strides = [1, 1]} : vector<2x128xf32> to vector<2x32xf32>
    %505 = arith.mulf %498, %463 : vector<2x32xf32>
    %506 = arith.mulf %497, %503 : vector<2x32xf32>
    %507 = arith.addf %505, %506 : vector<2x32xf32>
    %508 = math.tanh %507 : vector<2x32xf32>
    %509 = arith.mulf %504, %508 : vector<2x32xf32>
    %510 = vector.extract_strided_slice %405 {offsets = [2, 0, 0], sizes = [1, 2, 128], strides = [1, 1, 1]} : vector<8x2x128xf32> to vector<1x2x128xf32>
    %511 = vector.shape_cast %510 : vector<1x2x128xf32> to vector<2x128xf32>
    %cst_107 = arith.constant dense<0.000000e+00> : vector<2x128xf32>
    %512 = tpu.matmul %487, %415, %cst_107 {dimension_numbers = #tpu.dot_dimension_numbers<[1], [0], [0], [1], [0, 0, 1, 1], [], []>} : vector<2x32xf32>, vector<32x128xf32>, vector<2x128xf32> -> vector<2x128xf32>
    %513 = arith.addf %511, %512 : vector<2x128xf32>
    %514 = arith.negf %513 : vector<2x128xf32>
    %515 = math.exp %514 : vector<2x128xf32>
    %cst_108 = arith.constant 1.000000e+00 : f32
    %516 = vector.broadcast %cst_108 : f32 to vector<2x128xf32>
    %517 = arith.addf %516, %515 : vector<2x128xf32>
    %518 = arith.divf %516, %517 : vector<2x128xf32>
    %519 = vector.extract_strided_slice %518 {offsets = [0, 0], sizes = [2, 32], strides = [1, 1]} : vector<2x128xf32> to vector<2x32xf32>
    %520 = vector.extract_strided_slice %518 {offsets = [0, 32], sizes = [2, 32], strides = [1, 1]} : vector<2x128xf32> to vector<2x32xf32>
    %521 = vector.extract_strided_slice %518 {offsets = [0, 64], sizes = [2, 32], strides = [1, 1]} : vector<2x128xf32> to vector<2x32xf32>
    %cst_109 = arith.constant 2.000000e+00 : f32
    %522 = vector.broadcast %cst_109 : f32 to vector<2x32xf32>
    %523 = arith.mulf %522, %521 : vector<2x32xf32>
    %cst_110 = arith.constant 1.000000e+00 : f32
    %524 = vector.broadcast %cst_110 : f32 to vector<2x32xf32>
    %525 = arith.subf %523, %524 : vector<2x32xf32>
    %526 = vector.extract_strided_slice %518 {offsets = [0, 96], sizes = [2, 32], strides = [1, 1]} : vector<2x128xf32> to vector<2x32xf32>
    %527 = arith.mulf %520, %485 : vector<2x32xf32>
    %528 = arith.mulf %519, %525 : vector<2x32xf32>
    %529 = arith.addf %527, %528 : vector<2x32xf32>
    %530 = math.tanh %529 : vector<2x32xf32>
    %531 = arith.mulf %526, %530 : vector<2x32xf32>
    %532 = vector.extract_strided_slice %413 {offsets = [5, 0, 0], sizes = [1, 2, 128], strides = [1, 1, 1]} : vector<8x2x128xf32> to vector<1x2x128xf32>
    %533 = vector.shape_cast %532 : vector<1x2x128xf32> to vector<2x128xf32>
    %cst_111 = arith.constant dense<0.000000e+00> : vector<2x128xf32>
    %534 = tpu.matmul %509, %417, %cst_111 {dimension_numbers = #tpu.dot_dimension_numbers<[1], [0], [0], [1], [0, 0, 1, 1], [], []>} : vector<2x32xf32>, vector<32x128xf32>, vector<2x128xf32> -> vector<2x128xf32>
    %535 = arith.addf %533, %534 : vector<2x128xf32>
    %536 = arith.negf %535 : vector<2x128xf32>
    %537 = math.exp %536 : vector<2x128xf32>
    %cst_112 = arith.constant 1.000000e+00 : f32
    %538 = vector.broadcast %cst_112 : f32 to vector<2x128xf32>
    %539 = arith.addf %538, %537 : vector<2x128xf32>
    %540 = arith.divf %538, %539 : vector<2x128xf32>
    %541 = vector.extract_strided_slice %540 {offsets = [0, 0], sizes = [2, 32], strides = [1, 1]} : vector<2x128xf32> to vector<2x32xf32>
    %542 = vector.extract_strided_slice %540 {offsets = [0, 32], sizes = [2, 32], strides = [1, 1]} : vector<2x128xf32> to vector<2x32xf32>
    %543 = vector.extract_strided_slice %540 {offsets = [0, 64], sizes = [2, 32], strides = [1, 1]} : vector<2x128xf32> to vector<2x32xf32>
    %cst_113 = arith.constant 2.000000e+00 : f32
    %544 = vector.broadcast %cst_113 : f32 to vector<2x32xf32>
    %545 = arith.mulf %544, %543 : vector<2x32xf32>
    %cst_114 = arith.constant 1.000000e+00 : f32
    %546 = vector.broadcast %cst_114 : f32 to vector<2x32xf32>
    %547 = arith.subf %545, %546 : vector<2x32xf32>
    %548 = vector.extract_strided_slice %540 {offsets = [0, 96], sizes = [2, 32], strides = [1, 1]} : vector<2x128xf32> to vector<2x32xf32>
    %549 = arith.mulf %542, %507 : vector<2x32xf32>
    %550 = arith.mulf %541, %547 : vector<2x32xf32>
    %551 = arith.addf %549, %550 : vector<2x32xf32>
    %552 = math.tanh %551 : vector<2x32xf32>
    %553 = arith.mulf %548, %552 : vector<2x32xf32>
    %554 = vector.extract_strided_slice %405 {offsets = [3, 0, 0], sizes = [1, 2, 128], strides = [1, 1, 1]} : vector<8x2x128xf32> to vector<1x2x128xf32>
    %555 = vector.shape_cast %554 : vector<1x2x128xf32> to vector<2x128xf32>
    %cst_115 = arith.constant dense<0.000000e+00> : vector<2x128xf32>
    %556 = tpu.matmul %531, %415, %cst_115 {dimension_numbers = #tpu.dot_dimension_numbers<[1], [0], [0], [1], [0, 0, 1, 1], [], []>} : vector<2x32xf32>, vector<32x128xf32>, vector<2x128xf32> -> vector<2x128xf32>
    %557 = arith.addf %555, %556 : vector<2x128xf32>
    %558 = arith.negf %557 : vector<2x128xf32>
    %559 = math.exp %558 : vector<2x128xf32>
    %cst_116 = arith.constant 1.000000e+00 : f32
    %560 = vector.broadcast %cst_116 : f32 to vector<2x128xf32>
    %561 = arith.addf %560, %559 : vector<2x128xf32>
    %562 = arith.divf %560, %561 : vector<2x128xf32>
    %563 = vector.extract_strided_slice %562 {offsets = [0, 0], sizes = [2, 32], strides = [1, 1]} : vector<2x128xf32> to vector<2x32xf32>
    %564 = vector.extract_strided_slice %562 {offsets = [0, 32], sizes = [2, 32], strides = [1, 1]} : vector<2x128xf32> to vector<2x32xf32>
    %565 = vector.extract_strided_slice %562 {offsets = [0, 64], sizes = [2, 32], strides = [1, 1]} : vector<2x128xf32> to vector<2x32xf32>
    %cst_117 = arith.constant 2.000000e+00 : f32
    %566 = vector.broadcast %cst_117 : f32 to vector<2x32xf32>
    %567 = arith.mulf %566, %565 : vector<2x32xf32>
    %cst_118 = arith.constant 1.000000e+00 : f32
    %568 = vector.broadcast %cst_118 : f32 to vector<2x32xf32>
    %569 = arith.subf %567, %568 : vector<2x32xf32>
    %570 = vector.extract_strided_slice %562 {offsets = [0, 96], sizes = [2, 32], strides = [1, 1]} : vector<2x128xf32> to vector<2x32xf32>
    %571 = arith.mulf %564, %529 : vector<2x32xf32>
    %572 = arith.mulf %563, %569 : vector<2x32xf32>
    %573 = arith.addf %571, %572 : vector<2x32xf32>
    %574 = math.tanh %573 : vector<2x32xf32>
    %575 = arith.mulf %570, %574 : vector<2x32xf32>
    %576 = vector.extract_strided_slice %413 {offsets = [4, 0, 0], sizes = [1, 2, 128], strides = [1, 1, 1]} : vector<8x2x128xf32> to vector<1x2x128xf32>
    %577 = vector.shape_cast %576 : vector<1x2x128xf32> to vector<2x128xf32>
    %cst_119 = arith.constant dense<0.000000e+00> : vector<2x128xf32>
    %578 = tpu.matmul %553, %417, %cst_119 {dimension_numbers = #tpu.dot_dimension_numbers<[1], [0], [0], [1], [0, 0, 1, 1], [], []>} : vector<2x32xf32>, vector<32x128xf32>, vector<2x128xf32> -> vector<2x128xf32>
    %579 = arith.addf %577, %578 : vector<2x128xf32>
    %580 = arith.negf %579 : vector<2x128xf32>
    %581 = math.exp %580 : vector<2x128xf32>
    %cst_120 = arith.constant 1.000000e+00 : f32
    %582 = vector.broadcast %cst_120 : f32 to vector<2x128xf32>
    %583 = arith.addf %582, %581 : vector<2x128xf32>
    %584 = arith.divf %582, %583 : vector<2x128xf32>
    %585 = vector.extract_strided_slice %584 {offsets = [0, 0], sizes = [2, 32], strides = [1, 1]} : vector<2x128xf32> to vector<2x32xf32>
    %586 = vector.extract_strided_slice %584 {offsets = [0, 32], sizes = [2, 32], strides = [1, 1]} : vector<2x128xf32> to vector<2x32xf32>
    %587 = vector.extract_strided_slice %584 {offsets = [0, 64], sizes = [2, 32], strides = [1, 1]} : vector<2x128xf32> to vector<2x32xf32>
    %cst_121 = arith.constant 2.000000e+00 : f32
    %588 = vector.broadcast %cst_121 : f32 to vector<2x32xf32>
    %589 = arith.mulf %588, %587 : vector<2x32xf32>
    %cst_122 = arith.constant 1.000000e+00 : f32
    %590 = vector.broadcast %cst_122 : f32 to vector<2x32xf32>
    %591 = arith.subf %589, %590 : vector<2x32xf32>
    %592 = vector.extract_strided_slice %584 {offsets = [0, 96], sizes = [2, 32], strides = [1, 1]} : vector<2x128xf32> to vector<2x32xf32>
    %593 = arith.mulf %586, %551 : vector<2x32xf32>
    %594 = arith.mulf %585, %591 : vector<2x32xf32>
    %595 = arith.addf %593, %594 : vector<2x32xf32>
    %596 = math.tanh %595 : vector<2x32xf32>
    %597 = arith.mulf %592, %596 : vector<2x32xf32>
    %598 = vector.extract_strided_slice %405 {offsets = [4, 0, 0], sizes = [1, 2, 128], strides = [1, 1, 1]} : vector<8x2x128xf32> to vector<1x2x128xf32>
    %599 = vector.shape_cast %598 : vector<1x2x128xf32> to vector<2x128xf32>
    %cst_123 = arith.constant dense<0.000000e+00> : vector<2x128xf32>
    %600 = tpu.matmul %575, %415, %cst_123 {dimension_numbers = #tpu.dot_dimension_numbers<[1], [0], [0], [1], [0, 0, 1, 1], [], []>} : vector<2x32xf32>, vector<32x128xf32>, vector<2x128xf32> -> vector<2x128xf32>
    %601 = arith.addf %599, %600 : vector<2x128xf32>
    %602 = arith.negf %601 : vector<2x128xf32>
    %603 = math.exp %602 : vector<2x128xf32>
    %cst_124 = arith.constant 1.000000e+00 : f32
    %604 = vector.broadcast %cst_124 : f32 to vector<2x128xf32>
    %605 = arith.addf %604, %603 : vector<2x128xf32>
    %606 = arith.divf %604, %605 : vector<2x128xf32>
    %607 = vector.extract_strided_slice %606 {offsets = [0, 0], sizes = [2, 32], strides = [1, 1]} : vector<2x128xf32> to vector<2x32xf32>
    %608 = vector.extract_strided_slice %606 {offsets = [0, 32], sizes = [2, 32], strides = [1, 1]} : vector<2x128xf32> to vector<2x32xf32>
    %609 = vector.extract_strided_slice %606 {offsets = [0, 64], sizes = [2, 32], strides = [1, 1]} : vector<2x128xf32> to vector<2x32xf32>
    %cst_125 = arith.constant 2.000000e+00 : f32
    %610 = vector.broadcast %cst_125 : f32 to vector<2x32xf32>
    %611 = arith.mulf %610, %609 : vector<2x32xf32>
    %cst_126 = arith.constant 1.000000e+00 : f32
    %612 = vector.broadcast %cst_126 : f32 to vector<2x32xf32>
    %613 = arith.subf %611, %612 : vector<2x32xf32>
    %614 = vector.extract_strided_slice %606 {offsets = [0, 96], sizes = [2, 32], strides = [1, 1]} : vector<2x128xf32> to vector<2x32xf32>
    %615 = arith.mulf %608, %573 : vector<2x32xf32>
    %616 = arith.mulf %607, %613 : vector<2x32xf32>
    %617 = arith.addf %615, %616 : vector<2x32xf32>
    %618 = math.tanh %617 : vector<2x32xf32>
    %619 = arith.mulf %614, %618 : vector<2x32xf32>
    %620 = vector.extract_strided_slice %413 {offsets = [3, 0, 0], sizes = [1, 2, 128], strides = [1, 1, 1]} : vector<8x2x128xf32> to vector<1x2x128xf32>
    %621 = vector.shape_cast %620 : vector<1x2x128xf32> to vector<2x128xf32>
    %cst_127 = arith.constant dense<0.000000e+00> : vector<2x128xf32>
    %622 = tpu.matmul %597, %417, %cst_127 {dimension_numbers = #tpu.dot_dimension_numbers<[1], [0], [0], [1], [0, 0, 1, 1], [], []>} : vector<2x32xf32>, vector<32x128xf32>, vector<2x128xf32> -> vector<2x128xf32>
    %623 = arith.addf %621, %622 : vector<2x128xf32>
    %624 = arith.negf %623 : vector<2x128xf32>
    %625 = math.exp %624 : vector<2x128xf32>
    %cst_128 = arith.constant 1.000000e+00 : f32
    %626 = vector.broadcast %cst_128 : f32 to vector<2x128xf32>
    %627 = arith.addf %626, %625 : vector<2x128xf32>
    %628 = arith.divf %626, %627 : vector<2x128xf32>
    %629 = vector.extract_strided_slice %628 {offsets = [0, 0], sizes = [2, 32], strides = [1, 1]} : vector<2x128xf32> to vector<2x32xf32>
    %630 = vector.extract_strided_slice %628 {offsets = [0, 32], sizes = [2, 32], strides = [1, 1]} : vector<2x128xf32> to vector<2x32xf32>
    %631 = vector.extract_strided_slice %628 {offsets = [0, 64], sizes = [2, 32], strides = [1, 1]} : vector<2x128xf32> to vector<2x32xf32>
    %cst_129 = arith.constant 2.000000e+00 : f32
    %632 = vector.broadcast %cst_129 : f32 to vector<2x32xf32>
    %633 = arith.mulf %632, %631 : vector<2x32xf32>
    %cst_130 = arith.constant 1.000000e+00 : f32
    %634 = vector.broadcast %cst_130 : f32 to vector<2x32xf32>
    %635 = arith.subf %633, %634 : vector<2x32xf32>
    %636 = vector.extract_strided_slice %628 {offsets = [0, 96], sizes = [2, 32], strides = [1, 1]} : vector<2x128xf32> to vector<2x32xf32>
    %637 = arith.mulf %630, %595 : vector<2x32xf32>
    %638 = arith.mulf %629, %635 : vector<2x32xf32>
    %639 = arith.addf %637, %638 : vector<2x32xf32>
    %640 = math.tanh %639 : vector<2x32xf32>
    %641 = arith.mulf %636, %640 : vector<2x32xf32>
    %642 = vector.extract_strided_slice %405 {offsets = [5, 0, 0], sizes = [1, 2, 128], strides = [1, 1, 1]} : vector<8x2x128xf32> to vector<1x2x128xf32>
    %643 = vector.shape_cast %642 : vector<1x2x128xf32> to vector<2x128xf32>
    %cst_131 = arith.constant dense<0.000000e+00> : vector<2x128xf32>
    %644 = tpu.matmul %619, %415, %cst_131 {dimension_numbers = #tpu.dot_dimension_numbers<[1], [0], [0], [1], [0, 0, 1, 1], [], []>} : vector<2x32xf32>, vector<32x128xf32>, vector<2x128xf32> -> vector<2x128xf32>
    %645 = arith.addf %643, %644 : vector<2x128xf32>
    %646 = arith.negf %645 : vector<2x128xf32>
    %647 = math.exp %646 : vector<2x128xf32>
    %cst_132 = arith.constant 1.000000e+00 : f32
    %648 = vector.broadcast %cst_132 : f32 to vector<2x128xf32>
    %649 = arith.addf %648, %647 : vector<2x128xf32>
    %650 = arith.divf %648, %649 : vector<2x128xf32>
    %651 = vector.extract_strided_slice %650 {offsets = [0, 0], sizes = [2, 32], strides = [1, 1]} : vector<2x128xf32> to vector<2x32xf32>
    %652 = vector.extract_strided_slice %650 {offsets = [0, 32], sizes = [2, 32], strides = [1, 1]} : vector<2x128xf32> to vector<2x32xf32>
    %653 = vector.extract_strided_slice %650 {offsets = [0, 64], sizes = [2, 32], strides = [1, 1]} : vector<2x128xf32> to vector<2x32xf32>
    %cst_133 = arith.constant 2.000000e+00 : f32
    %654 = vector.broadcast %cst_133 : f32 to vector<2x32xf32>
    %655 = arith.mulf %654, %653 : vector<2x32xf32>
    %cst_134 = arith.constant 1.000000e+00 : f32
    %656 = vector.broadcast %cst_134 : f32 to vector<2x32xf32>
    %657 = arith.subf %655, %656 : vector<2x32xf32>
    %658 = vector.extract_strided_slice %650 {offsets = [0, 96], sizes = [2, 32], strides = [1, 1]} : vector<2x128xf32> to vector<2x32xf32>
    %659 = arith.mulf %652, %617 : vector<2x32xf32>
    %660 = arith.mulf %651, %657 : vector<2x32xf32>
    %661 = arith.addf %659, %660 : vector<2x32xf32>
    %662 = math.tanh %661 : vector<2x32xf32>
    %663 = arith.mulf %658, %662 : vector<2x32xf32>
    %664 = vector.extract_strided_slice %413 {offsets = [2, 0, 0], sizes = [1, 2, 128], strides = [1, 1, 1]} : vector<8x2x128xf32> to vector<1x2x128xf32>
    %665 = vector.shape_cast %664 : vector<1x2x128xf32> to vector<2x128xf32>
    %cst_135 = arith.constant dense<0.000000e+00> : vector<2x128xf32>
    %666 = tpu.matmul %641, %417, %cst_135 {dimension_numbers = #tpu.dot_dimension_numbers<[1], [0], [0], [1], [0, 0, 1, 1], [], []>} : vector<2x32xf32>, vector<32x128xf32>, vector<2x128xf32> -> vector<2x128xf32>
    %667 = arith.addf %665, %666 : vector<2x128xf32>
    %668 = arith.negf %667 : vector<2x128xf32>
    %669 = math.exp %668 : vector<2x128xf32>
    %cst_136 = arith.constant 1.000000e+00 : f32
    %670 = vector.broadcast %cst_136 : f32 to vector<2x128xf32>
    %671 = arith.addf %670, %669 : vector<2x128xf32>
    %672 = arith.divf %670, %671 : vector<2x128xf32>
    %673 = vector.extract_strided_slice %672 {offsets = [0, 0], sizes = [2, 32], strides = [1, 1]} : vector<2x128xf32> to vector<2x32xf32>
    %674 = vector.extract_strided_slice %672 {offsets = [0, 32], sizes = [2, 32], strides = [1, 1]} : vector<2x128xf32> to vector<2x32xf32>
    %675 = vector.extract_strided_slice %672 {offsets = [0, 64], sizes = [2, 32], strides = [1, 1]} : vector<2x128xf32> to vector<2x32xf32>
    %cst_137 = arith.constant 2.000000e+00 : f32
    %676 = vector.broadcast %cst_137 : f32 to vector<2x32xf32>
    %677 = arith.mulf %676, %675 : vector<2x32xf32>
    %cst_138 = arith.constant 1.000000e+00 : f32
    %678 = vector.broadcast %cst_138 : f32 to vector<2x32xf32>
    %679 = arith.subf %677, %678 : vector<2x32xf32>
    %680 = vector.extract_strided_slice %672 {offsets = [0, 96], sizes = [2, 32], strides = [1, 1]} : vector<2x128xf32> to vector<2x32xf32>
    %681 = arith.mulf %674, %639 : vector<2x32xf32>
    %682 = arith.mulf %673, %679 : vector<2x32xf32>
    %683 = arith.addf %681, %682 : vector<2x32xf32>
    %684 = math.tanh %683 : vector<2x32xf32>
    %685 = arith.mulf %680, %684 : vector<2x32xf32>
    %686 = vector.extract_strided_slice %405 {offsets = [6, 0, 0], sizes = [1, 2, 128], strides = [1, 1, 1]} : vector<8x2x128xf32> to vector<1x2x128xf32>
    %687 = vector.shape_cast %686 : vector<1x2x128xf32> to vector<2x128xf32>
    %cst_139 = arith.constant dense<0.000000e+00> : vector<2x128xf32>
    %688 = tpu.matmul %663, %415, %cst_139 {dimension_numbers = #tpu.dot_dimension_numbers<[1], [0], [0], [1], [0, 0, 1, 1], [], []>} : vector<2x32xf32>, vector<32x128xf32>, vector<2x128xf32> -> vector<2x128xf32>
    %689 = arith.addf %687, %688 : vector<2x128xf32>
    %690 = arith.negf %689 : vector<2x128xf32>
    %691 = math.exp %690 : vector<2x128xf32>
    %cst_140 = arith.constant 1.000000e+00 : f32
    %692 = vector.broadcast %cst_140 : f32 to vector<2x128xf32>
    %693 = arith.addf %692, %691 : vector<2x128xf32>
    %694 = arith.divf %692, %693 : vector<2x128xf32>
    %695 = vector.extract_strided_slice %694 {offsets = [0, 0], sizes = [2, 32], strides = [1, 1]} : vector<2x128xf32> to vector<2x32xf32>
    %696 = vector.extract_strided_slice %694 {offsets = [0, 32], sizes = [2, 32], strides = [1, 1]} : vector<2x128xf32> to vector<2x32xf32>
    %697 = vector.extract_strided_slice %694 {offsets = [0, 64], sizes = [2, 32], strides = [1, 1]} : vector<2x128xf32> to vector<2x32xf32>
    %cst_141 = arith.constant 2.000000e+00 : f32
    %698 = vector.broadcast %cst_141 : f32 to vector<2x32xf32>
    %699 = arith.mulf %698, %697 : vector<2x32xf32>
    %cst_142 = arith.constant 1.000000e+00 : f32
    %700 = vector.broadcast %cst_142 : f32 to vector<2x32xf32>
    %701 = arith.subf %699, %700 : vector<2x32xf32>
    %702 = vector.extract_strided_slice %694 {offsets = [0, 96], sizes = [2, 32], strides = [1, 1]} : vector<2x128xf32> to vector<2x32xf32>
    %703 = arith.mulf %696, %661 : vector<2x32xf32>
    %704 = arith.mulf %695, %701 : vector<2x32xf32>
    %705 = arith.addf %703, %704 : vector<2x32xf32>
    %706 = math.tanh %705 : vector<2x32xf32>
    %707 = arith.mulf %702, %706 : vector<2x32xf32>
    %708 = vector.extract_strided_slice %413 {offsets = [1, 0, 0], sizes = [1, 2, 128], strides = [1, 1, 1]} : vector<8x2x128xf32> to vector<1x2x128xf32>
    %709 = vector.shape_cast %708 : vector<1x2x128xf32> to vector<2x128xf32>
    %cst_143 = arith.constant dense<0.000000e+00> : vector<2x128xf32>
    %710 = tpu.matmul %685, %417, %cst_143 {dimension_numbers = #tpu.dot_dimension_numbers<[1], [0], [0], [1], [0, 0, 1, 1], [], []>} : vector<2x32xf32>, vector<32x128xf32>, vector<2x128xf32> -> vector<2x128xf32>
    %711 = arith.addf %709, %710 : vector<2x128xf32>
    %712 = arith.negf %711 : vector<2x128xf32>
    %713 = math.exp %712 : vector<2x128xf32>
    %cst_144 = arith.constant 1.000000e+00 : f32
    %714 = vector.broadcast %cst_144 : f32 to vector<2x128xf32>
    %715 = arith.addf %714, %713 : vector<2x128xf32>
    %716 = arith.divf %714, %715 : vector<2x128xf32>
    %717 = vector.extract_strided_slice %716 {offsets = [0, 0], sizes = [2, 32], strides = [1, 1]} : vector<2x128xf32> to vector<2x32xf32>
    %718 = vector.extract_strided_slice %716 {offsets = [0, 32], sizes = [2, 32], strides = [1, 1]} : vector<2x128xf32> to vector<2x32xf32>
    %719 = vector.extract_strided_slice %716 {offsets = [0, 64], sizes = [2, 32], strides = [1, 1]} : vector<2x128xf32> to vector<2x32xf32>
    %cst_145 = arith.constant 2.000000e+00 : f32
    %720 = vector.broadcast %cst_145 : f32 to vector<2x32xf32>
    %721 = arith.mulf %720, %719 : vector<2x32xf32>
    %cst_146 = arith.constant 1.000000e+00 : f32
    %722 = vector.broadcast %cst_146 : f32 to vector<2x32xf32>
    %723 = arith.subf %721, %722 : vector<2x32xf32>
    %724 = vector.extract_strided_slice %716 {offsets = [0, 96], sizes = [2, 32], strides = [1, 1]} : vector<2x128xf32> to vector<2x32xf32>
    %725 = arith.mulf %718, %683 : vector<2x32xf32>
    %726 = arith.mulf %717, %723 : vector<2x32xf32>
    %727 = arith.addf %725, %726 : vector<2x32xf32>
    %728 = math.tanh %727 : vector<2x32xf32>
    %729 = arith.mulf %724, %728 : vector<2x32xf32>
    %730 = vector.extract_strided_slice %405 {offsets = [7, 0, 0], sizes = [1, 2, 128], strides = [1, 1, 1]} : vector<8x2x128xf32> to vector<1x2x128xf32>
    %731 = vector.shape_cast %730 : vector<1x2x128xf32> to vector<2x128xf32>
    %cst_147 = arith.constant dense<0.000000e+00> : vector<2x128xf32>
    %732 = tpu.matmul %707, %415, %cst_147 {dimension_numbers = #tpu.dot_dimension_numbers<[1], [0], [0], [1], [0, 0, 1, 1], [], []>} : vector<2x32xf32>, vector<32x128xf32>, vector<2x128xf32> -> vector<2x128xf32>
    %733 = arith.addf %731, %732 : vector<2x128xf32>
    %734 = arith.negf %733 : vector<2x128xf32>
    %735 = math.exp %734 : vector<2x128xf32>
    %cst_148 = arith.constant 1.000000e+00 : f32
    %736 = vector.broadcast %cst_148 : f32 to vector<2x128xf32>
    %737 = arith.addf %736, %735 : vector<2x128xf32>
    %738 = arith.divf %736, %737 : vector<2x128xf32>
    %739 = vector.extract_strided_slice %738 {offsets = [0, 0], sizes = [2, 32], strides = [1, 1]} : vector<2x128xf32> to vector<2x32xf32>
    %740 = vector.extract_strided_slice %738 {offsets = [0, 32], sizes = [2, 32], strides = [1, 1]} : vector<2x128xf32> to vector<2x32xf32>
    %741 = vector.extract_strided_slice %738 {offsets = [0, 64], sizes = [2, 32], strides = [1, 1]} : vector<2x128xf32> to vector<2x32xf32>
    %cst_149 = arith.constant 2.000000e+00 : f32
    %742 = vector.broadcast %cst_149 : f32 to vector<2x32xf32>
    %743 = arith.mulf %742, %741 : vector<2x32xf32>
    %cst_150 = arith.constant 1.000000e+00 : f32
    %744 = vector.broadcast %cst_150 : f32 to vector<2x32xf32>
    %745 = arith.subf %743, %744 : vector<2x32xf32>
    %746 = vector.extract_strided_slice %738 {offsets = [0, 96], sizes = [2, 32], strides = [1, 1]} : vector<2x128xf32> to vector<2x32xf32>
    %747 = arith.mulf %740, %705 : vector<2x32xf32>
    %748 = arith.mulf %739, %745 : vector<2x32xf32>
    %749 = arith.addf %747, %748 : vector<2x32xf32>
    %750 = math.tanh %749 : vector<2x32xf32>
    %751 = arith.mulf %746, %750 : vector<2x32xf32>
    %752 = vector.extract_strided_slice %413 {offsets = [0, 0, 0], sizes = [1, 2, 128], strides = [1, 1, 1]} : vector<8x2x128xf32> to vector<1x2x128xf32>
    %753 = vector.shape_cast %752 : vector<1x2x128xf32> to vector<2x128xf32>
    %cst_151 = arith.constant dense<0.000000e+00> : vector<2x128xf32>
    %754 = tpu.matmul %729, %417, %cst_151 {dimension_numbers = #tpu.dot_dimension_numbers<[1], [0], [0], [1], [0, 0, 1, 1], [], []>} : vector<2x32xf32>, vector<32x128xf32>, vector<2x128xf32> -> vector<2x128xf32>
    %755 = arith.addf %753, %754 : vector<2x128xf32>
    %756 = arith.negf %755 : vector<2x128xf32>
    %757 = math.exp %756 : vector<2x128xf32>
    %cst_152 = arith.constant 1.000000e+00 : f32
    %758 = vector.broadcast %cst_152 : f32 to vector<2x128xf32>
    %759 = arith.addf %758, %757 : vector<2x128xf32>
    %760 = arith.divf %758, %759 : vector<2x128xf32>
    %761 = vector.extract_strided_slice %760 {offsets = [0, 0], sizes = [2, 32], strides = [1, 1]} : vector<2x128xf32> to vector<2x32xf32>
    %762 = vector.extract_strided_slice %760 {offsets = [0, 32], sizes = [2, 32], strides = [1, 1]} : vector<2x128xf32> to vector<2x32xf32>
    %763 = vector.extract_strided_slice %760 {offsets = [0, 64], sizes = [2, 32], strides = [1, 1]} : vector<2x128xf32> to vector<2x32xf32>
    %cst_153 = arith.constant 2.000000e+00 : f32
    %764 = vector.broadcast %cst_153 : f32 to vector<2x32xf32>
    %765 = arith.mulf %764, %763 : vector<2x32xf32>
    %cst_154 = arith.constant 1.000000e+00 : f32
    %766 = vector.broadcast %cst_154 : f32 to vector<2x32xf32>
    %767 = arith.subf %765, %766 : vector<2x32xf32>
    %768 = vector.extract_strided_slice %760 {offsets = [0, 96], sizes = [2, 32], strides = [1, 1]} : vector<2x128xf32> to vector<2x32xf32>
    %769 = arith.mulf %762, %727 : vector<2x32xf32>
    %770 = arith.mulf %761, %767 : vector<2x32xf32>
    %771 = arith.addf %769, %770 : vector<2x32xf32>
    %772 = math.tanh %771 : vector<2x32xf32>
    %773 = arith.mulf %768, %772 : vector<2x32xf32>
    %774 = tpu.concatenate %443, %773 in 1 : vector<2x32xf32>, vector<2x32xf32> -> vector<2x64xf32>
    %775 = tpu.concatenate %487, %729 in 1 : vector<2x32xf32>, vector<2x32xf32> -> vector<2x64xf32>
    %776 = tpu.concatenate %531, %685 in 1 : vector<2x32xf32>, vector<2x32xf32> -> vector<2x64xf32>
    %777 = tpu.concatenate %575, %641 in 1 : vector<2x32xf32>, vector<2x32xf32> -> vector<2x64xf32>
    %778 = tpu.concatenate %619, %597 in 1 : vector<2x32xf32>, vector<2x32xf32> -> vector<2x64xf32>
    %779 = tpu.concatenate %663, %553 in 1 : vector<2x32xf32>, vector<2x32xf32> -> vector<2x64xf32>
    %780 = tpu.concatenate %707, %509 in 1 : vector<2x32xf32>, vector<2x32xf32> -> vector<2x64xf32>
    %781 = tpu.concatenate %751, %465 in 1 : vector<2x32xf32>, vector<2x32xf32> -> vector<2x64xf32>
    %782 = vector.shape_cast %774 : vector<2x64xf32> to vector<1x2x64xf32>
    %783 = vector.shape_cast %775 : vector<2x64xf32> to vector<1x2x64xf32>
    %784 = vector.shape_cast %776 : vector<2x64xf32> to vector<1x2x64xf32>
    %785 = vector.shape_cast %777 : vector<2x64xf32> to vector<1x2x64xf32>
    %786 = vector.shape_cast %778 : vector<2x64xf32> to vector<1x2x64xf32>
    %787 = vector.shape_cast %779 : vector<2x64xf32> to vector<1x2x64xf32>
    %788 = vector.shape_cast %780 : vector<2x64xf32> to vector<1x2x64xf32>
    %789 = vector.shape_cast %781 : vector<2x64xf32> to vector<1x2x64xf32>
    %790 = tpu.concatenate %782, %783, %784, %785, %786, %787, %788, %789 in 0 : vector<1x2x64xf32>, vector<1x2x64xf32>, vector<1x2x64xf32>, vector<1x2x64xf32>, vector<1x2x64xf32>, vector<1x2x64xf32>, vector<1x2x64xf32>, vector<1x2x64xf32> -> vector<8x2x64xf32>
    %c0_155 = arith.constant 0 : index
    %c0_156 = arith.constant 0 : index
    %791 = vector.load %arg5[%c0_155, %c0_156] : memref<128x32xf32, #tpu.memory_space<vmem>>, vector<128x32xf32>
    %c0_157 = arith.constant 0 : index
    %c0_158 = arith.constant 0 : index
    %792 = vector.load %arg6[%c0_157, %c0_158] : memref<8x32xf32, #tpu.memory_space<vmem>>, vector<8x32xf32>
    %793 = vector.extract_strided_slice %791 {offsets = [0, 0], sizes = [64, 32], strides = [1, 1]} : vector<128x32xf32> to vector<64x32xf32>
    %794 = vector.extract_strided_slice %791 {offsets = [64, 0], sizes = [64, 32], strides = [1, 1]} : vector<128x32xf32> to vector<64x32xf32>
    %795 = vector.extract_strided_slice %792 {offsets = [0, 0], sizes = [1, 32], strides = [1, 1]} : vector<8x32xf32> to vector<1x32xf32>
    %796 = vector.extract_strided_slice %792 {offsets = [1, 0], sizes = [1, 32], strides = [1, 1]} : vector<8x32xf32> to vector<1x32xf32>
    %797 = vector.extract_strided_slice %792 {offsets = [2, 0], sizes = [1, 32], strides = [1, 1]} : vector<8x32xf32> to vector<1x32xf32>
    %798 = vector.extract_strided_slice %792 {offsets = [3, 0], sizes = [1, 32], strides = [1, 1]} : vector<8x32xf32> to vector<1x32xf32>
    %799 = vector.extract_strided_slice %792 {offsets = [4, 0], sizes = [1, 32], strides = [1, 1]} : vector<8x32xf32> to vector<1x32xf32>
    %800 = vector.extract_strided_slice %792 {offsets = [5, 0], sizes = [1, 32], strides = [1, 1]} : vector<8x32xf32> to vector<1x32xf32>
    %801 = vector.extract_strided_slice %792 {offsets = [6, 0], sizes = [1, 1], strides = [1, 1]} : vector<8x32xf32> to vector<1x1xf32>
    %802 = vector.extract_strided_slice %792 {offsets = [7, 0], sizes = [1, 1], strides = [1, 1]} : vector<8x32xf32> to vector<1x1xf32>
    "tpu.trace_start"() <{level = 10 : i32, message = "tbd,dh->tbh"}> : () -> ()
    %cst_159 = arith.constant dense<0.000000e+00> : vector<8x2x32xf32>
    %803 = tpu.matmul %790, %793, %cst_159 {dimension_numbers = #tpu.dot_dimension_numbers<[2], [0], [0, 1], [1], [0, 0, 0, 1, 1, 1], [], []>} : vector<8x2x64xf32>, vector<64x32xf32>, vector<8x2x32xf32> -> vector<8x2x32xf32>
    "tpu.trace_stop"() : () -> ()
    %804 = vector.shape_cast %795 : vector<1x32xf32> to vector<1x1x32xf32>
    %805 = vector.broadcast %804 : vector<1x1x32xf32> to vector<8x2x32xf32>
    %806 = arith.addf %803, %805 : vector<8x2x32xf32>
    %807 = math.tanh %806 : vector<8x2x32xf32>
    %808 = vector.shape_cast %796 : vector<1x32xf32> to vector<1x1x32xf32>
    %809 = vector.broadcast %808 : vector<1x1x32xf32> to vector<8x2x32xf32>
    %810 = arith.mulf %807, %809 : vector<8x2x32xf32>
    %cst_160 = arith.constant dense<0.000000e+00> : vector<8x2xf32>
    %811 = vector.multi_reduction <add>, %810, %cst_160 [2] : vector<8x2x32xf32> to vector<8x2xf32>
    %812 = vector.shape_cast %811 : vector<8x2xf32> to vector<8x2x1xf32>
    %813 = vector.shape_cast %801 : vector<1x1xf32> to vector<1x1x1xf32>
    %814 = vector.broadcast %813 : vector<1x1x1xf32> to vector<8x2x1xf32>
    %815 = arith.addf %812, %814 : vector<8x2x1xf32>
    %cst_161 = arith.constant dense<0xFF800000> : vector<2x1xf32>
    %816 = vector.multi_reduction <maximumf>, %815, %cst_161 [0] : vector<8x2x1xf32> to vector<2x1xf32>
    %817 = vector.shape_cast %816 : vector<2x1xf32> to vector<1x2x1xf32>
    %818 = vector.broadcast %817 : vector<1x2x1xf32> to vector<8x2x1xf32>
    %819 = arith.subf %815, %818 : vector<8x2x1xf32>
    %820 = math.exp %819 : vector<8x2x1xf32>
    %cst_162 = arith.constant dense<0.000000e+00> : vector<2x1xf32>
    %821 = vector.multi_reduction <add>, %820, %cst_162 [0] : vector<8x2x1xf32> to vector<2x1xf32>
    %822 = vector.shape_cast %821 : vector<2x1xf32> to vector<1x2x1xf32>
    %823 = tpu.reciprocal %822 {approx = true} : vector<1x2x1xf32> -> vector<1x2x1xf32>
    %824 = vector.broadcast %823 : vector<1x2x1xf32> to vector<8x2x1xf32>
    %825 = arith.mulf %820, %824 : vector<8x2x1xf32>
    %826 = vector.broadcast %825 : vector<8x2x1xf32> to vector<8x2x64xf32>
    %827 = arith.mulf %826, %790 : vector<8x2x64xf32>
    %cst_163 = arith.constant dense<0.000000e+00> : vector<2x64xf32>
    %828 = vector.multi_reduction <add>, %827, %cst_163 [0] : vector<8x2x64xf32> to vector<2x64xf32>
    %cst_164 = arith.constant dense<0.000000e+00> : vector<2x32xf32>
    %829 = tpu.matmul %828, %794, %cst_164 {dimension_numbers = #tpu.dot_dimension_numbers<[1], [0], [0], [1], [0, 0, 1, 1], [], []>} : vector<2x64xf32>, vector<64x32xf32>, vector<2x32xf32> -> vector<2x32xf32>
    %830 = vector.broadcast %797 : vector<1x32xf32> to vector<2x32xf32>
    %831 = arith.addf %829, %830 : vector<2x32xf32>
    %cst_165 = arith.constant dense<0.000000e+00> : vector<2xf32>
    %832 = vector.multi_reduction <add>, %831, %cst_165 [1] : vector<2x32xf32> to vector<2xf32>
    %833 = vector.shape_cast %832 : vector<2xf32> to vector<2x1xf32>
    %cst_166 = arith.constant 3.200000e+01 : f32
    %834 = vector.broadcast %cst_166 : f32 to vector<2x1xf32>
    %835 = arith.divf %833, %834 : vector<2x1xf32>
    %836 = vector.broadcast %835 : vector<2x1xf32> to vector<2x32xf32>
    %837 = arith.subf %831, %836 : vector<2x32xf32>
    %838 = arith.mulf %837, %837 : vector<2x32xf32>
    %cst_167 = arith.constant dense<0.000000e+00> : vector<2xf32>
    %839 = vector.multi_reduction <add>, %838, %cst_167 [1] : vector<2x32xf32> to vector<2xf32>
    %840 = vector.shape_cast %839 : vector<2xf32> to vector<2x1xf32>
    %cst_168 = arith.constant 3.200000e+01 : f32
    %841 = vector.broadcast %cst_168 : f32 to vector<2x1xf32>
    %842 = arith.divf %840, %841 : vector<2x1xf32>
    %843 = vector.broadcast %835 : vector<2x1xf32> to vector<2x32xf32>
    %844 = arith.subf %831, %843 : vector<2x32xf32>
    %cst_169 = arith.constant 9.99999974E-6 : f32
    %845 = vector.broadcast %cst_169 : f32 to vector<2x1xf32>
    %846 = arith.addf %842, %845 : vector<2x1xf32>
    %847 = math.rsqrt %846 : vector<2x1xf32>
    %848 = vector.broadcast %847 : vector<2x1xf32> to vector<2x32xf32>
    %849 = arith.mulf %844, %848 : vector<2x32xf32>
    %850 = vector.broadcast %798 : vector<1x32xf32> to vector<2x32xf32>
    %851 = arith.mulf %849, %850 : vector<2x32xf32>
    %852 = vector.broadcast %799 : vector<1x32xf32> to vector<2x32xf32>
    %853 = arith.addf %851, %852 : vector<2x32xf32>
    %cst_170 = arith.constant 0.000000e+00 : f32
    %854 = vector.broadcast %cst_170 : f32 to vector<2x32xf32>
    %855 = arith.maximumf %853, %854 : vector<2x32xf32>
    %856 = vector.broadcast %800 : vector<1x32xf32> to vector<2x32xf32>
    %857 = arith.mulf %855, %856 : vector<2x32xf32>
    %cst_171 = arith.constant dense<0.000000e+00> : vector<2xf32>
    %858 = vector.multi_reduction <add>, %857, %cst_171 [1] : vector<2x32xf32> to vector<2xf32>
    %859 = vector.shape_cast %858 : vector<2xf32> to vector<2x1xf32>
    %860 = vector.broadcast %802 : vector<1x1xf32> to vector<2x1xf32>
    %861 = arith.addf %859, %860 : vector<2x1xf32>
    %c0_172 = arith.constant 0 : index
    %c0_173 = arith.constant 0 : index
    %862 = vector.load %arg7[%c0_172, %c0_173] : memref<2x1xf32, #tpu.memory_space<vmem>>, vector<2x1xf32>
    tpu.vector_store %arg7[%c0_172, %c0_173], %861 {strides = array<i32>} : memref<2x1xf32, #tpu.memory_space<vmem>>, vector<2x1xf32>,
    %863 = tpu.concatenate %358, %380, %751, %773, %356, %378, %749, %771 in 1 : vector<2x32xf32>, vector<2x32xf32>, vector<2x32xf32>, vector<2x32xf32>, vector<2x32xf32>, vector<2x32xf32>, vector<2x32xf32>, vector<2x32xf32> -> vector<2x256xf32>
    %c0_174 = arith.constant 0 : index
    %c0_175 = arith.constant 0 : index
    %864 = vector.load %arg8[%c0_174, %c0_175] : memref<2x256xf32, #tpu.memory_space<vmem>>, vector<2x256xf32>
    tpu.vector_store %arg8[%c0_174, %c0_175], %863 {strides = array<i32>} : memref<2x256xf32, #tpu.memory_space<vmem>>, vector<2x256xf32>,
    return
  }
}

</mosaic_0001>

<llo_original>
// kernel: lstm_model_forward.1
$region0: #{lstm_model_forward.1}
  #allocation0 [shape = 'u32[]', space=smem, size = 0x4, offset = 0x4, fixed_abs, tag = 'smem constant byte address 0x4 - core index']
  #allocation1 [shape = 'u32[72,128]{1,0:T(1,128)}', space=vmem, size = 0x9000, scoped, tag = 'internal scratch']
  %s0 = inlined_call_operand.vmem [shape: f32[8,2,4], index: 0, kind: input, shape index: {}]
  %s1 = inlined_call_operand.vmem [shape: f32[2,4,128], index: 1, kind: input, shape index: {}]
  %s2 = inlined_call_operand.vmem [shape: f32[2,64,128], index: 2, kind: input, shape index: {}]
  %s3 = inlined_call_operand.hbm [shape: f32[2,2,32,128], index: 3, kind: input, shape index: {}]
  %s4 = inlined_call_operand.vmem [shape: f32[2,2,1,128], index: 4, kind: input, shape index: {}]
  %s5 = inlined_call_operand.vmem [shape: f32[128,32], index: 5, kind: input, shape index: {}]
  %s6 = inlined_call_operand.vmem [shape: f32[8,32], index: 6, kind: input, shape index: {}]
  %s7 = inlined_call_operand.vmem [shape: f32[2,1], index: 7, kind: output, shape index: {0}]
  %s8 = inlined_call_operand.vmem [shape: f32[2,256], index: 8, kind: output, shape index: {1}]
  %9 = xla_tuple %s7, %s8
  %s10 = sld [smem:[#allocation0]]
  $region50: #{lstm_model_forward.1} parent=0
    _
  %s12 = ssub.s32 1, %s10
  %s13 = scalar_select 0, %s12, %s10
  $region1: #{lstm_model_forward.1} parent=0
    #allocation2 [shape = 'u8[65536]{0}', space=vmem, size = 0x10000, scoped, tag = 'input window, operand 3, single buffered']
    #allocation3 [shape = 's32[1]{0}', space=sflag, size = 0x4, scoped, tag = 'scoped memory for lstm_model_forward.1']
    %14 = vsyncpa [#allocation3], 0
    // Predicated region
    $region2: #{lstm_model_forward.1} parent=1 // pred_check
      _
    $region3: #{lstm_model_forward.1} parent=1 // pred_check_branch
      %16 = sbr.rel (0) target = $region5
    $region4: #{lstm_model_forward.1} parent=1 // pred_region
      _
    $region5: #{lstm_model_forward.1} parent=1 // pred_fallthru
      _
    // Predicated region
    $region6: #{lstm_model_forward.1} parent=1 // pred_check
      _
    $region7: #{lstm_model_forward.1} parent=1 // pred_check_branch
      %18 = sbr.rel (0) target = $region9
    $region8: #{lstm_model_forward.1} parent=1 // pred_region
      _
    $region9: #{lstm_model_forward.1} parent=1 // pred_fallthru
      _
    // Predicated region
    $region10: #{lstm_model_forward.1} parent=1 // pred_check
      _
    $region11: #{lstm_model_forward.1} parent=1 // pred_check_branch
      %20 = sbr.rel (0) target = $region13
    $region12: #{lstm_model_forward.1} parent=1 // pred_region
      _
    $region13: #{lstm_model_forward.1} parent=1 // pred_fallthru
      _
    // Predicated region
    $region14: #{lstm_model_forward.1} parent=1 // pred_check
      _
    $region15: #{lstm_model_forward.1} parent=1 // pred_check_branch
      %22 = sbr.rel (0) target = $region17
    $region16: #{lstm_model_forward.1} parent=1 // pred_region
      %24 = vsyncadd [#allocation3], 0
      %s25 = sshll.u32 %s3, 4
      %s26 = int_to_ptr.hbm [resolvable:$true] %s25
      %s27 = sshll.u32 [#allocation2], 4
      %s28 = int_to_ptr.vmem [resolvable:$true] %s27
      %33 = dma.hbm_to_vmem [thread:$0]  %s26, 2048, %s28, [#allocation3], 128, 128, 8
    $region17: #{lstm_model_forward.1} parent=1 // pred_fallthru
      _
    // Predicated region
    $region18: #{lstm_model_forward.1} parent=1 // pred_check
      _
    $region19: #{lstm_model_forward.1} parent=1 // pred_check_branch
      %35 = sbr.rel (0) target = $region21
    $region20: #{lstm_model_forward.1} parent=1 // pred_region
      _
    $region21: #{lstm_model_forward.1} parent=1 // pred_fallthru
      _
    // Predicated region
    $region22: #{lstm_model_forward.1} parent=1 // pred_check
      _
    $region23: #{lstm_model_forward.1} parent=1 // pred_check_branch
      %37 = sbr.rel (0) target = $region25
    $region24: #{lstm_model_forward.1} parent=1 // pred_region
      _
    $region25: #{lstm_model_forward.1} parent=1 // pred_fallthru
      _
    // Predicated region
    $region26: #{lstm_model_forward.1} parent=1 // pred_check
      _
    $region27: #{lstm_model_forward.1} parent=1 // pred_check_branch
      %39 = sbr.rel (0) target = $region29
    $region28: #{lstm_model_forward.1} parent=1 // pred_region
      _
    $region29: #{lstm_model_forward.1} parent=1 // pred_fallthru
      _
    // Predicated region
    $region30: #{lstm_model_forward.1} parent=1 // pred_check
      _
    $region31: #{lstm_model_forward.1} parent=1 // pred_check_branch
      %41 = sbr.rel (0) target = $region33
    $region32: #{lstm_model_forward.1} parent=1 // pred_region
      %43 = dma.done [#allocation3], 2048
    $region33: #{lstm_model_forward.1} parent=1 // pred_fallthru
      _
    %v44 = vld [vmem:[%s0] sm:$0x3]
    %v45 = vld [vmem:[%s0 + $0x2] sm:$0x3]
    %v46 = vld [vmem:[%s0 + $0x4] sm:$0x3]
    %v47 = vld [vmem:[%s0 + $0x6] sm:$0x3]
    %v48 = vld [vmem:[%s0 + $0x8] sm:$0x3]
    %v49 = vld [vmem:[%s0 + $0xa] sm:$0x3]
    %v50 = vld [vmem:[%s0 + $0xc] sm:$0x3]
    %v51 = vld [vmem:[%s0 + $0xe] sm:$0x3]
    %v52 = vld [vmem:[%s1] sm:$0xf]
    %v53 = vld [vmem:[%s1 + $0x4] sm:$0xf]
    %v54 = vld [vmem:[%s2] sm:$0xff]
    %v55 = vld [vmem:[%s2 + $0x8] sm:$0xff]
    %v56 = vld [vmem:[%s2 + $0x10] sm:$0xff]
    %v57 = vld [vmem:[%s2 + $0x18] sm:$0xff]
    %v58 = vld [vmem:[%s2 + $0x20] sm:$0xff]
    %v59 = vld [vmem:[%s2 + $0x28] sm:$0xff]
    %v60 = vld [vmem:[%s2 + $0x30] sm:$0xff]
    %v61 = vld [vmem:[%s2 + $0x38] sm:$0xff]
    %v62 = vld [vmem:[%s2 + $0x40] sm:$0xff]
    %v63 = vld [vmem:[%s2 + $0x48] sm:$0xff]
    %v64 = vld [vmem:[%s2 + $0x50] sm:$0xff]
    %v65 = vld [vmem:[%s2 + $0x58] sm:$0xff]
    %v66 = vld [vmem:[%s2 + $0x60] sm:$0xff]
    %v67 = vld [vmem:[%s2 + $0x68] sm:$0xff]
    %v68 = vld [vmem:[%s2 + $0x70] sm:$0xff]
    %v69 = vld [vmem:[%s2 + $0x78] sm:$0xff]
    %v70 = vld [vmem:[#allocation2] sm:$0xff]
    %v71 = vld [vmem:[#allocation2 + $0x8] sm:$0xff]
    %v72 = vld [vmem:[#allocation2 + $0x10] sm:$0xff]
    %v73 = vld [vmem:[#allocation2 + $0x18] sm:$0xff]
    %v74 = vld [vmem:[#allocation2 + $0x20] sm:$0xff]
    %v75 = vld [vmem:[#allocation2 + $0x28] sm:$0xff]
    %v76 = vld [vmem:[#allocation2 + $0x30] sm:$0xff]
    %v77 = vld [vmem:[#allocation2 + $0x38] sm:$0xff]
    %v78 = vld [vmem:[#allocation2 + $0x40] sm:$0xff]
    %v79 = vld [vmem:[#allocation2 + $0x48] sm:$0xff]
    %v80 = vld [vmem:[#allocation2 + $0x50] sm:$0xff]
    %v81 = vld [vmem:[#allocation2 + $0x58] sm:$0xff]
    %v82 = vld [vmem:[#allocation2 + $0x60] sm:$0xff]
    %v83 = vld [vmem:[#allocation2 + $0x68] sm:$0xff]
    %v84 = vld [vmem:[#allocation2 + $0x70] sm:$0xff]
    %v85 = vld [vmem:[#allocation2 + $0x78] sm:$0xff]
    %v86 = vld [vmem:[%s4] sm:$0x1]
    %v87 = vld [vmem:[%s4 + $0x1] sm:$0x1]
    %v88 = vld [vmem:[%s4 + $0x2] sm:$0x1]
    %v89 = vld [vmem:[%s4 + $0x3] sm:$0x1]
    %v91 = vperm.slane %v86, 0
    %100 = vst [vmem:[#allocation1] ss:$4 sm:$0xff] %v44
    %s101 = scalar_lea.vmem [#allocation1], 1
    %102 = vst [vmem:[%s101] ss:$4 sm:$0xff] %v45
    %s103 = scalar_lea.vmem [#allocation1], 2
    %104 = vst [vmem:[%s103] ss:$4 sm:$0xff] %v46
    %s105 = scalar_lea.vmem [#allocation1], 3
    %106 = vst [vmem:[%s105] ss:$4 sm:$0xff] %v47
    %s107 = scalar_lea.vmem [#allocation1], 32
    %108 = vst [vmem:[%s107] ss:$4 sm:$0xff] %v48
    %s109 = scalar_lea.vmem [#allocation1], 33
    %110 = vst [vmem:[%s109] ss:$4 sm:$0xff] %v49
    %s111 = scalar_lea.vmem [#allocation1], 34
    %112 = vst [vmem:[%s111] ss:$4 sm:$0xff] %v50
    %s113 = scalar_lea.vmem [#allocation1], 35
    %114 = vst [vmem:[%s113] ss:$4 sm:$0xff] %v51
    %v115 = vld.sshfl [vmem:[#allocation1] sm:$0xff pattern:$0x73625140]
    %v116 = vld.sshfl [vmem:[#allocation1 + $0x20] sm:$0xff pattern:$0x73625140]
    %117 = vst [vmem:[#allocation1] ss:$4 sm:$0xff] %v91
    %s118 = scalar_lea.vmem [#allocation1], 1
    %119 = vst [vmem:[%s118] ss:$4 sm:$0xff] %v91
    %s120 = scalar_lea.vmem [#allocation1], 2
    %121 = vst [vmem:[%s120] ss:$4 sm:$0xff] %v91
    %s122 = scalar_lea.vmem [#allocation1], 3
    %123 = vst [vmem:[%s122] ss:$4 sm:$0xff] %v91
    %s124 = scalar_lea.vmem [#allocation1], 32
    %125 = vst [vmem:[%s124] ss:$4 sm:$0xff] %v91
    %s126 = scalar_lea.vmem [#allocation1], 33
    %127 = vst [vmem:[%s126] ss:$4 sm:$0xff] %v91
    %s128 = scalar_lea.vmem [#allocation1], 34
    %129 = vst [vmem:[%s128] ss:$4 sm:$0xff] %v91
    %s130 = scalar_lea.vmem [#allocation1], 35
    %131 = vst [vmem:[%s130] ss:$4 sm:$0xff] %v91
    %v132 = vld.sshfl [vmem:[#allocation1] sm:$0xff pattern:$0x73625140]
    %v133 = vld.sshfl [vmem:[#allocation1 + $0x20] sm:$0xff pattern:$0x73625140]
    %vm136 = vcmask 31744
    %v137 = vsel %vm136, %v115, 0
    %v139 = vsel %vm136, %v116, 0
    %vm141 = vcmask 1043456
    %v143 = vsel %vm141, %v52, 0
    %145 = vmatpush.msra.mxu0 0.0
    %146 = vmatpush.msra.mxu0 0.0
    %147 = vmatpush.msra.mxu0 0.0
    %148 = vmatpush.msra.mxu0 0.0
    %149 = vmatpush.msra.mxu0 0.0
    %150 = vmatpush.msra.mxu0 0.0
    %151 = vmatpush.msra.mxu0 0.0
    %152 = vmatpush.msra.mxu0 0.0
    %153 = vmatpush.msra.mxu0 0.0
    %154 = vmatpush.msra.mxu0 0.0
    %155 = vmatpush.msra.mxu0 0.0
    %156 = vmatpush.msra.mxu0 0.0
    %157 = vmatpush.msra.mxu0 0.0
    %158 = vmatpush.msra.mxu0 0.0
    %159 = vmatpush.msra.mxu0 0.0
    %160 = vmatpush.msra.mxu0 %v143
    %161 = vmatmul.f32.gmra.mxu0 %v137
    %v162 = vpop.f32.mrf.mxu0
    %v163 = vadd.f32 %v132, %v162
    %164 = vmatmul.f32.gmra.mxu0 %v139
    %v165 = vpop.f32.mrf.mxu0
    %v166 = vadd.f32 %v133, %v165
    %167 = vdwg.mxu0
    %v170 = vrot.slane %v163, 2
    %v171 = vrot.slane %v163, 4
    %v172 = vrot.slane %v163, 6
    %v173 = vrot.slane %v166, 2
    %v174 = vrot.slane %v166, 4
    %v175 = vrot.slane %v166, 6
    %v183 = vperm.slane %v87, 0
    %184 = vst [vmem:[#allocation1] ss:$4 sm:$0xff] %v44
    %s185 = scalar_lea.vmem [#allocation1], 1
    %186 = vst [vmem:[%s185] ss:$4 sm:$0xff] %v45
    %s187 = scalar_lea.vmem [#allocation1], 2
    %188 = vst [vmem:[%s187] ss:$4 sm:$0xff] %v46
    %s189 = scalar_lea.vmem [#allocation1], 3
    %190 = vst [vmem:[%s189] ss:$4 sm:$0xff] %v47
    %s191 = scalar_lea.vmem [#allocation1], 32
    %192 = vst [vmem:[%s191] ss:$4 sm:$0xff] %v48
    %s193 = scalar_lea.vmem [#allocation1], 33
    %194 = vst [vmem:[%s193] ss:$4 sm:$0xff] %v49
    %s195 = scalar_lea.vmem [#allocation1], 34
    %196 = vst [vmem:[%s195] ss:$4 sm:$0xff] %v50
    %s197 = scalar_lea.vmem [#allocation1], 35
    %198 = vst [vmem:[%s197] ss:$4 sm:$0xff] %v51
    %v199 = vld.sshfl [vmem:[#allocation1] sm:$0xff pattern:$0x73625140]
    %v200 = vld.sshfl [vmem:[#allocation1 + $0x20] sm:$0xff pattern:$0x73625140]
    %201 = vst [vmem:[#allocation1] ss:$4 sm:$0xff] %v183
    %s202 = scalar_lea.vmem [#allocation1], 1
    %203 = vst [vmem:[%s202] ss:$4 sm:$0xff] %v183
    %s204 = scalar_lea.vmem [#allocation1], 2
    %205 = vst [vmem:[%s204] ss:$4 sm:$0xff] %v183
    %s206 = scalar_lea.vmem [#allocation1], 3
    %207 = vst [vmem:[%s206] ss:$4 sm:$0xff] %v183
    %s208 = scalar_lea.vmem [#allocation1], 32
    %209 = vst [vmem:[%s208] ss:$4 sm:$0xff] %v183
    %s210 = scalar_lea.vmem [#allocation1], 33
    %211 = vst [vmem:[%s210] ss:$4 sm:$0xff] %v183
    %s212 = scalar_lea.vmem [#allocation1], 34
    %213 = vst [vmem:[%s212] ss:$4 sm:$0xff] %v183
    %s214 = scalar_lea.vmem [#allocation1], 35
    %215 = vst [vmem:[%s214] ss:$4 sm:$0xff] %v183
    %v216 = vld.sshfl [vmem:[#allocation1] sm:$0xff pattern:$0x73625140]
    %v217 = vld.sshfl [vmem:[#allocation1 + $0x20] sm:$0xff pattern:$0x73625140]
    %v220 = vsel %vm136, %v199, 0
    %v222 = vsel %vm136, %v200, 0
    %v225 = vsel %vm141, %v53, 0
    %227 = vmatpush.msra.mxu0 0.0
    %228 = vmatpush.msra.mxu0 0.0
    %229 = vmatpush.msra.mxu0 0.0
    %230 = vmatpush.msra.mxu0 0.0
    %231 = vmatpush.msra.mxu0 0.0
    %232 = vmatpush.msra.mxu0 0.0
    %233 = vmatpush.msra.mxu0 0.0
    %234 = vmatpush.msra.mxu0 0.0
    %235 = vmatpush.msra.mxu0 0.0
    %236 = vmatpush.msra.mxu0 0.0
    %237 = vmatpush.msra.mxu0 0.0
    %238 = vmatpush.msra.mxu0 0.0
    %239 = vmatpush.msra.mxu0 0.0
    %240 = vmatpush.msra.mxu0 0.0
    %241 = vmatpush.msra.mxu0 0.0
    %242 = vmatpush.msra.mxu0 %v225
    %243 = vmatmul.f32.gmra.mxu0 %v220
    %v244 = vpop.f32.mrf.mxu0
    %v245 = vadd.f32 %v216, %v244
    %246 = vmatmul.f32.gmra.mxu0 %v222
    %v247 = vpop.f32.mrf.mxu0
    %v248 = vadd.f32 %v217, %v247
    %249 = vdwg.mxu0
    %v252 = vrot.slane %v245, 2
    %v253 = vrot.slane %v245, 4
    %v254 = vrot.slane %v245, 6
    %v255 = vrot.slane %v248, 2
    %v256 = vrot.slane %v248, 4
    %v257 = vrot.slane %v248, 6
    %vm264 = vcmask 261120
    %v266 = vsel %vm264, 0.0, 0
    %268 = vmatpush.msra.mxu0 0.0
    %269 = vmatpush.msra.mxu0 0.0
    %270 = vmatpush.msra.mxu0 0.0
    %271 = vmatpush.msra.mxu0 0.0
    %272 = vmatpush.msra.mxu0 0.0
    %273 = vmatpush.msra.mxu0 0.0
    %274 = vmatpush.msra.mxu0 0.0
    %275 = vmatpush.msra.mxu0 0.0
    %276 = vmatpush.msra.mxu0 0.0
    %277 = vmatpush.msra.mxu0 0.0
    %278 = vmatpush.msra.mxu0 0.0
    %279 = vmatpush.msra.mxu0 0.0
    %280 = vmatpush.msra.mxu0 %v73
    %281 = vmatpush.msra.mxu0 %v72
    %282 = vmatpush.msra.mxu0 %v71
    %283 = vmatpush.msra.mxu0 %v70
    %284 = vmatmul.f32.gmra.mxu0 %v266
    %v285 = vpop.f32.mrf.mxu0
    %v286 = vadd.f32 0.0, %v285
    %287 = vdwg.mxu0
    %v288 = vadd.f32 %v163, %v286
    %v289 = vxor.u32 %v288, 2147483648
    %v290 = vmul.f32 %v289, 1.442695
    %v291 = vpow.pop %v290
    %v292 = vadd.f32 %v291, 1.0
    %v293 = vrcp.pop %v292
    %v294 = vmul.f32 %v292, %v293
    %v295 = vsub.f32 1.0, %v294
    %v296 = vmul.f32 %v293, %v295
    %v297 = vadd.f32 %v293, %v296
    %vm298 = vweird.f32 %v292
    %vm299 = vweird.f32 %v293
    %vm300 = vmor %vm298, %vm299
    %v301 = vsel %vm300, %v293, %v297
    %v302 = vand.u32 2147483647, %v292
    %vm303 = vcmp.eq.f32.partialorder %v302, 8.507059e+37
    %v304 = vand.u32 %v292, 2147483648
    %v305 = vor.u32 1.1754944e-38, %v304
    %v306 = vsel %vm303, %v305, %v301
    %v307 = vmul.f32 1.0, %v306
    %v308 = vmul.f32 %v307, 2.0
    %v309 = vsub.f32 %v308, 1.0
    %v310 = vmul.f32 %v307, 0.0
    %312 = vrot.lane.b32.xlu0 %v309, 64
    %v313 = vpop.permute.xlu0 %312
    %v315 = vmul.f32 %v307, %v313
    %317 = vrot.lane.b32.xlu0 %v315, 32
    %v318 = vpop.permute.xlu0 %317
    %v320 = vadd.f32 %v310, %v318
    %v321 = vtanh.pop %v320
    %323 = vrot.lane.b32.xlu0 %v321, 64
    %v324 = vpop.permute.xlu0 %323
    %v326 = vmul.f32 %v307, %v324
    %327 = vmatpush.msra.mxu0 0.0
    %328 = vmatpush.msra.mxu0 0.0
    %329 = vmatpush.msra.mxu0 0.0
    %330 = vmatpush.msra.mxu0 0.0
    %331 = vmatpush.msra.mxu0 0.0
    %332 = vmatpush.msra.mxu0 0.0
    %333 = vmatpush.msra.mxu0 0.0
    %334 = vmatpush.msra.mxu0 0.0
    %335 = vmatpush.msra.mxu0 0.0
    %336 = vmatpush.msra.mxu0 0.0
    %337 = vmatpush.msra.mxu0 0.0
    %338 = vmatpush.msra.mxu0 0.0
    %339 = vmatpush.msra.mxu0 %v77
    %340 = vmatpush.msra.mxu0 %v76
    %341 = vmatpush.msra.mxu0 %v75
    %342 = vmatpush.msra.mxu0 %v74
    %343 = vmatmul.f32.gmra.mxu0 %v266
    %v344 = vpop.f32.mrf.mxu0
    %v345 = vadd.f32 0.0, %v344
    %346 = vdwg.mxu0
    %v347 = vadd.f32 %v257, %v345
    %v348 = vxor.u32 %v347, 2147483648
    %v349 = vmul.f32 %v348, 1.442695
    %v350 = vpow.pop %v349
    %v351 = vadd.f32 %v350, 1.0
    %v352 = vrcp.pop %v351
    %v353 = vmul.f32 %v351, %v352
    %v354 = vsub.f32 1.0, %v353
    %v355 = vmul.f32 %v352, %v354
    %v356 = vadd.f32 %v352, %v355
    %vm357 = vweird.f32 %v351
    %vm358 = vweird.f32 %v352
    %vm359 = vmor %vm357, %vm358
    %v360 = vsel %vm359, %v352, %v356
    %v361 = vand.u32 2147483647, %v351
    %vm362 = vcmp.eq.f32.partialorder %v361, 8.507059e+37
    %v363 = vand.u32 %v351, 2147483648
    %v364 = vor.u32 1.1754944e-38, %v363
    %v365 = vsel %vm362, %v364, %v360
    %v366 = vmul.f32 1.0, %v365
    %v367 = vmul.f32 %v366, 2.0
    %v368 = vsub.f32 %v367, 1.0
    %v369 = vmul.f32 %v366, 0.0
    %371 = vrot.lane.b32.xlu0 %v368, 64
    %v372 = vpop.permute.xlu0 %371
    %v374 = vmul.f32 %v366, %v372
    %376 = vrot.lane.b32.xlu0 %v374, 32
    %v377 = vpop.permute.xlu0 %376
    %v379 = vadd.f32 %v369, %v377
    %v380 = vtanh.pop %v379
    %382 = vrot.lane.b32.xlu0 %v380, 64
    %v383 = vpop.permute.xlu0 %382
    %v385 = vmul.f32 %v366, %v383
    %387 = vst [vmem:[#allocation1] ss:$4 sm:$0xff] %v326
    %v388 = vld.sshfl [vmem:[#allocation1] sm:$0xff pattern:$0x73625140]
    %389 = vrot.lane.b32.xlu0 %v388, 32
    %v390 = vpop.permute.xlu0 %389
    %v391 = vsel %vm264, %v390, 0
    %393 = vmatpush.msra.mxu0 0.0
    %394 = vmatpush.msra.mxu0 0.0
    %395 = vmatpush.msra.mxu0 0.0
    %396 = vmatpush.msra.mxu0 0.0
    %397 = vmatpush.msra.mxu0 0.0
    %398 = vmatpush.msra.mxu0 0.0
    %399 = vmatpush.msra.mxu0 0.0
    %400 = vmatpush.msra.mxu0 0.0
    %401 = vmatpush.msra.mxu0 0.0
    %402 = vmatpush.msra.mxu0 0.0
    %403 = vmatpush.msra.mxu0 0.0
    %404 = vmatpush.msra.mxu0 0.0
    %405 = vmatpush.msra.mxu0 %v73
    %406 = vmatpush.msra.mxu0 %v72
    %407 = vmatpush.msra.mxu0 %v71
    %408 = vmatpush.msra.mxu0 %v70
    %409 = vmatmul.f32.gmra.mxu0 %v391
    %v410 = vpop.f32.mrf.mxu0
    %v411 = vadd.f32 0.0, %v410
    %412 = vdwg.mxu0
    %v413 = vadd.f32 %v170, %v411
    %v414 = vxor.u32 %v413, 2147483648
    %v415 = vmul.f32 %v414, 1.442695
    %v416 = vpow.pop %v415
    %v417 = vadd.f32 %v416, 1.0
    %v418 = vrcp.pop %v417
    %v419 = vmul.f32 %v417, %v418
    %v420 = vsub.f32 1.0, %v419
    %v421 = vmul.f32 %v418, %v420
    %v422 = vadd.f32 %v418, %v421
    %vm423 = vweird.f32 %v417
    %vm424 = vweird.f32 %v418
    %vm425 = vmor %vm423, %vm424
    %v426 = vsel %vm425, %v418, %v422
    %v427 = vand.u32 2147483647, %v417
    %vm428 = vcmp.eq.f32.partialorder %v427, 8.507059e+37
    %v429 = vand.u32 %v417, 2147483648
    %v430 = vor.u32 1.1754944e-38, %v429
    %v431 = vsel %vm428, %v430, %v426
    %v432 = vmul.f32 1.0, %v431
    %v433 = vmul.f32 %v432, 2.0
    %v434 = vsub.f32 %v433, 1.0
    %v435 = vmul.f32 %v432, %v320
    %437 = vrot.lane.b32.xlu0 %v434, 64
    %v438 = vpop.permute.xlu0 %437
    %v440 = vmul.f32 %v432, %v438
    %442 = vrot.lane.b32.xlu0 %v440, 32
    %v443 = vpop.permute.xlu0 %442
    %v445 = vadd.f32 %v435, %v443
    %v446 = vtanh.pop %v445
    %448 = vrot.lane.b32.xlu0 %v446, 64
    %v449 = vpop.permute.xlu0 %448
    %v451 = vmul.f32 %v432, %v449
    %453 = vst [vmem:[#allocation1] ss:$4 sm:$0xff] %v385
    %v454 = vld.sshfl [vmem:[#allocation1] sm:$0xff pattern:$0x73625140]
    %455 = vrot.lane.b32.xlu0 %v454, 32
    %v456 = vpop.permute.xlu0 %455
    %v457 = vsel %vm264, %v456, 0
    %459 = vmatpush.msra.mxu0 0.0
    %460 = vmatpush.msra.mxu0 0.0
    %461 = vmatpush.msra.mxu0 0.0
    %462 = vmatpush.msra.mxu0 0.0
    %463 = vmatpush.msra.mxu0 0.0
    %464 = vmatpush.msra.mxu0 0.0
    %465 = vmatpush.msra.mxu0 0.0
    %466 = vmatpush.msra.mxu0 0.0
    %467 = vmatpush.msra.mxu0 0.0
    %468 = vmatpush.msra.mxu0 0.0
    %469 = vmatpush.msra.mxu0 0.0
    %470 = vmatpush.msra.mxu0 0.0
    %471 = vmatpush.msra.mxu0 %v77
    %472 = vmatpush.msra.mxu0 %v76
    %473 = vmatpush.msra.mxu0 %v75
    %474 = vmatpush.msra.mxu0 %v74
    %475 = vmatmul.f32.gmra.mxu0 %v457
    %v476 = vpop.f32.mrf.mxu0
    %v477 = vadd.f32 0.0, %v476
    %478 = vdwg.mxu0
    %v479 = vadd.f32 %v256, %v477
    %v480 = vxor.u32 %v479, 2147483648
    %v481 = vmul.f32 %v480, 1.442695
    %v482 = vpow.pop %v481
    %v483 = vadd.f32 %v482, 1.0
    %v484 = vrcp.pop %v483
    %v485 = vmul.f32 %v483, %v484
    %v486 = vsub.f32 1.0, %v485
    %v487 = vmul.f32 %v484, %v486
    %v488 = vadd.f32 %v484, %v487
    %vm489 = vweird.f32 %v483
    %vm490 = vweird.f32 %v484
    %vm491 = vmor %vm489, %vm490
    %v492 = vsel %vm491, %v484, %v488
    %v493 = vand.u32 2147483647, %v483
    %vm494 = vcmp.eq.f32.partialorder %v493, 8.507059e+37
    %v495 = vand.u32 %v483, 2147483648
    %v496 = vor.u32 1.1754944e-38, %v495
    %v497 = vsel %vm494, %v496, %v492
    %v498 = vmul.f32 1.0, %v497
    %v499 = vmul.f32 %v498, 2.0
    %v500 = vsub.f32 %v499, 1.0
    %v501 = vmul.f32 %v498, %v379
    %503 = vrot.lane.b32.xlu0 %v500, 64
    %v504 = vpop.permute.xlu0 %503
    %v506 = vmul.f32 %v498, %v504
    %508 = vrot.lane.b32.xlu0 %v506, 32
    %v509 = vpop.permute.xlu0 %508
    %v511 = vadd.f32 %v501, %v509
    %v512 = vtanh.pop %v511
    %514 = vrot.lane.b32.xlu0 %v512, 64
    %v515 = vpop.permute.xlu0 %514
    %v517 = vmul.f32 %v498, %v515
    %519 = vst [vmem:[#allocation1] ss:$4 sm:$0xff] %v451
    %v520 = vld.sshfl [vmem:[#allocation1] sm:$0xff pattern:$0x73625140]
    %521 = vrot.lane.b32.xlu0 %v520, 32
    %v522 = vpop.permute.xlu0 %521
    %v523 = vsel %vm264, %v522, 0
    %525 = vmatpush.msra.mxu0 0.0
    %526 = vmatpush.msra.mxu0 0.0
    %527 = vmatpush.msra.mxu0 0.0
    %528 = vmatpush.msra.mxu0 0.0
    %529 = vmatpush.msra.mxu0 0.0
    %530 = vmatpush.msra.mxu0 0.0
    %531 = vmatpush.msra.mxu0 0.0
    %532 = vmatpush.msra.mxu0 0.0
    %533 = vmatpush.msra.mxu0 0.0
    %534 = vmatpush.msra.mxu0 0.0
    %535 = vmatpush.msra.mxu0 0.0
    %536 = vmatpush.msra.mxu0 0.0
    %537 = vmatpush.msra.mxu0 %v73
    %538 = vmatpush.msra.mxu0 %v72
    %539 = vmatpush.msra.mxu0 %v71
    %540 = vmatpush.msra.mxu0 %v70
    %541 = vmatmul.f32.gmra.mxu0 %v523
    %v542 = vpop.f32.mrf.mxu0
    %v543 = vadd.f32 0.0, %v542
    %544 = vdwg.mxu0
    %v545 = vadd.f32 %v171, %v543
    %v546 = vxor.u32 %v545, 2147483648
    %v547 = vmul.f32 %v546, 1.442695
    %v548 = vpow.pop %v547
    %v549 = vadd.f32 %v548, 1.0
    %v550 = vrcp.pop %v549
    %v551 = vmul.f32 %v549, %v550
    %v552 = vsub.f32 1.0, %v551
    %v553 = vmul.f32 %v550, %v552
    %v554 = vadd.f32 %v550, %v553
    %vm555 = vweird.f32 %v549
    %vm556 = vweird.f32 %v550
    %vm557 = vmor %vm555, %vm556
    %v558 = vsel %vm557, %v550, %v554
    %v559 = vand.u32 2147483647, %v549
    %vm560 = vcmp.eq.f32.partialorder %v559, 8.507059e+37
    %v561 = vand.u32 %v549, 2147483648
    %v562 = vor.u32 1.1754944e-38, %v561
    %v563 = vsel %vm560, %v562, %v558
    %v564 = vmul.f32 1.0, %v563
    %v565 = vmul.f32 %v564, 2.0
    %v566 = vsub.f32 %v565, 1.0
    %v567 = vmul.f32 %v564, %v445
    %569 = vrot.lane.b32.xlu0 %v566, 64
    %v570 = vpop.permute.xlu0 %569
    %v572 = vmul.f32 %v564, %v570
    %574 = vrot.lane.b32.xlu0 %v572, 32
    %v575 = vpop.permute.xlu0 %574
    %v577 = vadd.f32 %v567, %v575
    %v578 = vtanh.pop %v577
    %580 = vrot.lane.b32.xlu0 %v578, 64
    %v581 = vpop.permute.xlu0 %580
    %v583 = vmul.f32 %v564, %v581
    %585 = vst [vmem:[#allocation1] ss:$4 sm:$0xff] %v517
    %v586 = vld.sshfl [vmem:[#allocation1] sm:$0xff pattern:$0x73625140]
    %587 = vrot.lane.b32.xlu0 %v586, 32
    %v588 = vpop.permute.xlu0 %587
    %v589 = vsel %vm264, %v588, 0
    %591 = vmatpush.msra.mxu0 0.0
    %592 = vmatpush.msra.mxu0 0.0
    %593 = vmatpush.msra.mxu0 0.0
    %594 = vmatpush.msra.mxu0 0.0
    %595 = vmatpush.msra.mxu0 0.0
    %596 = vmatpush.msra.mxu0 0.0
    %597 = vmatpush.msra.mxu0 0.0
    %598 = vmatpush.msra.mxu0 0.0
    %599 = vmatpush.msra.mxu0 0.0
    %600 = vmatpush.msra.mxu0 0.0
    %601 = vmatpush.msra.mxu0 0.0
    %602 = vmatpush.msra.mxu0 0.0
    %603 = vmatpush.msra.mxu0 %v77
    %604 = vmatpush.msra.mxu0 %v76
    %605 = vmatpush.msra.mxu0 %v75
    %606 = vmatpush.msra.mxu0 %v74
    %607 = vmatmul.f32.gmra.mxu0 %v589
    %v608 = vpop.f32.mrf.mxu0
    %v609 = vadd.f32 0.0, %v608
    %610 = vdwg.mxu0
    %v611 = vadd.f32 %v255, %v609
    %v612 = vxor.u32 %v611, 2147483648
    %v613 = vmul.f32 %v612, 1.442695
    %v614 = vpow.pop %v613
    %v615 = vadd.f32 %v614, 1.0
    %v616 = vrcp.pop %v615
    %v617 = vmul.f32 %v615, %v616
    %v618 = vsub.f32 1.0, %v617
    %v619 = vmul.f32 %v616, %v618
    %v620 = vadd.f32 %v616, %v619
    %vm621 = vweird.f32 %v615
    %vm622 = vweird.f32 %v616
    %vm623 = vmor %vm621, %vm622
    %v624 = vsel %vm623, %v616, %v620
    %v625 = vand.u32 2147483647, %v615
    %vm626 = vcmp.eq.f32.partialorder %v625, 8.507059e+37
    %v627 = vand.u32 %v615, 2147483648
    %v628 = vor.u32 1.1754944e-38, %v627
    %v629 = vsel %vm626, %v628, %v624
    %v630 = vmul.f32 1.0, %v629
    %v631 = vmul.f32 %v630, 2.0
    %v632 = vsub.f32 %v631, 1.0
    %v633 = vmul.f32 %v630, %v511
    %635 = vrot.lane.b32.xlu0 %v632, 64
    %v636 = vpop.permute.xlu0 %635
    %v638 = vmul.f32 %v630, %v636
    %640 = vrot.lane.b32.xlu0 %v638, 32
    %v641 = vpop.permute.xlu0 %640
    %v643 = vadd.f32 %v633, %v641
    %v644 = vtanh.pop %v643
    %646 = vrot.lane.b32.xlu0 %v644, 64
    %v647 = vpop.permute.xlu0 %646
    %v649 = vmul.f32 %v630, %v647
    %651 = vst [vmem:[#allocation1] ss:$4 sm:$0xff] %v583
    %v652 = vld.sshfl [vmem:[#allocation1] sm:$0xff pattern:$0x73625140]
    %653 = vrot.lane.b32.xlu0 %v652, 32
    %v654 = vpop.permute.xlu0 %653
    %v655 = vsel %vm264, %v654, 0
    %657 = vmatpush.msra.mxu0 0.0
    %658 = vmatpush.msra.mxu0 0.0
    %659 = vmatpush.msra.mxu0 0.0
    %660 = vmatpush.msra.mxu0 0.0
    %661 = vmatpush.msra.mxu0 0.0
    %662 = vmatpush.msra.mxu0 0.0
    %663 = vmatpush.msra.mxu0 0.0
    %664 = vmatpush.msra.mxu0 0.0
    %665 = vmatpush.msra.mxu0 0.0
    %666 = vmatpush.msra.mxu0 0.0
    %667 = vmatpush.msra.mxu0 0.0
    %668 = vmatpush.msra.mxu0 0.0
    %669 = vmatpush.msra.mxu0 %v73
    %670 = vmatpush.msra.mxu0 %v72
    %671 = vmatpush.msra.mxu0 %v71
    %672 = vmatpush.msra.mxu0 %v70
    %673 = vmatmul.f32.gmra.mxu0 %v655
    %v674 = vpop.f32.mrf.mxu0
    %v675 = vadd.f32 0.0, %v674
    %676 = vdwg.mxu0
    %v677 = vadd.f32 %v172, %v675
    %v678 = vxor.u32 %v677, 2147483648
    %v679 = vmul.f32 %v678, 1.442695
    %v680 = vpow.pop %v679
    %v681 = vadd.f32 %v680, 1.0
    %v682 = vrcp.pop %v681
    %v683 = vmul.f32 %v681, %v682
    %v684 = vsub.f32 1.0, %v683
    %v685 = vmul.f32 %v682, %v684
    %v686 = vadd.f32 %v682, %v685
    %vm687 = vweird.f32 %v681
    %vm688 = vweird.f32 %v682
    %vm689 = vmor %vm687, %vm688
    %v690 = vsel %vm689, %v682, %v686
    %v691 = vand.u32 2147483647, %v681
    %vm692 = vcmp.eq.f32.partialorder %v691, 8.507059e+37
    %v693 = vand.u32 %v681, 2147483648
    %v694 = vor.u32 1.1754944e-38, %v693
    %v695 = vsel %vm692, %v694, %v690
    %v696 = vmul.f32 1.0, %v695
    %v697 = vmul.f32 %v696, 2.0
    %v698 = vsub.f32 %v697, 1.0
    %v699 = vmul.f32 %v696, %v577
    %701 = vrot.lane.b32.xlu0 %v698, 64
    %v702 = vpop.permute.xlu0 %701
    %v704 = vmul.f32 %v696, %v702
    %706 = vrot.lane.b32.xlu0 %v704, 32
    %v707 = vpop.permute.xlu0 %706
    %v709 = vadd.f32 %v699, %v707
    %v710 = vtanh.pop %v709
    %712 = vrot.lane.b32.xlu0 %v710, 64
    %v713 = vpop.permute.xlu0 %712
    %v715 = vmul.f32 %v696, %v713
    %717 = vst [vmem:[#allocation1] ss:$4 sm:$0xff] %v649
    %v718 = vld.sshfl [vmem:[#allocation1] sm:$0xff pattern:$0x73625140]
    %719 = vrot.lane.b32.xlu0 %v718, 32
    %v720 = vpop.permute.xlu0 %719
    %v721 = vsel %vm264, %v720, 0
    %723 = vmatpush.msra.mxu0 0.0
    %724 = vmatpush.msra.mxu0 0.0
    %725 = vmatpush.msra.mxu0 0.0
    %726 = vmatpush.msra.mxu0 0.0
    %727 = vmatpush.msra.mxu0 0.0
    %728 = vmatpush.msra.mxu0 0.0
    %729 = vmatpush.msra.mxu0 0.0
    %730 = vmatpush.msra.mxu0 0.0
    %731 = vmatpush.msra.mxu0 0.0
    %732 = vmatpush.msra.mxu0 0.0
    %733 = vmatpush.msra.mxu0 0.0
    %734 = vmatpush.msra.mxu0 0.0
    %735 = vmatpush.msra.mxu0 %v77
    %736 = vmatpush.msra.mxu0 %v76
    %737 = vmatpush.msra.mxu0 %v75
    %738 = vmatpush.msra.mxu0 %v74
    %739 = vmatmul.f32.gmra.mxu0 %v721
    %v740 = vpop.f32.mrf.mxu0
    %v741 = vadd.f32 0.0, %v740
    %742 = vdwg.mxu0
    %v743 = vadd.f32 %v248, %v741
    %v744 = vxor.u32 %v743, 2147483648
    %v745 = vmul.f32 %v744, 1.442695
    %v746 = vpow.pop %v745
    %v747 = vadd.f32 %v746, 1.0
    %v748 = vrcp.pop %v747
    %v749 = vmul.f32 %v747, %v748
    %v750 = vsub.f32 1.0, %v749
    %v751 = vmul.f32 %v748, %v750
    %v752 = vadd.f32 %v748, %v751
    %vm753 = vweird.f32 %v747
    %vm754 = vweird.f32 %v748
    %vm755 = vmor %vm753, %vm754
    %v756 = vsel %vm755, %v748, %v752
    %v757 = vand.u32 2147483647, %v747
    %vm758 = vcmp.eq.f32.partialorder %v757, 8.507059e+37
    %v759 = vand.u32 %v747, 2147483648
    %v760 = vor.u32 1.1754944e-38, %v759
    %v761 = vsel %vm758, %v760, %v756
    %v762 = vmul.f32 1.0, %v761
    %v763 = vmul.f32 %v762, 2.0
    %v764 = vsub.f32 %v763, 1.0
    %v765 = vmul.f32 %v762, %v643
    %767 = vrot.lane.b32.xlu0 %v764, 64
    %v768 = vpop.permute.xlu0 %767
    %v770 = vmul.f32 %v762, %v768
    %772 = vrot.lane.b32.xlu0 %v770, 32
    %v773 = vpop.permute.xlu0 %772
    %v775 = vadd.f32 %v765, %v773
    %v776 = vtanh.pop %v775
    %778 = vrot.lane.b32.xlu0 %v776, 64
    %v779 = vpop.permute.xlu0 %778
    %v781 = vmul.f32 %v762, %v779
    %783 = vst [vmem:[#allocation1] ss:$4 sm:$0xff] %v715
    %v784 = vld.sshfl [vmem:[#allocation1] sm:$0xff pattern:$0x73625140]
    %785 = vrot.lane.b32.xlu0 %v784, 32
    %v786 = vpop.permute.xlu0 %785
    %v787 = vsel %vm264, %v786, 0
    %789 = vmatpush.msra.mxu0 0.0
    %790 = vmatpush.msra.mxu0 0.0
    %791 = vmatpush.msra.mxu0 0.0
    %792 = vmatpush.msra.mxu0 0.0
    %793 = vmatpush.msra.mxu0 0.0
    %794 = vmatpush.msra.mxu0 0.0
    %795 = vmatpush.msra.mxu0 0.0
    %796 = vmatpush.msra.mxu0 0.0
    %797 = vmatpush.msra.mxu0 0.0
    %798 = vmatpush.msra.mxu0 0.0
    %799 = vmatpush.msra.mxu0 0.0
    %800 = vmatpush.msra.mxu0 0.0
    %801 = vmatpush.msra.mxu0 %v73
    %802 = vmatpush.msra.mxu0 %v72
    %803 = vmatpush.msra.mxu0 %v71
    %804 = vmatpush.msra.mxu0 %v70
    %805 = vmatmul.f32.gmra.mxu0 %v787
    %v806 = vpop.f32.mrf.mxu0
    %v807 = vadd.f32 0.0, %v806
    %808 = vdwg.mxu0
    %v809 = vadd.f32 %v166, %v807
    %v810 = vxor.u32 %v809, 2147483648
    %v811 = vmul.f32 %v810, 1.442695
    %v812 = vpow.pop %v811
    %v813 = vadd.f32 %v812, 1.0
    %v814 = vrcp.pop %v813
    %v815 = vmul.f32 %v813, %v814
    %v816 = vsub.f32 1.0, %v815
    %v817 = vmul.f32 %v814, %v816
    %v818 = vadd.f32 %v814, %v817
    %vm819 = vweird.f32 %v813
    %vm820 = vweird.f32 %v814
    %vm821 = vmor %vm819, %vm820
    %v822 = vsel %vm821, %v814, %v818
    %v823 = vand.u32 2147483647, %v813
    %vm824 = vcmp.eq.f32.partialorder %v823, 8.507059e+37
    %v825 = vand.u32 %v813, 2147483648
    %v826 = vor.u32 1.1754944e-38, %v825
    %v827 = vsel %vm824, %v826, %v822
    %v828 = vmul.f32 1.0, %v827
    %v829 = vmul.f32 %v828, 2.0
    %v830 = vsub.f32 %v829, 1.0
    %v831 = vmul.f32 %v828, %v709
    %833 = vrot.lane.b32.xlu0 %v830, 64
    %v834 = vpop.permute.xlu0 %833
    %v836 = vmul.f32 %v828, %v834
    %838 = vrot.lane.b32.xlu0 %v836, 32
    %v839 = vpop.permute.xlu0 %838
    %v841 = vadd.f32 %v831, %v839
    %v842 = vtanh.pop %v841
    %844 = vrot.lane.b32.xlu0 %v842, 64
    %v845 = vpop.permute.xlu0 %844
    %v847 = vmul.f32 %v828, %v845
    %849 = vst [vmem:[#allocation1] ss:$4 sm:$0xff] %v781
    %v850 = vld.sshfl [vmem:[#allocation1] sm:$0xff pattern:$0x73625140]
    %851 = vrot.lane.b32.xlu0 %v850, 32
    %v852 = vpop.permute.xlu0 %851
    %v853 = vsel %vm264, %v852, 0
    %855 = vmatpush.msra.mxu0 0.0
    %856 = vmatpush.msra.mxu0 0.0
    %857 = vmatpush.msra.mxu0 0.0
    %858 = vmatpush.msra.mxu0 0.0
    %859 = vmatpush.msra.mxu0 0.0
    %860 = vmatpush.msra.mxu0 0.0
    %861 = vmatpush.msra.mxu0 0.0
    %862 = vmatpush.msra.mxu0 0.0
    %863 = vmatpush.msra.mxu0 0.0
    %864 = vmatpush.msra.mxu0 0.0
    %865 = vmatpush.msra.mxu0 0.0
    %866 = vmatpush.msra.mxu0 0.0
    %867 = vmatpush.msra.mxu0 %v77
    %868 = vmatpush.msra.mxu0 %v76
    %869 = vmatpush.msra.mxu0 %v75
    %870 = vmatpush.msra.mxu0 %v74
    %871 = vmatmul.f32.gmra.mxu0 %v853
    %v872 = vpop.f32.mrf.mxu0
    %v873 = vadd.f32 0.0, %v872
    %874 = vdwg.mxu0
    %v875 = vadd.f32 %v254, %v873
    %v876 = vxor.u32 %v875, 2147483648
    %v877 = vmul.f32 %v876, 1.442695
    %v878 = vpow.pop %v877
    %v879 = vadd.f32 %v878, 1.0
    %v880 = vrcp.pop %v879
    %v881 = vmul.f32 %v879, %v880
    %v882 = vsub.f32 1.0, %v881
    %v883 = vmul.f32 %v880, %v882
    %v884 = vadd.f32 %v880, %v883
    %vm885 = vweird.f32 %v879
    %vm886 = vweird.f32 %v880
    %vm887 = vmor %vm885, %vm886
    %v888 = vsel %vm887, %v880, %v884
    %v889 = vand.u32 2147483647, %v879
    %vm890 = vcmp.eq.f32.partialorder %v889, 8.507059e+37
    %v891 = vand.u32 %v879, 2147483648
    %v892 = vor.u32 1.1754944e-38, %v891
    %v893 = vsel %vm890, %v892, %v888
    %v894 = vmul.f32 1.0, %v893
    %v895 = vmul.f32 %v894, 2.0
    %v896 = vsub.f32 %v895, 1.0
    %v897 = vmul.f32 %v894, %v775
    %899 = vrot.lane.b32.xlu0 %v896, 64
    %v900 = vpop.permute.xlu0 %899
    %v902 = vmul.f32 %v894, %v900
    %904 = vrot.lane.b32.xlu0 %v902, 32
    %v905 = vpop.permute.xlu0 %904
    %v907 = vadd.f32 %v897, %v905
    %v908 = vtanh.pop %v907
    %910 = vrot.lane.b32.xlu0 %v908, 64
    %v911 = vpop.permute.xlu0 %910
    %v913 = vmul.f32 %v894, %v911
    %915 = vst [vmem:[#allocation1] ss:$4 sm:$0xff] %v847
    %v916 = vld.sshfl [vmem:[#allocation1] sm:$0xff pattern:$0x73625140]
    %917 = vrot.lane.b32.xlu0 %v916, 32
    %v918 = vpop.permute.xlu0 %917
    %v919 = vsel %vm264, %v918, 0
    %921 = vmatpush.msra.mxu0 0.0
    %922 = vmatpush.msra.mxu0 0.0
    %923 = vmatpush.msra.mxu0 0.0
    %924 = vmatpush.msra.mxu0 0.0
    %925 = vmatpush.msra.mxu0 0.0
    %926 = vmatpush.msra.mxu0 0.0
    %927 = vmatpush.msra.mxu0 0.0
    %928 = vmatpush.msra.mxu0 0.0
    %929 = vmatpush.msra.mxu0 0.0
    %930 = vmatpush.msra.mxu0 0.0
    %931 = vmatpush.msra.mxu0 0.0
    %932 = vmatpush.msra.mxu0 0.0
    %933 = vmatpush.msra.mxu0 %v73
    %934 = vmatpush.msra.mxu0 %v72
    %935 = vmatpush.msra.mxu0 %v71
    %936 = vmatpush.msra.mxu0 %v70
    %937 = vmatmul.f32.gmra.mxu0 %v919
    %v938 = vpop.f32.mrf.mxu0
    %v939 = vadd.f32 0.0, %v938
    %940 = vdwg.mxu0
    %v941 = vadd.f32 %v173, %v939
    %v942 = vxor.u32 %v941, 2147483648
    %v943 = vmul.f32 %v942, 1.442695
    %v944 = vpow.pop %v943
    %v945 = vadd.f32 %v944, 1.0
    %v946 = vrcp.pop %v945
    %v947 = vmul.f32 %v945, %v946
    %v948 = vsub.f32 1.0, %v947
    %v949 = vmul.f32 %v946, %v948
    %v950 = vadd.f32 %v946, %v949
    %vm951 = vweird.f32 %v945
    %vm952 = vweird.f32 %v946
    %vm953 = vmor %vm951, %vm952
    %v954 = vsel %vm953, %v946, %v950
    %v955 = vand.u32 2147483647, %v945
    %vm956 = vcmp.eq.f32.partialorder %v955, 8.507059e+37
    %v957 = vand.u32 %v945, 2147483648
    %v958 = vor.u32 1.1754944e-38, %v957
    %v959 = vsel %vm956, %v958, %v954
    %v960 = vmul.f32 1.0, %v959
    %v961 = vmul.f32 %v960, 2.0
    %v962 = vsub.f32 %v961, 1.0
    %v963 = vmul.f32 %v960, %v841
    %965 = vrot.lane.b32.xlu0 %v962, 64
    %v966 = vpop.permute.xlu0 %965
    %v968 = vmul.f32 %v960, %v966
    %970 = vrot.lane.b32.xlu0 %v968, 32
    %v971 = vpop.permute.xlu0 %970
    %v973 = vadd.f32 %v963, %v971
    %v974 = vtanh.pop %v973
    %976 = vrot.lane.b32.xlu0 %v974, 64
    %v977 = vpop.permute.xlu0 %976
    %v979 = vmul.f32 %v960, %v977
    %981 = vst [vmem:[#allocation1] ss:$4 sm:$0xff] %v913
    %v982 = vld.sshfl [vmem:[#allocation1] sm:$0xff pattern:$0x73625140]
    %983 = vrot.lane.b32.xlu0 %v982, 32
    %v984 = vpop.permute.xlu0 %983
    %v985 = vsel %vm264, %v984, 0
    %987 = vmatpush.msra.mxu0 0.0
    %988 = vmatpush.msra.mxu0 0.0
    %989 = vmatpush.msra.mxu0 0.0
    %990 = vmatpush.msra.mxu0 0.0
    %991 = vmatpush.msra.mxu0 0.0
    %992 = vmatpush.msra.mxu0 0.0
    %993 = vmatpush.msra.mxu0 0.0
    %994 = vmatpush.msra.mxu0 0.0
    %995 = vmatpush.msra.mxu0 0.0
    %996 = vmatpush.msra.mxu0 0.0
    %997 = vmatpush.msra.mxu0 0.0
    %998 = vmatpush.msra.mxu0 0.0
    %999 = vmatpush.msra.mxu0 %v77
    %1000 = vmatpush.msra.mxu0 %v76
    %1001 = vmatpush.msra.mxu0 %v75
    %1002 = vmatpush.msra.mxu0 %v74
    %1003 = vmatmul.f32.gmra.mxu0 %v985
    %v1004 = vpop.f32.mrf.mxu0
    %v1005 = vadd.f32 0.0, %v1004
    %1006 = vdwg.mxu0
    %v1007 = vadd.f32 %v253, %v1005
    %v1008 = vxor.u32 %v1007, 2147483648
    %v1009 = vmul.f32 %v1008, 1.442695
    %v1010 = vpow.pop %v1009
    %v1011 = vadd.f32 %v1010, 1.0
    %v1012 = vrcp.pop %v1011
    %v1013 = vmul.f32 %v1011, %v1012
    %v1014 = vsub.f32 1.0, %v1013
    %v1015 = vmul.f32 %v1012, %v1014
    %v1016 = vadd.f32 %v1012, %v1015
    %vm1017 = vweird.f32 %v1011
    %vm1018 = vweird.f32 %v1012
    %vm1019 = vmor %vm1017, %vm1018
    %v1020 = vsel %vm1019, %v1012, %v1016
    %v1021 = vand.u32 2147483647, %v1011
    %vm1022 = vcmp.eq.f32.partialorder %v1021, 8.507059e+37
    %v1023 = vand.u32 %v1011, 2147483648
    %v1024 = vor.u32 1.1754944e-38, %v1023
    %v1025 = vsel %vm1022, %v1024, %v1020
    %v1026 = vmul.f32 1.0, %v1025
    %v1027 = vmul.f32 %v1026, 2.0
    %v1028 = vsub.f32 %v1027, 1.0
    %v1029 = vmul.f32 %v1026, %v907
    %1031 = vrot.lane.b32.xlu0 %v1028, 64
    %v1032 = vpop.permute.xlu0 %1031
    %v1034 = vmul.f32 %v1026, %v1032
    %1036 = vrot.lane.b32.xlu0 %v1034, 32
    %v1037 = vpop.permute.xlu0 %1036
    %v1039 = vadd.f32 %v1029, %v1037
    %v1040 = vtanh.pop %v1039
    %1042 = vrot.lane.b32.xlu0 %v1040, 64
    %v1043 = vpop.permute.xlu0 %1042
    %v1045 = vmul.f32 %v1026, %v1043
    %1047 = vst [vmem:[#allocation1] ss:$4 sm:$0xff] %v979
    %v1048 = vld.sshfl [vmem:[#allocation1] sm:$0xff pattern:$0x73625140]
    %1049 = vrot.lane.b32.xlu0 %v1048, 32
    %v1050 = vpop.permute.xlu0 %1049
    %v1051 = vsel %vm264, %v1050, 0
    %1053 = vmatpush.msra.mxu0 0.0
    %1054 = vmatpush.msra.mxu0 0.0
    %1055 = vmatpush.msra.mxu0 0.0
    %1056 = vmatpush.msra.mxu0 0.0
    %1057 = vmatpush.msra.mxu0 0.0
    %1058 = vmatpush.msra.mxu0 0.0
    %1059 = vmatpush.msra.mxu0 0.0
    %1060 = vmatpush.msra.mxu0 0.0
    %1061 = vmatpush.msra.mxu0 0.0
    %1062 = vmatpush.msra.mxu0 0.0
    %1063 = vmatpush.msra.mxu0 0.0
    %1064 = vmatpush.msra.mxu0 0.0
    %1065 = vmatpush.msra.mxu0 %v73
    %1066 = vmatpush.msra.mxu0 %v72
    %1067 = vmatpush.msra.mxu0 %v71
    %1068 = vmatpush.msra.mxu0 %v70
    %1069 = vmatmul.f32.gmra.mxu0 %v1051
    %v1070 = vpop.f32.mrf.mxu0
    %v1071 = vadd.f32 0.0, %v1070
    %1072 = vdwg.mxu0
    %v1073 = vadd.f32 %v174, %v1071
    %v1074 = vxor.u32 %v1073, 2147483648
    %v1075 = vmul.f32 %v1074, 1.442695
    %v1076 = vpow.pop %v1075
    %v1077 = vadd.f32 %v1076, 1.0
    %v1078 = vrcp.pop %v1077
    %v1079 = vmul.f32 %v1077, %v1078
    %v1080 = vsub.f32 1.0, %v1079
    %v1081 = vmul.f32 %v1078, %v1080
    %v1082 = vadd.f32 %v1078, %v1081
    %vm1083 = vweird.f32 %v1077
    %vm1084 = vweird.f32 %v1078
    %vm1085 = vmor %vm1083, %vm1084
    %v1086 = vsel %vm1085, %v1078, %v1082
    %v1087 = vand.u32 2147483647, %v1077
    %vm1088 = vcmp.eq.f32.partialorder %v1087, 8.507059e+37
    %v1089 = vand.u32 %v1077, 2147483648
    %v1090 = vor.u32 1.1754944e-38, %v1089
    %v1091 = vsel %vm1088, %v1090, %v1086
    %v1092 = vmul.f32 1.0, %v1091
    %v1093 = vmul.f32 %v1092, 2.0
    %v1094 = vsub.f32 %v1093, 1.0
    %v1095 = vmul.f32 %v1092, %v973
    %1097 = vrot.lane.b32.xlu0 %v1094, 64
    %v1098 = vpop.permute.xlu0 %1097
    %v1100 = vmul.f32 %v1092, %v1098
    %1102 = vrot.lane.b32.xlu0 %v1100, 32
    %v1103 = vpop.permute.xlu0 %1102
    %v1105 = vadd.f32 %v1095, %v1103
    %v1106 = vtanh.pop %v1105
    %1108 = vrot.lane.b32.xlu0 %v1106, 64
    %v1109 = vpop.permute.xlu0 %1108
    %v1111 = vmul.f32 %v1092, %v1109
    %1113 = vst [vmem:[#allocation1] ss:$4 sm:$0xff] %v1045
    %v1114 = vld.sshfl [vmem:[#allocation1] sm:$0xff pattern:$0x73625140]
    %1115 = vrot.lane.b32.xlu0 %v1114, 32
    %v1116 = vpop.permute.xlu0 %1115
    %v1117 = vsel %vm264, %v1116, 0
    %1119 = vmatpush.msra.mxu0 0.0
    %1120 = vmatpush.msra.mxu0 0.0
    %1121 = vmatpush.msra.mxu0 0.0
    %1122 = vmatpush.msra.mxu0 0.0
    %1123 = vmatpush.msra.mxu0 0.0
    %1124 = vmatpush.msra.mxu0 0.0
    %1125 = vmatpush.msra.mxu0 0.0
    %1126 = vmatpush.msra.mxu0 0.0
    %1127 = vmatpush.msra.mxu0 0.0
    %1128 = vmatpush.msra.mxu0 0.0
    %1129 = vmatpush.msra.mxu0 0.0
    %1130 = vmatpush.msra.mxu0 0.0
    %1131 = vmatpush.msra.mxu0 %v77
    %1132 = vmatpush.msra.mxu0 %v76
    %1133 = vmatpush.msra.mxu0 %v75
    %1134 = vmatpush.msra.mxu0 %v74
    %1135 = vmatmul.f32.gmra.mxu0 %v1117
    %v1136 = vpop.f32.mrf.mxu0
    %v1137 = vadd.f32 0.0, %v1136
    %1138 = vdwg.mxu0
    %v1139 = vadd.f32 %v252, %v1137
    %v1140 = vxor.u32 %v1139, 2147483648
    %v1141 = vmul.f32 %v1140, 1.442695
    %v1142 = vpow.pop %v1141
    %v1143 = vadd.f32 %v1142, 1.0
    %v1144 = vrcp.pop %v1143
    %v1145 = vmul.f32 %v1143, %v1144
    %v1146 = vsub.f32 1.0, %v1145
    %v1147 = vmul.f32 %v1144, %v1146
    %v1148 = vadd.f32 %v1144, %v1147
    %vm1149 = vweird.f32 %v1143
    %vm1150 = vweird.f32 %v1144
    %vm1151 = vmor %vm1149, %vm1150
    %v1152 = vsel %vm1151, %v1144, %v1148
    %v1153 = vand.u32 2147483647, %v1143
    %vm1154 = vcmp.eq.f32.partialorder %v1153, 8.507059e+37
    %v1155 = vand.u32 %v1143, 2147483648
    %v1156 = vor.u32 1.1754944e-38, %v1155
    %v1157 = vsel %vm1154, %v1156, %v1152
    %v1158 = vmul.f32 1.0, %v1157
    %v1159 = vmul.f32 %v1158, 2.0
    %v1160 = vsub.f32 %v1159, 1.0
    %v1161 = vmul.f32 %v1158, %v1039
    %1163 = vrot.lane.b32.xlu0 %v1160, 64
    %v1164 = vpop.permute.xlu0 %1163
    %v1166 = vmul.f32 %v1158, %v1164
    %1168 = vrot.lane.b32.xlu0 %v1166, 32
    %v1169 = vpop.permute.xlu0 %1168
    %v1171 = vadd.f32 %v1161, %v1169
    %v1172 = vtanh.pop %v1171
    %1174 = vrot.lane.b32.xlu0 %v1172, 64
    %v1175 = vpop.permute.xlu0 %1174
    %v1177 = vmul.f32 %v1158, %v1175
    %1179 = vst [vmem:[#allocation1] ss:$4 sm:$0xff] %v1111
    %v1180 = vld.sshfl [vmem:[#allocation1] sm:$0xff pattern:$0x73625140]
    %1181 = vrot.lane.b32.xlu0 %v1180, 32
    %v1182 = vpop.permute.xlu0 %1181
    %v1183 = vsel %vm264, %v1182, 0
    %1185 = vmatpush.msra.mxu0 0.0
    %1186 = vmatpush.msra.mxu0 0.0
    %1187 = vmatpush.msra.mxu0 0.0
    %1188 = vmatpush.msra.mxu0 0.0
    %1189 = vmatpush.msra.mxu0 0.0
    %1190 = vmatpush.msra.mxu0 0.0
    %1191 = vmatpush.msra.mxu0 0.0
    %1192 = vmatpush.msra.mxu0 0.0
    %1193 = vmatpush.msra.mxu0 0.0
    %1194 = vmatpush.msra.mxu0 0.0
    %1195 = vmatpush.msra.mxu0 0.0
    %1196 = vmatpush.msra.mxu0 0.0
    %1197 = vmatpush.msra.mxu0 %v73
    %1198 = vmatpush.msra.mxu0 %v72
    %1199 = vmatpush.msra.mxu0 %v71
    %1200 = vmatpush.msra.mxu0 %v70
    %1201 = vmatmul.f32.gmra.mxu0 %v1183
    %v1202 = vpop.f32.mrf.mxu0
    %v1203 = vadd.f32 0.0, %v1202
    %1204 = vdwg.mxu0
    %v1205 = vadd.f32 %v175, %v1203
    %v1206 = vxor.u32 %v1205, 2147483648
    %v1207 = vmul.f32 %v1206, 1.442695
    %v1208 = vpow.pop %v1207
    %v1209 = vadd.f32 %v1208, 1.0
    %v1210 = vrcp.pop %v1209
    %v1211 = vmul.f32 %v1209, %v1210
    %v1212 = vsub.f32 1.0, %v1211
    %v1213 = vmul.f32 %v1210, %v1212
    %v1214 = vadd.f32 %v1210, %v1213
    %vm1215 = vweird.f32 %v1209
    %vm1216 = vweird.f32 %v1210
    %vm1217 = vmor %vm1215, %vm1216
    %v1218 = vsel %vm1217, %v1210, %v1214
    %v1219 = vand.u32 2147483647, %v1209
    %vm1220 = vcmp.eq.f32.partialorder %v1219, 8.507059e+37
    %v1221 = vand.u32 %v1209, 2147483648
    %v1222 = vor.u32 1.1754944e-38, %v1221
    %v1223 = vsel %vm1220, %v1222, %v1218
    %v1224 = vmul.f32 1.0, %v1223
    %v1225 = vmul.f32 %v1224, 2.0
    %v1226 = vsub.f32 %v1225, 1.0
    %v1227 = vmul.f32 %v1224, %v1105
    %1229 = vrot.lane.b32.xlu0 %v1226, 64
    %v1230 = vpop.permute.xlu0 %1229
    %v1232 = vmul.f32 %v1224, %v1230
    %1234 = vrot.lane.b32.xlu0 %v1232, 32
    %v1235 = vpop.permute.xlu0 %1234
    %v1237 = vadd.f32 %v1227, %v1235
    %v1238 = vtanh.pop %v1237
    %1240 = vrot.lane.b32.xlu0 %v1238, 64
    %v1241 = vpop.permute.xlu0 %1240
    %v1243 = vmul.f32 %v1224, %v1241
    %1245 = vst [vmem:[#allocation1] ss:$4 sm:$0xff] %v1177
    %v1246 = vld.sshfl [vmem:[#allocation1] sm:$0xff pattern:$0x73625140]
    %1247 = vrot.lane.b32.xlu0 %v1246, 32
    %v1248 = vpop.permute.xlu0 %1247
    %v1249 = vsel %vm264, %v1248, 0
    %1251 = vmatpush.msra.mxu0 0.0
    %1252 = vmatpush.msra.mxu0 0.0
    %1253 = vmatpush.msra.mxu0 0.0
    %1254 = vmatpush.msra.mxu0 0.0
    %1255 = vmatpush.msra.mxu0 0.0
    %1256 = vmatpush.msra.mxu0 0.0
    %1257 = vmatpush.msra.mxu0 0.0
    %1258 = vmatpush.msra.mxu0 0.0
    %1259 = vmatpush.msra.mxu0 0.0
    %1260 = vmatpush.msra.mxu0 0.0
    %1261 = vmatpush.msra.mxu0 0.0
    %1262 = vmatpush.msra.mxu0 0.0
    %1263 = vmatpush.msra.mxu0 %v77
    %1264 = vmatpush.msra.mxu0 %v76
    %1265 = vmatpush.msra.mxu0 %v75
    %1266 = vmatpush.msra.mxu0 %v74
    %1267 = vmatmul.f32.gmra.mxu0 %v1249
    %v1268 = vpop.f32.mrf.mxu0
    %v1269 = vadd.f32 0.0, %v1268
    %1270 = vdwg.mxu0
    %v1271 = vadd.f32 %v245, %v1269
    %v1272 = vxor.u32 %v1271, 2147483648
    %v1273 = vmul.f32 %v1272, 1.442695
    %v1274 = vpow.pop %v1273
    %v1275 = vadd.f32 %v1274, 1.0
    %v1276 = vrcp.pop %v1275
    %v1277 = vmul.f32 %v1275, %v1276
    %v1278 = vsub.f32 1.0, %v1277
    %v1279 = vmul.f32 %v1276, %v1278
    %v1280 = vadd.f32 %v1276, %v1279
    %vm1281 = vweird.f32 %v1275
    %vm1282 = vweird.f32 %v1276
    %vm1283 = vmor %vm1281, %vm1282
    %v1284 = vsel %vm1283, %v1276, %v1280
    %v1285 = vand.u32 2147483647, %v1275
    %vm1286 = vcmp.eq.f32.partialorder %v1285, 8.507059e+37
    %v1287 = vand.u32 %v1275, 2147483648
    %v1288 = vor.u32 1.1754944e-38, %v1287
    %v1289 = vsel %vm1286, %v1288, %v1284
    %v1290 = vmul.f32 1.0, %v1289
    %v1291 = vmul.f32 %v1290, 2.0
    %v1292 = vsub.f32 %v1291, 1.0
    %v1293 = vmul.f32 %v1290, %v1171
    %1295 = vrot.lane.b32.xlu0 %v1292, 64
    %v1296 = vpop.permute.xlu0 %1295
    %v1298 = vmul.f32 %v1290, %v1296
    %1300 = vrot.lane.b32.xlu0 %v1298, 32
    %v1301 = vpop.permute.xlu0 %1300
    %v1303 = vadd.f32 %v1293, %v1301
    %v1304 = vtanh.pop %v1303
    %1306 = vrot.lane.b32.xlu0 %v1304, 64
    %v1307 = vpop.permute.xlu0 %1306
    %v1309 = vmul.f32 %v1290, %v1307
    %1310 = vst [vmem:[#allocation1] ss:$4 sm:$0xff] %v326
    %v1311 = vld.sshfl [vmem:[#allocation1] sm:$0xff pattern:$0x73625140]
    %1312 = vrot.lane.b32.xlu0 %v1311, 32
    %v1313 = vpop.permute.xlu0 %1312
    %1316 = vst [vmem:[#allocation1] ss:$4 sm:$0xff] %v1309
    %v1317 = vld.sshfl [vmem:[#allocation1] sm:$0xff pattern:$0x73625140]
    %1318 = vrot.lane.b32.xlu0 %v1317, 64
    %v1319 = vpop.permute.xlu0 %1318
    %v1321 = vsel %vm264, %v1313, %v1319
    %1322 = vst [vmem:[#allocation1] ss:$4 sm:$0xff] %v451
    %v1323 = vld.sshfl [vmem:[#allocation1] sm:$0xff pattern:$0x73625140]
    %1324 = vrot.lane.b32.xlu0 %v1323, 32
    %v1325 = vpop.permute.xlu0 %1324
    %1327 = vst [vmem:[#allocation1] ss:$4 sm:$0xff] %v1177
    %v1328 = vld.sshfl [vmem:[#allocation1] sm:$0xff pattern:$0x73625140]
    %1329 = vrot.lane.b32.xlu0 %v1328, 64
    %v1330 = vpop.permute.xlu0 %1329
    %v1332 = vsel %vm264, %v1325, %v1330
    %1333 = vst [vmem:[#allocation1] ss:$4 sm:$0xff] %v583
    %v1334 = vld.sshfl [vmem:[#allocation1] sm:$0xff pattern:$0x73625140]
    %1335 = vrot.lane.b32.xlu0 %v1334, 32
    %v1336 = vpop.permute.xlu0 %1335
    %1338 = vst [vmem:[#allocation1] ss:$4 sm:$0xff] %v1045
    %v1339 = vld.sshfl [vmem:[#allocation1] sm:$0xff pattern:$0x73625140]
    %1340 = vrot.lane.b32.xlu0 %v1339, 64
    %v1341 = vpop.permute.xlu0 %1340
    %v1343 = vsel %vm264, %v1336, %v1341
    %1344 = vst [vmem:[#allocation1] ss:$4 sm:$0xff] %v715
    %v1345 = vld.sshfl [vmem:[#allocation1] sm:$0xff pattern:$0x73625140]
    %1346 = vrot.lane.b32.xlu0 %v1345, 32
    %v1347 = vpop.permute.xlu0 %1346
    %1349 = vst [vmem:[#allocation1] ss:$4 sm:$0xff] %v913
    %v1350 = vld.sshfl [vmem:[#allocation1] sm:$0xff pattern:$0x73625140]
    %1351 = vrot.lane.b32.xlu0 %v1350, 64
    %v1352 = vpop.permute.xlu0 %1351
    %v1354 = vsel %vm264, %v1347, %v1352
    %1355 = vst [vmem:[#allocation1] ss:$4 sm:$0xff] %v847
    %v1356 = vld.sshfl [vmem:[#allocation1] sm:$0xff pattern:$0x73625140]
    %1357 = vrot.lane.b32.xlu0 %v1356, 32
    %v1358 = vpop.permute.xlu0 %1357
    %1360 = vst [vmem:[#allocation1] ss:$4 sm:$0xff] %v781
    %v1361 = vld.sshfl [vmem:[#allocation1] sm:$0xff pattern:$0x73625140]
    %1362 = vrot.lane.b32.xlu0 %v1361, 64
    %v1363 = vpop.permute.xlu0 %1362
    %v1365 = vsel %vm264, %v1358, %v1363
    %1366 = vst [vmem:[#allocation1] ss:$4 sm:$0xff] %v979
    %v1367 = vld.sshfl [vmem:[#allocation1] sm:$0xff pattern:$0x73625140]
    %1368 = vrot.lane.b32.xlu0 %v1367, 32
    %v1369 = vpop.permute.xlu0 %1368
    %1371 = vst [vmem:[#allocation1] ss:$4 sm:$0xff] %v649
    %v1372 = vld.sshfl [vmem:[#allocation1] sm:$0xff pattern:$0x73625140]
    %1373 = vrot.lane.b32.xlu0 %v1372, 64
    %v1374 = vpop.permute.xlu0 %1373
    %v1376 = vsel %vm264, %v1369, %v1374
    %1377 = vst [vmem:[#allocation1] ss:$4 sm:$0xff] %v1111
    %v1378 = vld.sshfl [vmem:[#allocation1] sm:$0xff pattern:$0x73625140]
    %1379 = vrot.lane.b32.xlu0 %v1378, 32
    %v1380 = vpop.permute.xlu0 %1379
    %1382 = vst [vmem:[#allocation1] ss:$4 sm:$0xff] %v517
    %v1383 = vld.sshfl [vmem:[#allocation1] sm:$0xff pattern:$0x73625140]
    %1384 = vrot.lane.b32.xlu0 %v1383, 64
    %v1385 = vpop.permute.xlu0 %1384
    %v1387 = vsel %vm264, %v1380, %v1385
    %1389 = vst [vmem:[#allocation1] ss:$4 sm:$0xff] %v1243
    %v1390 = vld.sshfl [vmem:[#allocation1] sm:$0xff pattern:$0x73625140]
    %1391 = vrot.lane.b32.xlu0 %v1390, 32
    %v1392 = vpop.permute.xlu0 %1391
    %1394 = vst [vmem:[#allocation1] ss:$4 sm:$0xff] %v385
    %v1395 = vld.sshfl [vmem:[#allocation1] sm:$0xff pattern:$0x73625140]
    %1396 = vrot.lane.b32.xlu0 %v1395, 64
    %v1397 = vpop.permute.xlu0 %1396
    %v1399 = vsel %vm264, %v1392, %v1397
    %v1401 = vperm.slane %v88, 0
    %1410 = vst [vmem:[#allocation1] ss:$4 sm:$0xff] %v1321
    %s1411 = scalar_lea.vmem [#allocation1], 1
    %1412 = vst [vmem:[%s1411] ss:$4 sm:$0xff] %v1332
    %s1413 = scalar_lea.vmem [#allocation1], 2
    %1414 = vst [vmem:[%s1413] ss:$4 sm:$0xff] %v1343
    %s1415 = scalar_lea.vmem [#allocation1], 3
    %1416 = vst [vmem:[%s1415] ss:$4 sm:$0xff] %v1354
    %s1417 = scalar_lea.vmem [#allocation1], 32
    %1418 = vst [vmem:[%s1417] ss:$4 sm:$0xff] %v1365
    %s1419 = scalar_lea.vmem [#allocation1], 33
    %1420 = vst [vmem:[%s1419] ss:$4 sm:$0xff] %v1376
    %s1421 = scalar_lea.vmem [#allocation1], 34
    %1422 = vst [vmem:[%s1421] ss:$4 sm:$0xff] %v1387
    %s1423 = scalar_lea.vmem [#allocation1], 35
    %1424 = vst [vmem:[%s1423] ss:$4 sm:$0xff] %v1399
    %v1425 = vld.sshfl [vmem:[#allocation1] sm:$0xff pattern:$0x73625140]
    %v1426 = vld.sshfl [vmem:[#allocation1 + $0x20] sm:$0xff pattern:$0x73625140]
    %1427 = vst [vmem:[#allocation1] ss:$4 sm:$0xff] %v1401
    %s1428 = scalar_lea.vmem [#allocation1], 1
    %1429 = vst [vmem:[%s1428] ss:$4 sm:$0xff] %v1401
    %s1430 = scalar_lea.vmem [#allocation1], 2
    %1431 = vst [vmem:[%s1430] ss:$4 sm:$0xff] %v1401
    %s1432 = scalar_lea.vmem [#allocation1], 3
    %1433 = vst [vmem:[%s1432] ss:$4 sm:$0xff] %v1401
    %s1434 = scalar_lea.vmem [#allocation1], 32
    %1435 = vst [vmem:[%s1434] ss:$4 sm:$0xff] %v1401
    %s1436 = scalar_lea.vmem [#allocation1], 33
    %1437 = vst [vmem:[%s1436] ss:$4 sm:$0xff] %v1401
    %s1438 = scalar_lea.vmem [#allocation1], 34
    %1439 = vst [vmem:[%s1438] ss:$4 sm:$0xff] %v1401
    %s1440 = scalar_lea.vmem [#allocation1], 35
    %1441 = vst [vmem:[%s1440] ss:$4 sm:$0xff] %v1401
    %v1442 = vld.sshfl [vmem:[#allocation1] sm:$0xff pattern:$0x73625140]
    %v1443 = vld.sshfl [vmem:[#allocation1 + $0x20] sm:$0xff pattern:$0x73625140]
    %vm1446 = vcmask 523264
    %v1447 = vsel %vm1446, %v1425, 0
    %v1449 = vsel %vm1446, %v1426, 0
    %1451 = vmatpush.msra.mxu0 0.0
    %1452 = vmatpush.msra.mxu0 0.0
    %1453 = vmatpush.msra.mxu0 0.0
    %1454 = vmatpush.msra.mxu0 0.0
    %1455 = vmatpush.msra.mxu0 0.0
    %1456 = vmatpush.msra.mxu0 0.0
    %1457 = vmatpush.msra.mxu0 0.0
    %1458 = vmatpush.msra.mxu0 0.0
    %1459 = vmatpush.msra.mxu0 %v61
    %1460 = vmatpush.msra.mxu0 %v60
    %1461 = vmatpush.msra.mxu0 %v59
    %1462 = vmatpush.msra.mxu0 %v58
    %1463 = vmatpush.msra.mxu0 %v57
    %1464 = vmatpush.msra.mxu0 %v56
    %1465 = vmatpush.msra.mxu0 %v55
    %1466 = vmatpush.msra.mxu0 %v54
    %1467 = vmatmul.f32.gmra.mxu0 %v1447
    %v1468 = vpop.f32.mrf.mxu0
    %v1469 = vadd.f32 %v1442, %v1468
    %1470 = vmatmul.f32.gmra.mxu0 %v1449
    %v1471 = vpop.f32.mrf.mxu0
    %v1472 = vadd.f32 %v1443, %v1471
    %1473 = vdwg.mxu0
    %v1476 = vrot.slane %v1469, 2
    %v1477 = vrot.slane %v1469, 4
    %v1478 = vrot.slane %v1469, 6
    %v1479 = vrot.slane %v1472, 2
    %v1480 = vrot.slane %v1472, 4
    %v1481 = vrot.slane %v1472, 6
    %v1489 = vperm.slane %v89, 0
    %1490 = vst [vmem:[#allocation1] ss:$4 sm:$0xff] %v1321
    %s1491 = scalar_lea.vmem [#allocation1], 1
    %1492 = vst [vmem:[%s1491] ss:$4 sm:$0xff] %v1332
    %s1493 = scalar_lea.vmem [#allocation1], 2
    %1494 = vst [vmem:[%s1493] ss:$4 sm:$0xff] %v1343
    %s1495 = scalar_lea.vmem [#allocation1], 3
    %1496 = vst [vmem:[%s1495] ss:$4 sm:$0xff] %v1354
    %s1497 = scalar_lea.vmem [#allocation1], 32
    %1498 = vst [vmem:[%s1497] ss:$4 sm:$0xff] %v1365
    %s1499 = scalar_lea.vmem [#allocation1], 33
    %1500 = vst [vmem:[%s1499] ss:$4 sm:$0xff] %v1376
    %s1501 = scalar_lea.vmem [#allocation1], 34
    %1502 = vst [vmem:[%s1501] ss:$4 sm:$0xff] %v1387
    %s1503 = scalar_lea.vmem [#allocation1], 35
    %1504 = vst [vmem:[%s1503] ss:$4 sm:$0xff] %v1399
    %v1505 = vld.sshfl [vmem:[#allocation1] sm:$0xff pattern:$0x73625140]
    %v1506 = vld.sshfl [vmem:[#allocation1 + $0x20] sm:$0xff pattern:$0x73625140]
    %1507 = vst [vmem:[#allocation1] ss:$4 sm:$0xff] %v1489
    %s1508 = scalar_lea.vmem [#allocation1], 1
    %1509 = vst [vmem:[%s1508] ss:$4 sm:$0xff] %v1489
    %s1510 = scalar_lea.vmem [#allocation1], 2
    %1511 = vst [vmem:[%s1510] ss:$4 sm:$0xff] %v1489
    %s1512 = scalar_lea.vmem [#allocation1], 3
    %1513 = vst [vmem:[%s1512] ss:$4 sm:$0xff] %v1489
    %s1514 = scalar_lea.vmem [#allocation1], 32
    %1515 = vst [vmem:[%s1514] ss:$4 sm:$0xff] %v1489
    %s1516 = scalar_lea.vmem [#allocation1], 33
    %1517 = vst [vmem:[%s1516] ss:$4 sm:$0xff] %v1489
    %s1518 = scalar_lea.vmem [#allocation1], 34
    %1519 = vst [vmem:[%s1518] ss:$4 sm:$0xff] %v1489
    %s1520 = scalar_lea.vmem [#allocation1], 35
    %1521 = vst [vmem:[%s1520] ss:$4 sm:$0xff] %v1489
    %v1522 = vld.sshfl [vmem:[#allocation1] sm:$0xff pattern:$0x73625140]
    %v1523 = vld.sshfl [vmem:[#allocation1 + $0x20] sm:$0xff pattern:$0x73625140]
    %v1526 = vsel %vm1446, %v1505, 0
    %v1528 = vsel %vm1446, %v1506, 0
    %1530 = vmatpush.msra.mxu0 0.0
    %1531 = vmatpush.msra.mxu0 0.0
    %1532 = vmatpush.msra.mxu0 0.0
    %1533 = vmatpush.msra.mxu0 0.0
    %1534 = vmatpush.msra.mxu0 0.0
    %1535 = vmatpush.msra.mxu0 0.0
    %1536 = vmatpush.msra.mxu0 0.0
    %1537 = vmatpush.msra.mxu0 0.0
    %1538 = vmatpush.msra.mxu0 %v69
    %1539 = vmatpush.msra.mxu0 %v68
    %1540 = vmatpush.msra.mxu0 %v67
    %1541 = vmatpush.msra.mxu0 %v66
    %1542 = vmatpush.msra.mxu0 %v65
    %1543 = vmatpush.msra.mxu0 %v64
    %1544 = vmatpush.msra.mxu0 %v63
    %1545 = vmatpush.msra.mxu0 %v62
    %1546 = vmatmul.f32.gmra.mxu0 %v1526
    %v1547 = vpop.f32.mrf.mxu0
    %v1548 = vadd.f32 %v1522, %v1547
    %1549 = vmatmul.f32.gmra.mxu0 %v1528
    %v1550 = vpop.f32.mrf.mxu0
    %v1551 = vadd.f32 %v1523, %v1550
    %1552 = vdwg.mxu0
    %v1555 = vrot.slane %v1548, 2
    %v1556 = vrot.slane %v1548, 4
    %v1557 = vrot.slane %v1548, 6
    %v1558 = vrot.slane %v1551, 2
    %v1559 = vrot.slane %v1551, 4
    %v1560 = vrot.slane %v1551, 6
    %1567 = vmatpush.msra.mxu0 0.0
    %1568 = vmatpush.msra.mxu0 0.0
    %1569 = vmatpush.msra.mxu0 0.0
    %1570 = vmatpush.msra.mxu0 0.0
    %1571 = vmatpush.msra.mxu0 0.0
    %1572 = vmatpush.msra.mxu0 0.0
    %1573 = vmatpush.msra.mxu0 0.0
    %1574 = vmatpush.msra.mxu0 0.0
    %1575 = vmatpush.msra.mxu0 0.0
    %1576 = vmatpush.msra.mxu0 0.0
    %1577 = vmatpush.msra.mxu0 0.0
    %1578 = vmatpush.msra.mxu0 0.0
    %1579 = vmatpush.msra.mxu0 %v81
    %1580 = vmatpush.msra.mxu0 %v80
    %1581 = vmatpush.msra.mxu0 %v79
    %1582 = vmatpush.msra.mxu0 %v78
    %1583 = vmatmul.f32.gmra.mxu0 %v266
    %v1584 = vpop.f32.mrf.mxu0
    %v1585 = vadd.f32 0.0, %v1584
    %1586 = vdwg.mxu0
    %v1587 = vadd.f32 %v1469, %v1585
    %v1588 = vxor.u32 %v1587, 2147483648
    %v1589 = vmul.f32 %v1588, 1.442695
    %v1590 = vpow.pop %v1589
    %v1591 = vadd.f32 %v1590, 1.0
    %v1592 = vrcp.pop %v1591
    %v1593 = vmul.f32 %v1591, %v1592
    %v1594 = vsub.f32 1.0, %v1593
    %v1595 = vmul.f32 %v1592, %v1594
    %v1596 = vadd.f32 %v1592, %v1595
    %vm1597 = vweird.f32 %v1591
    %vm1598 = vweird.f32 %v1592
    %vm1599 = vmor %vm1597, %vm1598
    %v1600 = vsel %vm1599, %v1592, %v1596
    %v1601 = vand.u32 2147483647, %v1591
    %vm1602 = vcmp.eq.f32.partialorder %v1601, 8.507059e+37
    %v1603 = vand.u32 %v1591, 2147483648
    %v1604 = vor.u32 1.1754944e-38, %v1603
    %v1605 = vsel %vm1602, %v1604, %v1600
    %v1606 = vmul.f32 1.0, %v1605
    %v1607 = vmul.f32 %v1606, 2.0
    %v1608 = vsub.f32 %v1607, 1.0
    %v1609 = vmul.f32 %v1606, 0.0
    %1611 = vrot.lane.b32.xlu0 %v1608, 64
    %v1612 = vpop.permute.xlu0 %1611
    %v1614 = vmul.f32 %v1606, %v1612
    %1616 = vrot.lane.b32.xlu0 %v1614, 32
    %v1617 = vpop.permute.xlu0 %1616
    %v1619 = vadd.f32 %v1609, %v1617
    %v1620 = vtanh.pop %v1619
    %1622 = vrot.lane.b32.xlu0 %v1620, 64
    %v1623 = vpop.permute.xlu0 %1622
    %v1625 = vmul.f32 %v1606, %v1623
    %1626 = vmatpush.msra.mxu0 0.0
    %1627 = vmatpush.msra.mxu0 0.0
    %1628 = vmatpush.msra.mxu0 0.0
    %1629 = vmatpush.msra.mxu0 0.0
    %1630 = vmatpush.msra.mxu0 0.0
    %1631 = vmatpush.msra.mxu0 0.0
    %1632 = vmatpush.msra.mxu0 0.0
    %1633 = vmatpush.msra.mxu0 0.0
    %1634 = vmatpush.msra.mxu0 0.0
    %1635 = vmatpush.msra.mxu0 0.0
    %1636 = vmatpush.msra.mxu0 0.0
    %1637 = vmatpush.msra.mxu0 0.0
    %1638 = vmatpush.msra.mxu0 %v85
    %1639 = vmatpush.msra.mxu0 %v84
    %1640 = vmatpush.msra.mxu0 %v83
    %1641 = vmatpush.msra.mxu0 %v82
    %1642 = vmatmul.f32.gmra.mxu0 %v266
    %v1643 = vpop.f32.mrf.mxu0
    %v1644 = vadd.f32 0.0, %v1643
    %1645 = vdwg.mxu0
    %v1646 = vadd.f32 %v1560, %v1644
    %v1647 = vxor.u32 %v1646, 2147483648
    %v1648 = vmul.f32 %v1647, 1.442695
    %v1649 = vpow.pop %v1648
    %v1650 = vadd.f32 %v1649, 1.0
    %v1651 = vrcp.pop %v1650
    %v1652 = vmul.f32 %v1650, %v1651
    %v1653 = vsub.f32 1.0, %v1652
    %v1654 = vmul.f32 %v1651, %v1653
    %v1655 = vadd.f32 %v1651, %v1654
    %vm1656 = vweird.f32 %v1650
    %vm1657 = vweird.f32 %v1651
    %vm1658 = vmor %vm1656, %vm1657
    %v1659 = vsel %vm1658, %v1651, %v1655
    %v1660 = vand.u32 2147483647, %v1650
    %vm1661 = vcmp.eq.f32.partialorder %v1660, 8.507059e+37
    %v1662 = vand.u32 %v1650, 2147483648
    %v1663 = vor.u32 1.1754944e-38, %v1662
    %v1664 = vsel %vm1661, %v1663, %v1659
    %v1665 = vmul.f32 1.0, %v1664
    %v1666 = vmul.f32 %v1665, 2.0
    %v1667 = vsub.f32 %v1666, 1.0
    %v1668 = vmul.f32 %v1665, 0.0
    %1670 = vrot.lane.b32.xlu0 %v1667, 64
    %v1671 = vpop.permute.xlu0 %1670
    %v1673 = vmul.f32 %v1665, %v1671
    %1675 = vrot.lane.b32.xlu0 %v1673, 32
    %v1676 = vpop.permute.xlu0 %1675
    %v1678 = vadd.f32 %v1668, %v1676
    %v1679 = vtanh.pop %v1678
    %1681 = vrot.lane.b32.xlu0 %v1679, 64
    %v1682 = vpop.permute.xlu0 %1681
    %v1684 = vmul.f32 %v1665, %v1682
    %1686 = vst [vmem:[#allocation1] ss:$4 sm:$0xff] %v1625
    %v1687 = vld.sshfl [vmem:[#allocation1] sm:$0xff pattern:$0x73625140]
    %1688 = vrot.lane.b32.xlu0 %v1687, 32
    %v1689 = vpop.permute.xlu0 %1688
    %v1690 = vsel %vm264, %v1689, 0
    %1692 = vmatpush.msra.mxu0 0.0
    %1693 = vmatpush.msra.mxu0 0.0
    %1694 = vmatpush.msra.mxu0 0.0
    %1695 = vmatpush.msra.mxu0 0.0
    %1696 = vmatpush.msra.mxu0 0.0
    %1697 = vmatpush.msra.mxu0 0.0
    %1698 = vmatpush.msra.mxu0 0.0
    %1699 = vmatpush.msra.mxu0 0.0
    %1700 = vmatpush.msra.mxu0 0.0
    %1701 = vmatpush.msra.mxu0 0.0
    %1702 = vmatpush.msra.mxu0 0.0
    %1703 = vmatpush.msra.mxu0 0.0
    %1704 = vmatpush.msra.mxu0 %v81
    %1705 = vmatpush.msra.mxu0 %v80
    %1706 = vmatpush.msra.mxu0 %v79
    %1707 = vmatpush.msra.mxu0 %v78
    %1708 = vmatmul.f32.gmra.mxu0 %v1690
    %v1709 = vpop.f32.mrf.mxu0
    %v1710 = vadd.f32 0.0, %v1709
    %1711 = vdwg.mxu0
    %v1712 = vadd.f32 %v1476, %v1710
    %v1713 = vxor.u32 %v1712, 2147483648
    %v1714 = vmul.f32 %v1713, 1.442695
    %v1715 = vpow.pop %v1714
    %v1716 = vadd.f32 %v1715, 1.0
    %v1717 = vrcp.pop %v1716
    %v1718 = vmul.f32 %v1716, %v1717
    %v1719 = vsub.f32 1.0, %v1718
    %v1720 = vmul.f32 %v1717, %v1719
    %v1721 = vadd.f32 %v1717, %v1720
    %vm1722 = vweird.f32 %v1716
    %vm1723 = vweird.f32 %v1717
    %vm1724 = vmor %vm1722, %vm1723
    %v1725 = vsel %vm1724, %v1717, %v1721
    %v1726 = vand.u32 2147483647, %v1716
    %vm1727 = vcmp.eq.f32.partialorder %v1726, 8.507059e+37
    %v1728 = vand.u32 %v1716, 2147483648
    %v1729 = vor.u32 1.1754944e-38, %v1728
    %v1730 = vsel %vm1727, %v1729, %v1725
    %v1731 = vmul.f32 1.0, %v1730
    %v1732 = vmul.f32 %v1731, 2.0
    %v1733 = vsub.f32 %v1732, 1.0
    %v1734 = vmul.f32 %v1731, %v1619
    %1736 = vrot.lane.b32.xlu0 %v1733, 64
    %v1737 = vpop.permute.xlu0 %1736
    %v1739 = vmul.f32 %v1731, %v1737
    %1741 = vrot.lane.b32.xlu0 %v1739, 32
    %v1742 = vpop.permute.xlu0 %1741
    %v1744 = vadd.f32 %v1734, %v1742
    %v1745 = vtanh.pop %v1744
    %1747 = vrot.lane.b32.xlu0 %v1745, 64
    %v1748 = vpop.permute.xlu0 %1747
    %v1750 = vmul.f32 %v1731, %v1748
    %1752 = vst [vmem:[#allocation1] ss:$4 sm:$0xff] %v1684
    %v1753 = vld.sshfl [vmem:[#allocation1] sm:$0xff pattern:$0x73625140]
    %1754 = vrot.lane.b32.xlu0 %v1753, 32
    %v1755 = vpop.permute.xlu0 %1754
    %v1756 = vsel %vm264, %v1755, 0
    %1758 = vmatpush.msra.mxu0 0.0
    %1759 = vmatpush.msra.mxu0 0.0
    %1760 = vmatpush.msra.mxu0 0.0
    %1761 = vmatpush.msra.mxu0 0.0
    %1762 = vmatpush.msra.mxu0 0.0
    %1763 = vmatpush.msra.mxu0 0.0
    %1764 = vmatpush.msra.mxu0 0.0
    %1765 = vmatpush.msra.mxu0 0.0
    %1766 = vmatpush.msra.mxu0 0.0
    %1767 = vmatpush.msra.mxu0 0.0
    %1768 = vmatpush.msra.mxu0 0.0
    %1769 = vmatpush.msra.mxu0 0.0
    %1770 = vmatpush.msra.mxu0 %v85
    %1771 = vmatpush.msra.mxu0 %v84
    %1772 = vmatpush.msra.mxu0 %v83
    %1773 = vmatpush.msra.mxu0 %v82
    %1774 = vmatmul.f32.gmra.mxu0 %v1756
    %v1775 = vpop.f32.mrf.mxu0
    %v1776 = vadd.f32 0.0, %v1775
    %1777 = vdwg.mxu0
    %v1778 = vadd.f32 %v1559, %v1776
    %v1779 = vxor.u32 %v1778, 2147483648
    %v1780 = vmul.f32 %v1779, 1.442695
    %v1781 = vpow.pop %v1780
    %v1782 = vadd.f32 %v1781, 1.0
    %v1783 = vrcp.pop %v1782
    %v1784 = vmul.f32 %v1782, %v1783
    %v1785 = vsub.f32 1.0, %v1784
    %v1786 = vmul.f32 %v1783, %v1785
    %v1787 = vadd.f32 %v1783, %v1786
    %vm1788 = vweird.f32 %v1782
    %vm1789 = vweird.f32 %v1783
    %vm1790 = vmor %vm1788, %vm1789
    %v1791 = vsel %vm1790, %v1783, %v1787
    %v1792 = vand.u32 2147483647, %v1782
    %vm1793 = vcmp.eq.f32.partialorder %v1792, 8.507059e+37
    %v1794 = vand.u32 %v1782, 2147483648
    %v1795 = vor.u32 1.1754944e-38, %v1794
    %v1796 = vsel %vm1793, %v1795, %v1791
    %v1797 = vmul.f32 1.0, %v1796
    %v1798 = vmul.f32 %v1797, 2.0
    %v1799 = vsub.f32 %v1798, 1.0
    %v1800 = vmul.f32 %v1797, %v1678
    %1802 = vrot.lane.b32.xlu0 %v1799, 64
    %v1803 = vpop.permute.xlu0 %1802
    %v1805 = vmul.f32 %v1797, %v1803
    %1807 = vrot.lane.b32.xlu0 %v1805, 32
    %v1808 = vpop.permute.xlu0 %1807
    %v1810 = vadd.f32 %v1800, %v1808
    %v1811 = vtanh.pop %v1810
    %1813 = vrot.lane.b32.xlu0 %v1811, 64
    %v1814 = vpop.permute.xlu0 %1813
    %v1816 = vmul.f32 %v1797, %v1814
    %1818 = vst [vmem:[#allocation1] ss:$4 sm:$0xff] %v1750
    %v1819 = vld.sshfl [vmem:[#allocation1] sm:$0xff pattern:$0x73625140]
    %1820 = vrot.lane.b32.xlu0 %v1819, 32
    %v1821 = vpop.permute.xlu0 %1820
    %v1822 = vsel %vm264, %v1821, 0
    %1824 = vmatpush.msra.mxu0 0.0
    %1825 = vmatpush.msra.mxu0 0.0
    %1826 = vmatpush.msra.mxu0 0.0
    %1827 = vmatpush.msra.mxu0 0.0
    %1828 = vmatpush.msra.mxu0 0.0
    %1829 = vmatpush.msra.mxu0 0.0
    %1830 = vmatpush.msra.mxu0 0.0
    %1831 = vmatpush.msra.mxu0 0.0
    %1832 = vmatpush.msra.mxu0 0.0
    %1833 = vmatpush.msra.mxu0 0.0
    %1834 = vmatpush.msra.mxu0 0.0
    %1835 = vmatpush.msra.mxu0 0.0
    %1836 = vmatpush.msra.mxu0 %v81
    %1837 = vmatpush.msra.mxu0 %v80
    %1838 = vmatpush.msra.mxu0 %v79
    %1839 = vmatpush.msra.mxu0 %v78
    %1840 = vmatmul.f32.gmra.mxu0 %v1822
    %v1841 = vpop.f32.mrf.mxu0
    %v1842 = vadd.f32 0.0, %v1841
    %1843 = vdwg.mxu0
    %v1844 = vadd.f32 %v1477, %v1842
    %v1845 = vxor.u32 %v1844, 2147483648
    %v1846 = vmul.f32 %v1845, 1.442695
    %v1847 = vpow.pop %v1846
    %v1848 = vadd.f32 %v1847, 1.0
    %v1849 = vrcp.pop %v1848
    %v1850 = vmul.f32 %v1848, %v1849
    %v1851 = vsub.f32 1.0, %v1850
    %v1852 = vmul.f32 %v1849, %v1851
    %v1853 = vadd.f32 %v1849, %v1852
    %vm1854 = vweird.f32 %v1848
    %vm1855 = vweird.f32 %v1849
    %vm1856 = vmor %vm1854, %vm1855
    %v1857 = vsel %vm1856, %v1849, %v1853
    %v1858 = vand.u32 2147483647, %v1848
    %vm1859 = vcmp.eq.f32.partialorder %v1858, 8.507059e+37
    %v1860 = vand.u32 %v1848, 2147483648
    %v1861 = vor.u32 1.1754944e-38, %v1860
    %v1862 = vsel %vm1859, %v1861, %v1857
    %v1863 = vmul.f32 1.0, %v1862
    %v1864 = vmul.f32 %v1863, 2.0
    %v1865 = vsub.f32 %v1864, 1.0
    %v1866 = vmul.f32 %v1863, %v1744
    %1868 = vrot.lane.b32.xlu0 %v1865, 64
    %v1869 = vpop.permute.xlu0 %1868
    %v1871 = vmul.f32 %v1863, %v1869
    %1873 = vrot.lane.b32.xlu0 %v1871, 32
    %v1874 = vpop.permute.xlu0 %1873
    %v1876 = vadd.f32 %v1866, %v1874
    %v1877 = vtanh.pop %v1876
    %1879 = vrot.lane.b32.xlu0 %v1877, 64
    %v1880 = vpop.permute.xlu0 %1879
    %v1882 = vmul.f32 %v1863, %v1880
    %1884 = vst [vmem:[#allocation1] ss:$4 sm:$0xff] %v1816
    %v1885 = vld.sshfl [vmem:[#allocation1] sm:$0xff pattern:$0x73625140]
    %1886 = vrot.lane.b32.xlu0 %v1885, 32
    %v1887 = vpop.permute.xlu0 %1886
    %v1888 = vsel %vm264, %v1887, 0
    %1890 = vmatpush.msra.mxu0 0.0
    %1891 = vmatpush.msra.mxu0 0.0
    %1892 = vmatpush.msra.mxu0 0.0
    %1893 = vmatpush.msra.mxu0 0.0
    %1894 = vmatpush.msra.mxu0 0.0
    %1895 = vmatpush.msra.mxu0 0.0
    %1896 = vmatpush.msra.mxu0 0.0
    %1897 = vmatpush.msra.mxu0 0.0
    %1898 = vmatpush.msra.mxu0 0.0
    %1899 = vmatpush.msra.mxu0 0.0
    %1900 = vmatpush.msra.mxu0 0.0
    %1901 = vmatpush.msra.mxu0 0.0
    %1902 = vmatpush.msra.mxu0 %v85
    %1903 = vmatpush.msra.mxu0 %v84
    %1904 = vmatpush.msra.mxu0 %v83
    %1905 = vmatpush.msra.mxu0 %v82
    %1906 = vmatmul.f32.gmra.mxu0 %v1888
    %v1907 = vpop.f32.mrf.mxu0
    %v1908 = vadd.f32 0.0, %v1907
    %1909 = vdwg.mxu0
    %v1910 = vadd.f32 %v1558, %v1908
    %v1911 = vxor.u32 %v1910, 2147483648
    %v1912 = vmul.f32 %v1911, 1.442695
    %v1913 = vpow.pop %v1912
    %v1914 = vadd.f32 %v1913, 1.0
    %v1915 = vrcp.pop %v1914
    %v1916 = vmul.f32 %v1914, %v1915
    %v1917 = vsub.f32 1.0, %v1916
    %v1918 = vmul.f32 %v1915, %v1917
    %v1919 = vadd.f32 %v1915, %v1918
    %vm1920 = vweird.f32 %v1914
    %vm1921 = vweird.f32 %v1915
    %vm1922 = vmor %vm1920, %vm1921
    %v1923 = vsel %vm1922, %v1915, %v1919
    %v1924 = vand.u32 2147483647, %v1914
    %vm1925 = vcmp.eq.f32.partialorder %v1924, 8.507059e+37
    %v1926 = vand.u32 %v1914, 2147483648
    %v1927 = vor.u32 1.1754944e-38, %v1926
    %v1928 = vsel %vm1925, %v1927, %v1923
    %v1929 = vmul.f32 1.0, %v1928
    %v1930 = vmul.f32 %v1929, 2.0
    %v1931 = vsub.f32 %v1930, 1.0
    %v1932 = vmul.f32 %v1929, %v1810
    %1934 = vrot.lane.b32.xlu0 %v1931, 64
    %v1935 = vpop.permute.xlu0 %1934
    %v1937 = vmul.f32 %v1929, %v1935
    %1939 = vrot.lane.b32.xlu0 %v1937, 32
    %v1940 = vpop.permute.xlu0 %1939
    %v1942 = vadd.f32 %v1932, %v1940
    %v1943 = vtanh.pop %v1942
    %1945 = vrot.lane.b32.xlu0 %v1943, 64
    %v1946 = vpop.permute.xlu0 %1945
    %v1948 = vmul.f32 %v1929, %v1946
    %1950 = vst [vmem:[#allocation1] ss:$4 sm:$0xff] %v1882
    %v1951 = vld.sshfl [vmem:[#allocation1] sm:$0xff pattern:$0x73625140]
    %1952 = vrot.lane.b32.xlu0 %v1951, 32
    %v1953 = vpop.permute.xlu0 %1952
    %v1954 = vsel %vm264, %v1953, 0
    %1956 = vmatpush.msra.mxu0 0.0
    %1957 = vmatpush.msra.mxu0 0.0
    %1958 = vmatpush.msra.mxu0 0.0
    %1959 = vmatpush.msra.mxu0 0.0
    %1960 = vmatpush.msra.mxu0 0.0
    %1961 = vmatpush.msra.mxu0 0.0
    %1962 = vmatpush.msra.mxu0 0.0
    %1963 = vmatpush.msra.mxu0 0.0
    %1964 = vmatpush.msra.mxu0 0.0
    %1965 = vmatpush.msra.mxu0 0.0
    %1966 = vmatpush.msra.mxu0 0.0
    %1967 = vmatpush.msra.mxu0 0.0
    %1968 = vmatpush.msra.mxu0 %v81
    %1969 = vmatpush.msra.mxu0 %v80
    %1970 = vmatpush.msra.mxu0 %v79
    %1971 = vmatpush.msra.mxu0 %v78
    %1972 = vmatmul.f32.gmra.mxu0 %v1954
    %v1973 = vpop.f32.mrf.mxu0
    %v1974 = vadd.f32 0.0, %v1973
    %1975 = vdwg.mxu0
    %v1976 = vadd.f32 %v1478, %v1974
    %v1977 = vxor.u32 %v1976, 2147483648
    %v1978 = vmul.f32 %v1977, 1.442695
    %v1979 = vpow.pop %v1978
    %v1980 = vadd.f32 %v1979, 1.0
    %v1981 = vrcp.pop %v1980
    %v1982 = vmul.f32 %v1980, %v1981
    %v1983 = vsub.f32 1.0, %v1982
    %v1984 = vmul.f32 %v1981, %v1983
    %v1985 = vadd.f32 %v1981, %v1984
    %vm1986 = vweird.f32 %v1980
    %vm1987 = vweird.f32 %v1981
    %vm1988 = vmor %vm1986, %vm1987
    %v1989 = vsel %vm1988, %v1981, %v1985
    %v1990 = vand.u32 2147483647, %v1980
    %vm1991 = vcmp.eq.f32.partialorder %v1990, 8.507059e+37
    %v1992 = vand.u32 %v1980, 2147483648
    %v1993 = vor.u32 1.1754944e-38, %v1992
    %v1994 = vsel %vm1991, %v1993, %v1989
    %v1995 = vmul.f32 1.0, %v1994
    %v1996 = vmul.f32 %v1995, 2.0
    %v1997 = vsub.f32 %v1996, 1.0
    %v1998 = vmul.f32 %v1995, %v1876
    %2000 = vrot.lane.b32.xlu0 %v1997, 64
    %v2001 = vpop.permute.xlu0 %2000
    %v2003 = vmul.f32 %v1995, %v2001
    %2005 = vrot.lane.b32.xlu0 %v2003, 32
    %v2006 = vpop.permute.xlu0 %2005
    %v2008 = vadd.f32 %v1998, %v2006
    %v2009 = vtanh.pop %v2008
    %2011 = vrot.lane.b32.xlu0 %v2009, 64
    %v2012 = vpop.permute.xlu0 %2011
    %v2014 = vmul.f32 %v1995, %v2012
    %2016 = vst [vmem:[#allocation1] ss:$4 sm:$0xff] %v1948
    %v2017 = vld.sshfl [vmem:[#allocation1] sm:$0xff pattern:$0x73625140]
    %2018 = vrot.lane.b32.xlu0 %v2017, 32
    %v2019 = vpop.permute.xlu0 %2018
    %v2020 = vsel %vm264, %v2019, 0
    %2022 = vmatpush.msra.mxu0 0.0
    %2023 = vmatpush.msra.mxu0 0.0
    %2024 = vmatpush.msra.mxu0 0.0
    %2025 = vmatpush.msra.mxu0 0.0
    %2026 = vmatpush.msra.mxu0 0.0
    %2027 = vmatpush.msra.mxu0 0.0
    %2028 = vmatpush.msra.mxu0 0.0
    %2029 = vmatpush.msra.mxu0 0.0
    %2030 = vmatpush.msra.mxu0 0.0
    %2031 = vmatpush.msra.mxu0 0.0
    %2032 = vmatpush.msra.mxu0 0.0
    %2033 = vmatpush.msra.mxu0 0.0
    %2034 = vmatpush.msra.mxu0 %v85
    %2035 = vmatpush.msra.mxu0 %v84
    %2036 = vmatpush.msra.mxu0 %v83
    %2037 = vmatpush.msra.mxu0 %v82
    %2038 = vmatmul.f32.gmra.mxu0 %v2020
    %v2039 = vpop.f32.mrf.mxu0
    %v2040 = vadd.f32 0.0, %v2039
    %2041 = vdwg.mxu0
    %v2042 = vadd.f32 %v1551, %v2040
    %v2043 = vxor.u32 %v2042, 2147483648
    %v2044 = vmul.f32 %v2043, 1.442695
    %v2045 = vpow.pop %v2044
    %v2046 = vadd.f32 %v2045, 1.0
    %v2047 = vrcp.pop %v2046
    %v2048 = vmul.f32 %v2046, %v2047
    %v2049 = vsub.f32 1.0, %v2048
    %v2050 = vmul.f32 %v2047, %v2049
    %v2051 = vadd.f32 %v2047, %v2050
    %vm2052 = vweird.f32 %v2046
    %vm2053 = vweird.f32 %v2047
    %vm2054 = vmor %vm2052, %vm2053
    %v2055 = vsel %vm2054, %v2047, %v2051
    %v2056 = vand.u32 2147483647, %v2046
    %vm2057 = vcmp.eq.f32.partialorder %v2056, 8.507059e+37
    %v2058 = vand.u32 %v2046, 2147483648
    %v2059 = vor.u32 1.1754944e-38, %v2058
    %v2060 = vsel %vm2057, %v2059, %v2055
    %v2061 = vmul.f32 1.0, %v2060
    %v2062 = vmul.f32 %v2061, 2.0
    %v2063 = vsub.f32 %v2062, 1.0
    %v2064 = vmul.f32 %v2061, %v1942
    %2066 = vrot.lane.b32.xlu0 %v2063, 64
    %v2067 = vpop.permute.xlu0 %2066
    %v2069 = vmul.f32 %v2061, %v2067
    %2071 = vrot.lane.b32.xlu0 %v2069, 32
    %v2072 = vpop.permute.xlu0 %2071
    %v2074 = vadd.f32 %v2064, %v2072
    %v2075 = vtanh.pop %v2074
    %2077 = vrot.lane.b32.xlu0 %v2075, 64
    %v2078 = vpop.permute.xlu0 %2077
    %v2080 = vmul.f32 %v2061, %v2078
    %2082 = vst [vmem:[#allocation1] ss:$4 sm:$0xff] %v2014
    %v2083 = vld.sshfl [vmem:[#allocation1] sm:$0xff pattern:$0x73625140]
    %2084 = vrot.lane.b32.xlu0 %v2083, 32
    %v2085 = vpop.permute.xlu0 %2084
    %v2086 = vsel %vm264, %v2085, 0
    %2088 = vmatpush.msra.mxu0 0.0
    %2089 = vmatpush.msra.mxu0 0.0
    %2090 = vmatpush.msra.mxu0 0.0
    %2091 = vmatpush.msra.mxu0 0.0
    %2092 = vmatpush.msra.mxu0 0.0
    %2093 = vmatpush.msra.mxu0 0.0
    %2094 = vmatpush.msra.mxu0 0.0
    %2095 = vmatpush.msra.mxu0 0.0
    %2096 = vmatpush.msra.mxu0 0.0
    %2097 = vmatpush.msra.mxu0 0.0
    %2098 = vmatpush.msra.mxu0 0.0
    %2099 = vmatpush.msra.mxu0 0.0
    %2100 = vmatpush.msra.mxu0 %v81
    %2101 = vmatpush.msra.mxu0 %v80
    %2102 = vmatpush.msra.mxu0 %v79
    %2103 = vmatpush.msra.mxu0 %v78
    %2104 = vmatmul.f32.gmra.mxu0 %v2086
    %v2105 = vpop.f32.mrf.mxu0
    %v2106 = vadd.f32 0.0, %v2105
    %2107 = vdwg.mxu0
    %v2108 = vadd.f32 %v1472, %v2106
    %v2109 = vxor.u32 %v2108, 2147483648
    %v2110 = vmul.f32 %v2109, 1.442695
    %v2111 = vpow.pop %v2110
    %v2112 = vadd.f32 %v2111, 1.0
    %v2113 = vrcp.pop %v2112
    %v2114 = vmul.f32 %v2112, %v2113
    %v2115 = vsub.f32 1.0, %v2114
    %v2116 = vmul.f32 %v2113, %v2115
    %v2117 = vadd.f32 %v2113, %v2116
    %vm2118 = vweird.f32 %v2112
    %vm2119 = vweird.f32 %v2113
    %vm2120 = vmor %vm2118, %vm2119
    %v2121 = vsel %vm2120, %v2113, %v2117
    %v2122 = vand.u32 2147483647, %v2112
    %vm2123 = vcmp.eq.f32.partialorder %v2122, 8.507059e+37
    %v2124 = vand.u32 %v2112, 2147483648
    %v2125 = vor.u32 1.1754944e-38, %v2124
    %v2126 = vsel %vm2123, %v2125, %v2121
    %v2127 = vmul.f32 1.0, %v2126
    %v2128 = vmul.f32 %v2127, 2.0
    %v2129 = vsub.f32 %v2128, 1.0
    %v2130 = vmul.f32 %v2127, %v2008
    %2132 = vrot.lane.b32.xlu0 %v2129, 64
    %v2133 = vpop.permute.xlu0 %2132
    %v2135 = vmul.f32 %v2127, %v2133
    %2137 = vrot.lane.b32.xlu0 %v2135, 32
    %v2138 = vpop.permute.xlu0 %2137
    %v2140 = vadd.f32 %v2130, %v2138
    %v2141 = vtanh.pop %v2140
    %2143 = vrot.lane.b32.xlu0 %v2141, 64
    %v2144 = vpop.permute.xlu0 %2143
    %v2146 = vmul.f32 %v2127, %v2144
    %2148 = vst [vmem:[#allocation1] ss:$4 sm:$0xff] %v2080
    %v2149 = vld.sshfl [vmem:[#allocation1] sm:$0xff pattern:$0x73625140]
    %2150 = vrot.lane.b32.xlu0 %v2149, 32
    %v2151 = vpop.permute.xlu0 %2150
    %v2152 = vsel %vm264, %v2151, 0
    %2154 = vmatpush.msra.mxu0 0.0
    %2155 = vmatpush.msra.mxu0 0.0
    %2156 = vmatpush.msra.mxu0 0.0
    %2157 = vmatpush.msra.mxu0 0.0
    %2158 = vmatpush.msra.mxu0 0.0
    %2159 = vmatpush.msra.mxu0 0.0
    %2160 = vmatpush.msra.mxu0 0.0
    %2161 = vmatpush.msra.mxu0 0.0
    %2162 = vmatpush.msra.mxu0 0.0
    %2163 = vmatpush.msra.mxu0 0.0
    %2164 = vmatpush.msra.mxu0 0.0
    %2165 = vmatpush.msra.mxu0 0.0
    %2166 = vmatpush.msra.mxu0 %v85
    %2167 = vmatpush.msra.mxu0 %v84
    %2168 = vmatpush.msra.mxu0 %v83
    %2169 = vmatpush.msra.mxu0 %v82
    %2170 = vmatmul.f32.gmra.mxu0 %v2152
    %v2171 = vpop.f32.mrf.mxu0
    %v2172 = vadd.f32 0.0, %v2171
    %2173 = vdwg.mxu0
    %v2174 = vadd.f32 %v1557, %v2172
    %v2175 = vxor.u32 %v2174, 2147483648
    %v2176 = vmul.f32 %v2175, 1.442695
    %v2177 = vpow.pop %v2176
    %v2178 = vadd.f32 %v2177, 1.0
    %v2179 = vrcp.pop %v2178
    %v2180 = vmul.f32 %v2178, %v2179
    %v2181 = vsub.f32 1.0, %v2180
    %v2182 = vmul.f32 %v2179, %v2181
    %v2183 = vadd.f32 %v2179, %v2182
    %vm2184 = vweird.f32 %v2178
    %vm2185 = vweird.f32 %v2179
    %vm2186 = vmor %vm2184, %vm2185
    %v2187 = vsel %vm2186, %v2179, %v2183
    %v2188 = vand.u32 2147483647, %v2178
    %vm2189 = vcmp.eq.f32.partialorder %v2188, 8.507059e+37
    %v2190 = vand.u32 %v2178, 2147483648
    %v2191 = vor.u32 1.1754944e-38, %v2190
    %v2192 = vsel %vm2189, %v2191, %v2187
    %v2193 = vmul.f32 1.0, %v2192
    %v2194 = vmul.f32 %v2193, 2.0
    %v2195 = vsub.f32 %v2194, 1.0
    %v2196 = vmul.f32 %v2193, %v2074
    %2198 = vrot.lane.b32.xlu0 %v2195, 64
    %v2199 = vpop.permute.xlu0 %2198
    %v2201 = vmul.f32 %v2193, %v2199
    %2203 = vrot.lane.b32.xlu0 %v2201, 32
    %v2204 = vpop.permute.xlu0 %2203
    %v2206 = vadd.f32 %v2196, %v2204
    %v2207 = vtanh.pop %v2206
    %2209 = vrot.lane.b32.xlu0 %v2207, 64
    %v2210 = vpop.permute.xlu0 %2209
    %v2212 = vmul.f32 %v2193, %v2210
    %2214 = vst [vmem:[#allocation1] ss:$4 sm:$0xff] %v2146
    %v2215 = vld.sshfl [vmem:[#allocation1] sm:$0xff pattern:$0x73625140]
    %2216 = vrot.lane.b32.xlu0 %v2215, 32
    %v2217 = vpop.permute.xlu0 %2216
    %v2218 = vsel %vm264, %v2217, 0
    %2220 = vmatpush.msra.mxu0 0.0
    %2221 = vmatpush.msra.mxu0 0.0
    %2222 = vmatpush.msra.mxu0 0.0
    %2223 = vmatpush.msra.mxu0 0.0
    %2224 = vmatpush.msra.mxu0 0.0
    %2225 = vmatpush.msra.mxu0 0.0
    %2226 = vmatpush.msra.mxu0 0.0
    %2227 = vmatpush.msra.mxu0 0.0
    %2228 = vmatpush.msra.mxu0 0.0
    %2229 = vmatpush.msra.mxu0 0.0
    %2230 = vmatpush.msra.mxu0 0.0
    %2231 = vmatpush.msra.mxu0 0.0
    %2232 = vmatpush.msra.mxu0 %v81
    %2233 = vmatpush.msra.mxu0 %v80
    %2234 = vmatpush.msra.mxu0 %v79
    %2235 = vmatpush.msra.mxu0 %v78
    %2236 = vmatmul.f32.gmra.mxu0 %v2218
    %v2237 = vpop.f32.mrf.mxu0
    %v2238 = vadd.f32 0.0, %v2237
    %2239 = vdwg.mxu0
    %v2240 = vadd.f32 %v1479, %v2238
    %v2241 = vxor.u32 %v2240, 2147483648
    %v2242 = vmul.f32 %v2241, 1.442695
    %v2243 = vpow.pop %v2242
    %v2244 = vadd.f32 %v2243, 1.0
    %v2245 = vrcp.pop %v2244
    %v2246 = vmul.f32 %v2244, %v2245
    %v2247 = vsub.f32 1.0, %v2246
    %v2248 = vmul.f32 %v2245, %v2247
    %v2249 = vadd.f32 %v2245, %v2248
    %vm2250 = vweird.f32 %v2244
    %vm2251 = vweird.f32 %v2245
    %vm2252 = vmor %vm2250, %vm2251
    %v2253 = vsel %vm2252, %v2245, %v2249
    %v2254 = vand.u32 2147483647, %v2244
    %vm2255 = vcmp.eq.f32.partialorder %v2254, 8.507059e+37
    %v2256 = vand.u32 %v2244, 2147483648
    %v2257 = vor.u32 1.1754944e-38, %v2256
    %v2258 = vsel %vm2255, %v2257, %v2253
    %v2259 = vmul.f32 1.0, %v2258
    %v2260 = vmul.f32 %v2259, 2.0
    %v2261 = vsub.f32 %v2260, 1.0
    %v2262 = vmul.f32 %v2259, %v2140
    %2264 = vrot.lane.b32.xlu0 %v2261, 64
    %v2265 = vpop.permute.xlu0 %2264
    %v2267 = vmul.f32 %v2259, %v2265
    %2269 = vrot.lane.b32.xlu0 %v2267, 32
    %v2270 = vpop.permute.xlu0 %2269
    %v2272 = vadd.f32 %v2262, %v2270
    %v2273 = vtanh.pop %v2272
    %2275 = vrot.lane.b32.xlu0 %v2273, 64
    %v2276 = vpop.permute.xlu0 %2275
    %v2278 = vmul.f32 %v2259, %v2276
    %2280 = vst [vmem:[#allocation1] ss:$4 sm:$0xff] %v2212
    %v2281 = vld.sshfl [vmem:[#allocation1] sm:$0xff pattern:$0x73625140]
    %2282 = vrot.lane.b32.xlu0 %v2281, 32
    %v2283 = vpop.permute.xlu0 %2282
    %v2284 = vsel %vm264, %v2283, 0
    %2286 = vmatpush.msra.mxu0 0.0
    %2287 = vmatpush.msra.mxu0 0.0
    %2288 = vmatpush.msra.mxu0 0.0
    %2289 = vmatpush.msra.mxu0 0.0
    %2290 = vmatpush.msra.mxu0 0.0
    %2291 = vmatpush.msra.mxu0 0.0
    %2292 = vmatpush.msra.mxu0 0.0
    %2293 = vmatpush.msra.mxu0 0.0
    %2294 = vmatpush.msra.mxu0 0.0
    %2295 = vmatpush.msra.mxu0 0.0
    %2296 = vmatpush.msra.mxu0 0.0
    %2297 = vmatpush.msra.mxu0 0.0
    %2298 = vmatpush.msra.mxu0 %v85
    %2299 = vmatpush.msra.mxu0 %v84
    %2300 = vmatpush.msra.mxu0 %v83
    %2301 = vmatpush.msra.mxu0 %v82
    %2302 = vmatmul.f32.gmra.mxu0 %v2284
    %v2303 = vpop.f32.mrf.mxu0
    %v2304 = vadd.f32 0.0, %v2303
    %2305 = vdwg.mxu0
    %v2306 = vadd.f32 %v1556, %v2304
    %v2307 = vxor.u32 %v2306, 2147483648
    %v2308 = vmul.f32 %v2307, 1.442695
    %v2309 = vpow.pop %v2308
    %v2310 = vadd.f32 %v2309, 1.0
    %v2311 = vrcp.pop %v2310
    %v2312 = vmul.f32 %v2310, %v2311
    %v2313 = vsub.f32 1.0, %v2312
    %v2314 = vmul.f32 %v2311, %v2313
    %v2315 = vadd.f32 %v2311, %v2314
    %vm2316 = vweird.f32 %v2310
    %vm2317 = vweird.f32 %v2311
    %vm2318 = vmor %vm2316, %vm2317
    %v2319 = vsel %vm2318, %v2311, %v2315
    %v2320 = vand.u32 2147483647, %v2310
    %vm2321 = vcmp.eq.f32.partialorder %v2320, 8.507059e+37
    %v2322 = vand.u32 %v2310, 2147483648
    %v2323 = vor.u32 1.1754944e-38, %v2322
    %v2324 = vsel %vm2321, %v2323, %v2319
    %v2325 = vmul.f32 1.0, %v2324
    %v2326 = vmul.f32 %v2325, 2.0
    %v2327 = vsub.f32 %v2326, 1.0
    %v2328 = vmul.f32 %v2325, %v2206
    %2330 = vrot.lane.b32.xlu0 %v2327, 64
    %v2331 = vpop.permute.xlu0 %2330
    %v2333 = vmul.f32 %v2325, %v2331
    %2335 = vrot.lane.b32.xlu0 %v2333, 32
    %v2336 = vpop.permute.xlu0 %2335
    %v2338 = vadd.f32 %v2328, %v2336
    %v2339 = vtanh.pop %v2338
    %2341 = vrot.lane.b32.xlu0 %v2339, 64
    %v2342 = vpop.permute.xlu0 %2341
    %v2344 = vmul.f32 %v2325, %v2342
    %2346 = vst [vmem:[#allocation1] ss:$4 sm:$0xff] %v2278
    %v2347 = vld.sshfl [vmem:[#allocation1] sm:$0xff pattern:$0x73625140]
    %2348 = vrot.lane.b32.xlu0 %v2347, 32
    %v2349 = vpop.permute.xlu0 %2348
    %v2350 = vsel %vm264, %v2349, 0
    %2352 = vmatpush.msra.mxu0 0.0
    %2353 = vmatpush.msra.mxu0 0.0
    %2354 = vmatpush.msra.mxu0 0.0
    %2355 = vmatpush.msra.mxu0 0.0
    %2356 = vmatpush.msra.mxu0 0.0
    %2357 = vmatpush.msra.mxu0 0.0
    %2358 = vmatpush.msra.mxu0 0.0
    %2359 = vmatpush.msra.mxu0 0.0
    %2360 = vmatpush.msra.mxu0 0.0
    %2361 = vmatpush.msra.mxu0 0.0
    %2362 = vmatpush.msra.mxu0 0.0
    %2363 = vmatpush.msra.mxu0 0.0
    %2364 = vmatpush.msra.mxu0 %v81
    %2365 = vmatpush.msra.mxu0 %v80
    %2366 = vmatpush.msra.mxu0 %v79
    %2367 = vmatpush.msra.mxu0 %v78
    %2368 = vmatmul.f32.gmra.mxu0 %v2350
    %v2369 = vpop.f32.mrf.mxu0
    %v2370 = vadd.f32 0.0, %v2369
    %2371 = vdwg.mxu0
    %v2372 = vadd.f32 %v1480, %v2370
    %v2373 = vxor.u32 %v2372, 2147483648
    %v2374 = vmul.f32 %v2373, 1.442695
    %v2375 = vpow.pop %v2374
    %v2376 = vadd.f32 %v2375, 1.0
    %v2377 = vrcp.pop %v2376
    %v2378 = vmul.f32 %v2376, %v2377
    %v2379 = vsub.f32 1.0, %v2378
    %v2380 = vmul.f32 %v2377, %v2379
    %v2381 = vadd.f32 %v2377, %v2380
    %vm2382 = vweird.f32 %v2376
    %vm2383 = vweird.f32 %v2377
    %vm2384 = vmor %vm2382, %vm2383
    %v2385 = vsel %vm2384, %v2377, %v2381
    %v2386 = vand.u32 2147483647, %v2376
    %vm2387 = vcmp.eq.f32.partialorder %v2386, 8.507059e+37
    %v2388 = vand.u32 %v2376, 2147483648
    %v2389 = vor.u32 1.1754944e-38, %v2388
    %v2390 = vsel %vm2387, %v2389, %v2385
    %v2391 = vmul.f32 1.0, %v2390
    %v2392 = vmul.f32 %v2391, 2.0
    %v2393 = vsub.f32 %v2392, 1.0
    %v2394 = vmul.f32 %v2391, %v2272
    %2396 = vrot.lane.b32.xlu0 %v2393, 64
    %v2397 = vpop.permute.xlu0 %2396
    %v2399 = vmul.f32 %v2391, %v2397
    %2401 = vrot.lane.b32.xlu0 %v2399, 32
    %v2402 = vpop.permute.xlu0 %2401
    %v2404 = vadd.f32 %v2394, %v2402
    %v2405 = vtanh.pop %v2404
    %2407 = vrot.lane.b32.xlu0 %v2405, 64
    %v2408 = vpop.permute.xlu0 %2407
    %v2410 = vmul.f32 %v2391, %v2408
    %2412 = vst [vmem:[#allocation1] ss:$4 sm:$0xff] %v2344
    %v2413 = vld.sshfl [vmem:[#allocation1] sm:$0xff pattern:$0x73625140]
    %2414 = vrot.lane.b32.xlu0 %v2413, 32
    %v2415 = vpop.permute.xlu0 %2414
    %v2416 = vsel %vm264, %v2415, 0
    %2418 = vmatpush.msra.mxu0 0.0
    %2419 = vmatpush.msra.mxu0 0.0
    %2420 = vmatpush.msra.mxu0 0.0
    %2421 = vmatpush.msra.mxu0 0.0
    %2422 = vmatpush.msra.mxu0 0.0
    %2423 = vmatpush.msra.mxu0 0.0
    %2424 = vmatpush.msra.mxu0 0.0
    %2425 = vmatpush.msra.mxu0 0.0
    %2426 = vmatpush.msra.mxu0 0.0
    %2427 = vmatpush.msra.mxu0 0.0
    %2428 = vmatpush.msra.mxu0 0.0
    %2429 = vmatpush.msra.mxu0 0.0
    %2430 = vmatpush.msra.mxu0 %v85
    %2431 = vmatpush.msra.mxu0 %v84
    %2432 = vmatpush.msra.mxu0 %v83
    %2433 = vmatpush.msra.mxu0 %v82
    %2434 = vmatmul.f32.gmra.mxu0 %v2416
    %v2435 = vpop.f32.mrf.mxu0
    %v2436 = vadd.f32 0.0, %v2435
    %2437 = vdwg.mxu0
    %v2438 = vadd.f32 %v1555, %v2436
    %v2439 = vxor.u32 %v2438, 2147483648
    %v2440 = vmul.f32 %v2439, 1.442695
    %v2441 = vpow.pop %v2440
    %v2442 = vadd.f32 %v2441, 1.0
    %v2443 = vrcp.pop %v2442
    %v2444 = vmul.f32 %v2442, %v2443
    %v2445 = vsub.f32 1.0, %v2444
    %v2446 = vmul.f32 %v2443, %v2445
    %v2447 = vadd.f32 %v2443, %v2446
    %vm2448 = vweird.f32 %v2442
    %vm2449 = vweird.f32 %v2443
    %vm2450 = vmor %vm2448, %vm2449
    %v2451 = vsel %vm2450, %v2443, %v2447
    %v2452 = vand.u32 2147483647, %v2442
    %vm2453 = vcmp.eq.f32.partialorder %v2452, 8.507059e+37
    %v2454 = vand.u32 %v2442, 2147483648
    %v2455 = vor.u32 1.1754944e-38, %v2454
    %v2456 = vsel %vm2453, %v2455, %v2451
    %v2457 = vmul.f32 1.0, %v2456
    %v2458 = vmul.f32 %v2457, 2.0
    %v2459 = vsub.f32 %v2458, 1.0
    %v2460 = vmul.f32 %v2457, %v2338
    %2462 = vrot.lane.b32.xlu0 %v2459, 64
    %v2463 = vpop.permute.xlu0 %2462
    %v2465 = vmul.f32 %v2457, %v2463
    %2467 = vrot.lane.b32.xlu0 %v2465, 32
    %v2468 = vpop.permute.xlu0 %2467
    %v2470 = vadd.f32 %v2460, %v2468
    %v2471 = vtanh.pop %v2470
    %2473 = vrot.lane.b32.xlu0 %v2471, 64
    %v2474 = vpop.permute.xlu0 %2473
    %v2476 = vmul.f32 %v2457, %v2474
    %2478 = vst [vmem:[#allocation1] ss:$4 sm:$0xff] %v2410
    %v2479 = vld.sshfl [vmem:[#allocation1] sm:$0xff pattern:$0x73625140]
    %2480 = vrot.lane.b32.xlu0 %v2479, 32
    %v2481 = vpop.permute.xlu0 %2480
    %v2482 = vsel %vm264, %v2481, 0
    %2484 = vmatpush.msra.mxu0 0.0
    %2485 = vmatpush.msra.mxu0 0.0
    %2486 = vmatpush.msra.mxu0 0.0
    %2487 = vmatpush.msra.mxu0 0.0
    %2488 = vmatpush.msra.mxu0 0.0
    %2489 = vmatpush.msra.mxu0 0.0
    %2490 = vmatpush.msra.mxu0 0.0
    %2491 = vmatpush.msra.mxu0 0.0
    %2492 = vmatpush.msra.mxu0 0.0
    %2493 = vmatpush.msra.mxu0 0.0
    %2494 = vmatpush.msra.mxu0 0.0
    %2495 = vmatpush.msra.mxu0 0.0
    %2496 = vmatpush.msra.mxu0 %v81
    %2497 = vmatpush.msra.mxu0 %v80
    %2498 = vmatpush.msra.mxu0 %v79
    %2499 = vmatpush.msra.mxu0 %v78
    %2500 = vmatmul.f32.gmra.mxu0 %v2482
    %v2501 = vpop.f32.mrf.mxu0
    %v2502 = vadd.f32 0.0, %v2501
    %2503 = vdwg.mxu0
    %v2504 = vadd.f32 %v1481, %v2502
    %v2505 = vxor.u32 %v2504, 2147483648
    %v2506 = vmul.f32 %v2505, 1.442695
    %v2507 = vpow.pop %v2506
    %v2508 = vadd.f32 %v2507, 1.0
    %v2509 = vrcp.pop %v2508
    %v2510 = vmul.f32 %v2508, %v2509
    %v2511 = vsub.f32 1.0, %v2510
    %v2512 = vmul.f32 %v2509, %v2511
    %v2513 = vadd.f32 %v2509, %v2512
    %vm2514 = vweird.f32 %v2508
    %vm2515 = vweird.f32 %v2509
    %vm2516 = vmor %vm2514, %vm2515
    %v2517 = vsel %vm2516, %v2509, %v2513
    %v2518 = vand.u32 2147483647, %v2508
    %vm2519 = vcmp.eq.f32.partialorder %v2518, 8.507059e+37
    %v2520 = vand.u32 %v2508, 2147483648
    %v2521 = vor.u32 1.1754944e-38, %v2520
    %v2522 = vsel %vm2519, %v2521, %v2517
    %v2523 = vmul.f32 1.0, %v2522
    %v2524 = vmul.f32 %v2523, 2.0
    %v2525 = vsub.f32 %v2524, 1.0
    %v2526 = vmul.f32 %v2523, %v2404
    %2528 = vrot.lane.b32.xlu0 %v2525, 64
    %v2529 = vpop.permute.xlu0 %2528
    %v2531 = vmul.f32 %v2523, %v2529
    %2533 = vrot.lane.b32.xlu0 %v2531, 32
    %v2534 = vpop.permute.xlu0 %2533
    %v2536 = vadd.f32 %v2526, %v2534
    %v2537 = vtanh.pop %v2536
    %2539 = vrot.lane.b32.xlu0 %v2537, 64
    %v2540 = vpop.permute.xlu0 %2539
    %v2542 = vmul.f32 %v2523, %v2540
    %2544 = vst [vmem:[#allocation1] ss:$4 sm:$0xff] %v2476
    %v2545 = vld.sshfl [vmem:[#allocation1] sm:$0xff pattern:$0x73625140]
    %2546 = vrot.lane.b32.xlu0 %v2545, 32
    %v2547 = vpop.permute.xlu0 %2546
    %v2548 = vsel %vm264, %v2547, 0
    %2550 = vmatpush.msra.mxu0 0.0
    %2551 = vmatpush.msra.mxu0 0.0
    %2552 = vmatpush.msra.mxu0 0.0
    %2553 = vmatpush.msra.mxu0 0.0
    %2554 = vmatpush.msra.mxu0 0.0
    %2555 = vmatpush.msra.mxu0 0.0
    %2556 = vmatpush.msra.mxu0 0.0
    %2557 = vmatpush.msra.mxu0 0.0
    %2558 = vmatpush.msra.mxu0 0.0
    %2559 = vmatpush.msra.mxu0 0.0
    %2560 = vmatpush.msra.mxu0 0.0
    %2561 = vmatpush.msra.mxu0 0.0
    %2562 = vmatpush.msra.mxu0 %v85
    %2563 = vmatpush.msra.mxu0 %v84
    %2564 = vmatpush.msra.mxu0 %v83
    %2565 = vmatpush.msra.mxu0 %v82
    %2566 = vmatmul.f32.gmra.mxu0 %v2548
    %v2567 = vpop.f32.mrf.mxu0
    %v2568 = vadd.f32 0.0, %v2567
    %2569 = vdwg.mxu0
    %v2570 = vadd.f32 %v1548, %v2568
    %v2571 = vxor.u32 %v2570, 2147483648
    %v2572 = vmul.f32 %v2571, 1.442695
    %v2573 = vpow.pop %v2572
    %v2574 = vadd.f32 %v2573, 1.0
    %v2575 = vrcp.pop %v2574
    %v2576 = vmul.f32 %v2574, %v2575
    %v2577 = vsub.f32 1.0, %v2576
    %v2578 = vmul.f32 %v2575, %v2577
    %v2579 = vadd.f32 %v2575, %v2578
    %vm2580 = vweird.f32 %v2574
    %vm2581 = vweird.f32 %v2575
    %vm2582 = vmor %vm2580, %vm2581
    %v2583 = vsel %vm2582, %v2575, %v2579
    %v2584 = vand.u32 2147483647, %v2574
    %vm2585 = vcmp.eq.f32.partialorder %v2584, 8.507059e+37
    %v2586 = vand.u32 %v2574, 2147483648
    %v2587 = vor.u32 1.1754944e-38, %v2586
    %v2588 = vsel %vm2585, %v2587, %v2583
    %v2589 = vmul.f32 1.0, %v2588
    %v2590 = vmul.f32 %v2589, 2.0
    %v2591 = vsub.f32 %v2590, 1.0
    %v2592 = vmul.f32 %v2589, %v2470
    %2594 = vrot.lane.b32.xlu0 %v2591, 64
    %v2595 = vpop.permute.xlu0 %2594
    %v2597 = vmul.f32 %v2589, %v2595
    %2599 = vrot.lane.b32.xlu0 %v2597, 32
    %v2600 = vpop.permute.xlu0 %2599
    %v2602 = vadd.f32 %v2592, %v2600
    %v2603 = vtanh.pop %v2602
    %2605 = vrot.lane.b32.xlu0 %v2603, 64
    %v2606 = vpop.permute.xlu0 %2605
    %v2608 = vmul.f32 %v2589, %v2606
    %2609 = vst [vmem:[#allocation1] ss:$4 sm:$0xff] %v1625
    %v2610 = vld.sshfl [vmem:[#allocation1] sm:$0xff pattern:$0x73625140]
    %2611 = vrot.lane.b32.xlu0 %v2610, 32
    %v2612 = vpop.permute.xlu0 %2611
    %2615 = vst [vmem:[#allocation1] ss:$4 sm:$0xff] %v2608
    %v2616 = vld.sshfl [vmem:[#allocation1] sm:$0xff pattern:$0x73625140]
    %2617 = vrot.lane.b32.xlu0 %v2616, 64
    %v2618 = vpop.permute.xlu0 %2617
    %v2620 = vsel %vm264, %v2612, %v2618
    %2621 = vst [vmem:[#allocation1] ss:$4 sm:$0xff] %v1750
    %v2622 = vld.sshfl [vmem:[#allocation1] sm:$0xff pattern:$0x73625140]
    %2623 = vrot.lane.b32.xlu0 %v2622, 32
    %v2624 = vpop.permute.xlu0 %2623
    %2626 = vst [vmem:[#allocation1] ss:$4 sm:$0xff] %v2476
    %v2627 = vld.sshfl [vmem:[#allocation1] sm:$0xff pattern:$0x73625140]
    %2628 = vrot.lane.b32.xlu0 %v2627, 64
    %v2629 = vpop.permute.xlu0 %2628
    %v2631 = vsel %vm264, %v2624, %v2629
    %2632 = vst [vmem:[#allocation1] ss:$4 sm:$0xff] %v1882
    %v2633 = vld.sshfl [vmem:[#allocation1] sm:$0xff pattern:$0x73625140]
    %2634 = vrot.lane.b32.xlu0 %v2633, 32
    %v2635 = vpop.permute.xlu0 %2634
    %2637 = vst [vmem:[#allocation1] ss:$4 sm:$0xff] %v2344
    %v2638 = vld.sshfl [vmem:[#allocation1] sm:$0xff pattern:$0x73625140]
    %2639 = vrot.lane.b32.xlu0 %v2638, 64
    %v2640 = vpop.permute.xlu0 %2639
    %v2642 = vsel %vm264, %v2635, %v2640
    %2643 = vst [vmem:[#allocation1] ss:$4 sm:$0xff] %v2014
    %v2644 = vld.sshfl [vmem:[#allocation1] sm:$0xff pattern:$0x73625140]
    %2645 = vrot.lane.b32.xlu0 %v2644, 32
    %v2646 = vpop.permute.xlu0 %2645
    %2648 = vst [vmem:[#allocation1] ss:$4 sm:$0xff] %v2212
    %v2649 = vld.sshfl [vmem:[#allocation1] sm:$0xff pattern:$0x73625140]
    %2650 = vrot.lane.b32.xlu0 %v2649, 64
    %v2651 = vpop.permute.xlu0 %2650
    %v2653 = vsel %vm264, %v2646, %v2651
    %2654 = vst [vmem:[#allocation1] ss:$4 sm:$0xff] %v2146
    %v2655 = vld.sshfl [vmem:[#allocation1] sm:$0xff pattern:$0x73625140]
    %2656 = vrot.lane.b32.xlu0 %v2655, 32
    %v2657 = vpop.permute.xlu0 %2656
    %2659 = vst [vmem:[#allocation1] ss:$4 sm:$0xff] %v2080
    %v2660 = vld.sshfl [vmem:[#allocation1] sm:$0xff pattern:$0x73625140]
    %2661 = vrot.lane.b32.xlu0 %v2660, 64
    %v2662 = vpop.permute.xlu0 %2661
    %v2664 = vsel %vm264, %v2657, %v2662
    %2665 = vst [vmem:[#allocation1] ss:$4 sm:$0xff] %v2278
    %v2666 = vld.sshfl [vmem:[#allocation1] sm:$0xff pattern:$0x73625140]
    %2667 = vrot.lane.b32.xlu0 %v2666, 32
    %v2668 = vpop.permute.xlu0 %2667
    %2670 = vst [vmem:[#allocation1] ss:$4 sm:$0xff] %v1948
    %v2671 = vld.sshfl [vmem:[#allocation1] sm:$0xff pattern:$0x73625140]
    %2672 = vrot.lane.b32.xlu0 %v2671, 64
    %v2673 = vpop.permute.xlu0 %2672
    %v2675 = vsel %vm264, %v2668, %v2673
    %2676 = vst [vmem:[#allocation1] ss:$4 sm:$0xff] %v2410
    %v2677 = vld.sshfl [vmem:[#allocation1] sm:$0xff pattern:$0x73625140]
    %2678 = vrot.lane.b32.xlu0 %v2677, 32
    %v2679 = vpop.permute.xlu0 %2678
    %2681 = vst [vmem:[#allocation1] ss:$4 sm:$0xff] %v1816
    %v2682 = vld.sshfl [vmem:[#allocation1] sm:$0xff pattern:$0x73625140]
    %2683 = vrot.lane.b32.xlu0 %v2682, 64
    %v2684 = vpop.permute.xlu0 %2683
    %v2686 = vsel %vm264, %v2679, %v2684
    %2688 = vst [vmem:[#allocation1] ss:$4 sm:$0xff] %v2542
    %v2689 = vld.sshfl [vmem:[#allocation1] sm:$0xff pattern:$0x73625140]
    %2690 = vrot.lane.b32.xlu0 %v2689, 32
    %v2691 = vpop.permute.xlu0 %2690
    %2693 = vst [vmem:[#allocation1] ss:$4 sm:$0xff] %v1684
    %v2694 = vld.sshfl [vmem:[#allocation1] sm:$0xff pattern:$0x73625140]
    %2695 = vrot.lane.b32.xlu0 %v2694, 64
    %v2696 = vpop.permute.xlu0 %2695
    %v2698 = vsel %vm264, %v2691, %v2696
    %v2699 = vld [vmem:[%s5] sm:$0xff]
    %v2700 = vld [vmem:[%s5 + $0x8] sm:$0xff]
    %v2701 = vld [vmem:[%s5 + $0x10] sm:$0xff]
    %v2702 = vld [vmem:[%s5 + $0x18] sm:$0xff]
    %v2703 = vld [vmem:[%s5 + $0x20] sm:$0xff]
    %v2704 = vld [vmem:[%s5 + $0x28] sm:$0xff]
    %v2705 = vld [vmem:[%s5 + $0x30] sm:$0xff]
    %v2706 = vld [vmem:[%s5 + $0x38] sm:$0xff]
    %v2707 = vld [vmem:[%s5 + $0x40] sm:$0xff]
    %v2708 = vld [vmem:[%s5 + $0x48] sm:$0xff]
    %v2709 = vld [vmem:[%s5 + $0x50] sm:$0xff]
    %v2710 = vld [vmem:[%s5 + $0x58] sm:$0xff]
    %v2711 = vld [vmem:[%s5 + $0x60] sm:$0xff]
    %v2712 = vld [vmem:[%s5 + $0x68] sm:$0xff]
    %v2713 = vld [vmem:[%s5 + $0x70] sm:$0xff]
    %v2714 = vld [vmem:[%s5 + $0x78] sm:$0xff]
    %v2715 = vld [vmem:[%s6] sm:$0xff]
    %v2716 = vperm.slane %v2715, 0
    %2725 = vst [vmem:[#allocation1] ss:$4 sm:$0xff] %v2620
    %s2726 = scalar_lea.vmem [#allocation1], 1
    %2727 = vst [vmem:[%s2726] ss:$4 sm:$0xff] %v2631
    %s2728 = scalar_lea.vmem [#allocation1], 2
    %2729 = vst [vmem:[%s2728] ss:$4 sm:$0xff] %v2642
    %s2730 = scalar_lea.vmem [#allocation1], 3
    %2731 = vst [vmem:[%s2730] ss:$4 sm:$0xff] %v2653
    %s2732 = scalar_lea.vmem [#allocation1], 32
    %2733 = vst [vmem:[%s2732] ss:$4 sm:$0xff] %v2664
    %s2734 = scalar_lea.vmem [#allocation1], 33
    %2735 = vst [vmem:[%s2734] ss:$4 sm:$0xff] %v2675
    %s2736 = scalar_lea.vmem [#allocation1], 34
    %2737 = vst [vmem:[%s2736] ss:$4 sm:$0xff] %v2686
    %s2738 = scalar_lea.vmem [#allocation1], 35
    %2739 = vst [vmem:[%s2738] ss:$4 sm:$0xff] %v2698
    %v2740 = vld.sshfl [vmem:[#allocation1] sm:$0xff pattern:$0x73625140]
    %v2741 = vld.sshfl [vmem:[#allocation1 + $0x20] sm:$0xff pattern:$0x73625140]
    %2743 = vst [vmem:[#allocation1] ss:$4 sm:$0xff] %v2716
    %s2744 = scalar_lea.vmem [#allocation1], 1
    %2745 = vst [vmem:[%s2744] ss:$4 sm:$0xff] %v2716
    %s2746 = scalar_lea.vmem [#allocation1], 2
    %2747 = vst [vmem:[%s2746] ss:$4 sm:$0xff] %v2716
    %s2748 = scalar_lea.vmem [#allocation1], 3
    %2749 = vst [vmem:[%s2748] ss:$4 sm:$0xff] %v2716
    %s2750 = scalar_lea.vmem [#allocation1], 32
    %2751 = vst [vmem:[%s2750] ss:$4 sm:$0xff] %v2716
    %s2752 = scalar_lea.vmem [#allocation1], 33
    %2753 = vst [vmem:[%s2752] ss:$4 sm:$0xff] %v2716
    %s2754 = scalar_lea.vmem [#allocation1], 34
    %2755 = vst [vmem:[%s2754] ss:$4 sm:$0xff] %v2716
    %s2756 = scalar_lea.vmem [#allocation1], 35
    %2757 = vst [vmem:[%s2756] ss:$4 sm:$0xff] %v2716
    %v2758 = vld.sshfl [vmem:[#allocation1] sm:$0xff pattern:$0x73625140]
    %v2759 = vld.sshfl [vmem:[#allocation1 + $0x20] sm:$0xff pattern:$0x73625140]
    %v2762 = vsel %vm1446, %v2740, 0
    %v2764 = vsel %vm1446, %v2741, 0
    %2766 = vmatpush.msra.mxu0 0.0
    %2767 = vmatpush.msra.mxu0 0.0
    %2768 = vmatpush.msra.mxu0 0.0
    %2769 = vmatpush.msra.mxu0 0.0
    %2770 = vmatpush.msra.mxu0 0.0
    %2771 = vmatpush.msra.mxu0 0.0
    %2772 = vmatpush.msra.mxu0 0.0
    %2773 = vmatpush.msra.mxu0 0.0
    %2774 = vmatpush.msra.mxu0 %v2706
    %2775 = vmatpush.msra.mxu0 %v2705
    %2776 = vmatpush.msra.mxu0 %v2704
    %2777 = vmatpush.msra.mxu0 %v2703
    %2778 = vmatpush.msra.mxu0 %v2702
    %2779 = vmatpush.msra.mxu0 %v2701
    %2780 = vmatpush.msra.mxu0 %v2700
    %2781 = vmatpush.msra.mxu0 %v2699
    %2782 = vmatmul.f32.gmra.mxu0 %v2762
    %v2783 = vpop.f32.mrf.mxu0
    %v2784 = vadd.f32 %v2758, %v2783
    %2785 = vmatmul.f32.gmra.mxu0 %v2764
    %v2786 = vpop.f32.mrf.mxu0
    %v2787 = vadd.f32 %v2759, %v2786
    %2788 = vdwg.mxu0
    %v2791 = vrot.slane %v2784, 2
    %v2792 = vrot.slane %v2784, 4
    %v2793 = vrot.slane %v2784, 6
    %v2794 = vrot.slane %v2787, 2
    %v2795 = vrot.slane %v2787, 4
    %v2796 = vrot.slane %v2787, 6
    %v2803 = vtanh.pop %v2784
    %v2804 = vtanh.pop %v2791
    %v2805 = vtanh.pop %v2792
    %v2806 = vtanh.pop %v2793
    %v2807 = vtanh.pop %v2787
    %v2808 = vtanh.pop %v2794
    %v2809 = vtanh.pop %v2795
    %v2810 = vtanh.pop %v2796
    %v2811 = vperm.slane %v2715, 1
    %v2812 = vmul.f32 %v2803, %v2811
    %v2813 = vmul.f32 %v2804, %v2811
    %v2814 = vmul.f32 %v2805, %v2811
    %v2815 = vmul.f32 %v2806, %v2811
    %v2816 = vmul.f32 %v2807, %v2811
    %v2817 = vmul.f32 %v2808, %v2811
    %v2818 = vmul.f32 %v2809, %v2811
    %v2819 = vmul.f32 %v2810, %v2811
    %vm2820 = vcmask 254976
    %v2821 = vsel %vm2820, %v2812, 0.0
    %2822 = vadd.xlane.f32.xlu0 %v2821
    %v2823 = vpop.xlane.xlu0 %2822
    %v2824 = vsel %vm2820, %v2813, 0.0
    %2825 = vadd.xlane.f32.xlu0 %v2824
    %v2826 = vpop.xlane.xlu0 %2825
    %v2827 = vsel %vm2820, %v2814, 0.0
    %2828 = vadd.xlane.f32.xlu0 %v2827
    %v2829 = vpop.xlane.xlu0 %2828
    %v2830 = vsel %vm2820, %v2815, 0.0
    %2831 = vadd.xlane.f32.xlu0 %v2830
    %v2832 = vpop.xlane.xlu0 %2831
    %v2833 = vsel %vm2820, %v2816, 0.0
    %2834 = vadd.xlane.f32.xlu0 %v2833
    %v2835 = vpop.xlane.xlu0 %2834
    %v2836 = vsel %vm2820, %v2817, 0.0
    %2837 = vadd.xlane.f32.xlu0 %v2836
    %v2838 = vpop.xlane.xlu0 %2837
    %v2839 = vsel %vm2820, %v2818, 0.0
    %2840 = vadd.xlane.f32.xlu0 %v2839
    %v2841 = vpop.xlane.xlu0 %2840
    %v2842 = vsel %vm2820, %v2819, 0.0
    %2843 = vadd.xlane.f32.xlu0 %v2842
    %v2844 = vpop.xlane.xlu0 %2843
    %v2845 = vperm.slane %v2715, 6
    %v2846 = vadd.f32 %v2823, %v2845
    %v2847 = vadd.f32 %v2826, %v2845
    %v2848 = vadd.f32 %v2829, %v2845
    %v2849 = vadd.f32 %v2832, %v2845
    %v2850 = vadd.f32 %v2835, %v2845
    %v2851 = vadd.f32 %v2838, %v2845
    %v2852 = vadd.f32 %v2841, %v2845
    %v2853 = vadd.f32 %v2844, %v2845
    %vm2854 = vcmask 1024
    %v2855 = vsel %vm2854, %v2846, -inf
    %v2856 = vsel %vm2854, %v2847, -inf
    %v2857 = vsel %vm2854, %v2848, -inf
    %v2858 = vsel %vm2854, %v2849, -inf
    %v2859 = vsel %vm2854, %v2850, -inf
    %v2860 = vmax.f32 %v2855, %v2859
    %v2861 = vsel %vm2854, %v2851, -inf
    %v2862 = vmax.f32 %v2856, %v2861
    %v2863 = vsel %vm2854, %v2852, -inf
    %v2864 = vmax.f32 %v2857, %v2863
    %v2865 = vsel %vm2854, %v2853, -inf
    %v2866 = vmax.f32 %v2858, %v2865
    %v2867 = vmax.f32 %v2860, %v2862
    %v2868 = vmax.f32 %v2864, %v2866
    %v2869 = vmax.f32 %v2867, %v2868
    %v2870 = vsub.f32 %v2846, %v2869
    %v2871 = vsub.f32 %v2847, %v2869
    %v2872 = vsub.f32 %v2848, %v2869
    %v2873 = vsub.f32 %v2849, %v2869
    %v2874 = vsub.f32 %v2850, %v2869
    %v2875 = vsub.f32 %v2851, %v2869
    %v2876 = vsub.f32 %v2852, %v2869
    %v2877 = vsub.f32 %v2853, %v2869
    %v2878 = vmul.f32 %v2870, 1.442695
    %v2879 = vpow.pop %v2878
    %v2880 = vmul.f32 %v2871, 1.442695
    %v2881 = vpow.pop %v2880
    %v2882 = vmul.f32 %v2872, 1.442695
    %v2883 = vpow.pop %v2882
    %v2884 = vmul.f32 %v2873, 1.442695
    %v2885 = vpow.pop %v2884
    %v2886 = vmul.f32 %v2874, 1.442695
    %v2887 = vpow.pop %v2886
    %v2888 = vmul.f32 %v2875, 1.442695
    %v2889 = vpow.pop %v2888
    %v2890 = vmul.f32 %v2876, 1.442695
    %v2891 = vpow.pop %v2890
    %v2892 = vmul.f32 %v2877, 1.442695
    %v2893 = vpow.pop %v2892
    %v2894 = vsel %vm2854, %v2879, 0.0
    %v2895 = vsel %vm2854, %v2881, 0.0
    %v2896 = vadd.f32 %v2894, %v2895
    %v2897 = vsel %vm2854, %v2883, 0.0
    %v2898 = vadd.f32 %v2896, %v2897
    %v2899 = vsel %vm2854, %v2885, 0.0
    %v2900 = vadd.f32 %v2898, %v2899
    %v2901 = vsel %vm2854, %v2887, 0.0
    %v2902 = vadd.f32 %v2900, %v2901
    %v2903 = vsel %vm2854, %v2889, 0.0
    %v2904 = vadd.f32 %v2902, %v2903
    %v2905 = vsel %vm2854, %v2891, 0.0
    %v2906 = vadd.f32 %v2904, %v2905
    %v2907 = vsel %vm2854, %v2893, 0.0
    %v2908 = vadd.f32 %v2906, %v2907
    %v2909 = vrcp.pop %v2908
    %v2910 = vmul.f32 %v2879, %v2909
    %v2911 = vmul.f32 %v2881, %v2909
    %v2912 = vmul.f32 %v2883, %v2909
    %v2913 = vmul.f32 %v2885, %v2909
    %v2914 = vmul.f32 %v2887, %v2909
    %v2915 = vmul.f32 %v2889, %v2909
    %v2916 = vmul.f32 %v2891, %v2909
    %v2917 = vmul.f32 %v2893, %v2909
    %2919 = vset.pattern.permute.xlu0 0
    %2920 = vperm.xlu0 %2919, %v2910
    %v2921 = vpop.permute.xlu0 %2920
    %2924 = vset.pattern.permute.xlu0 0
    %2925 = vperm.xlu0 %2924, %v2911
    %v2926 = vpop.permute.xlu0 %2925
    %2929 = vset.pattern.permute.xlu0 0
    %2930 = vperm.xlu0 %2929, %v2912
    %v2931 = vpop.permute.xlu0 %2930
    %2934 = vset.pattern.permute.xlu0 0
    %2935 = vperm.xlu0 %2934, %v2913
    %v2936 = vpop.permute.xlu0 %2935
    %2939 = vset.pattern.permute.xlu0 0
    %2940 = vperm.xlu0 %2939, %v2914
    %v2941 = vpop.permute.xlu0 %2940
    %2944 = vset.pattern.permute.xlu0 0
    %2945 = vperm.xlu0 %2944, %v2915
    %v2946 = vpop.permute.xlu0 %2945
    %2949 = vset.pattern.permute.xlu0 0
    %2950 = vperm.xlu0 %2949, %v2916
    %v2951 = vpop.permute.xlu0 %2950
    %2954 = vset.pattern.permute.xlu0 0
    %2955 = vperm.xlu0 %2954, %v2917
    %v2956 = vpop.permute.xlu0 %2955
    %v2958 = vmul.f32 %v2921, %v2620
    %v2959 = vmul.f32 %v2926, %v2631
    %v2960 = vmul.f32 %v2931, %v2642
    %v2961 = vmul.f32 %v2936, %v2653
    %v2962 = vmul.f32 %v2941, %v2664
    %v2963 = vmul.f32 %v2946, %v2675
    %v2964 = vmul.f32 %v2951, %v2686
    %v2965 = vmul.f32 %v2956, %v2698
    %vm2966 = vcmask 517120
    %v2967 = vsel %vm2966, %v2958, 0.0
    %v2968 = vsel %vm2966, %v2959, 0.0
    %v2969 = vadd.f32 %v2967, %v2968
    %v2970 = vsel %vm2966, %v2960, 0.0
    %v2971 = vadd.f32 %v2969, %v2970
    %v2972 = vsel %vm2966, %v2961, 0.0
    %v2973 = vadd.f32 %v2971, %v2972
    %v2974 = vsel %vm2966, %v2962, 0.0
    %v2975 = vadd.f32 %v2973, %v2974
    %v2976 = vsel %vm2966, %v2963, 0.0
    %v2977 = vadd.f32 %v2975, %v2976
    %v2978 = vsel %vm2966, %v2964, 0.0
    %v2979 = vadd.f32 %v2977, %v2978
    %v2980 = vsel %vm2966, %v2965, 0.0
    %v2981 = vadd.f32 %v2979, %v2980
    %v2982 = vperm.slane %v2715, 2
    %v2984 = vsel %vm1446, %v2981, 0
    %2986 = vmatpush.msra.mxu0 0.0
    %2987 = vmatpush.msra.mxu0 0.0
    %2988 = vmatpush.msra.mxu0 0.0
    %2989 = vmatpush.msra.mxu0 0.0
    %2990 = vmatpush.msra.mxu0 0.0
    %2991 = vmatpush.msra.mxu0 0.0
    %2992 = vmatpush.msra.mxu0 0.0
    %2993 = vmatpush.msra.mxu0 0.0
    %2994 = vmatpush.msra.mxu0 %v2714
    %2995 = vmatpush.msra.mxu0 %v2713
    %2996 = vmatpush.msra.mxu0 %v2712
    %2997 = vmatpush.msra.mxu0 %v2711
    %2998 = vmatpush.msra.mxu0 %v2710
    %2999 = vmatpush.msra.mxu0 %v2709
    %3000 = vmatpush.msra.mxu0 %v2708
    %3001 = vmatpush.msra.mxu0 %v2707
    %3002 = vmatmul.f32.gmra.mxu0 %v2984
    %v3003 = vpop.f32.mrf.mxu0
    %v3004 = vadd.f32 %v2982, %v3003
    %3005 = vdwg.mxu0
    %v3006 = vsel %vm2820, %v3004, 0.0
    %3007 = vadd.xlane.f32.xlu0 %v3006
    %v3008 = vpop.xlane.xlu0 %3007
    %v3009 = vrcp.pop 32.0
    %v3010 = vmul.f32 32.0, %v3009
    %v3011 = vsub.f32 1.0, %v3010
    %v3012 = vmul.f32 %v3009, %v3011
    %v3013 = vadd.f32 %v3009, %v3012
    %vm3014 = vweird.f32 %v3009
    %v3015 = vsel %vm3014, %v3009, %v3013
    %v3016 = vmul.f32 %v3008, %v3015
    %v3017 = vsub.f32 %v3004, %v3016
    %v3018 = vmul.f32 %v3017, %v3017
    %v3019 = vsel %vm2820, %v3018, 0.0
    %3020 = vadd.xlane.f32.xlu0 %v3019
    %v3021 = vpop.xlane.xlu0 %3020
    %v3022 = vmul.f32 %v3021, %v3015
    %v3023 = vadd.f32 %v3022, 1e-05
    %v3024 = vrsqrt.pop %v3023
    %v3025 = vmul.f32 %v3024, %v3023
    %v3026 = vmul.f32 %v3025, %v3024
    %v3027 = vmul.f32 0.5, %v3026
    %v3028 = vsub.f32 1.5, %v3027
    %v3029 = vmul.f32 %v3024, %v3028
    %vm3030 = vweird.f32 %v3023
    %vm3031 = vweird.f32 %v3024
    %vm3032 = vmor %vm3030, %vm3031
    %v3033 = vsel %vm3032, %v3024, %v3029
    %v3034 = vmul.f32 %v3017, %v3033
    %v3035 = vperm.slane %v2715, 3
    %v3036 = vmul.f32 %v3034, %v3035
    %v3037 = vperm.slane %v2715, 4
    %v3038 = vadd.f32 %v3036, %v3037
    %v3039 = vmax.f32 %v3038, 0.0
    %v3040 = vperm.slane %v2715, 5
    %v3041 = vmul.f32 %v3039, %v3040
    %v3042 = vsel %vm2820, %v3041, 0.0
    %3043 = vadd.xlane.f32.xlu0 %v3042
    %v3044 = vpop.xlane.xlu0 %3043
    %v3045 = vperm.slane %v2715, 7
    %v3046 = vadd.f32 %v3044, %v3045
    %3047 = vst.msk [vmem:[%s7] sm:$0x3] %vm2854, %v3046
    %3048 = vst [vmem:[#allocation1] ss:$4 sm:$0xff] %v1243
    %v3049 = vld.sshfl [vmem:[#allocation1] sm:$0xff pattern:$0x73625140]
    %3050 = vrot.lane.b32.xlu0 %v3049, 32
    %v3051 = vpop.permute.xlu0 %3050
    %3053 = vst [vmem:[#allocation1] ss:$4 sm:$0xff] %v1309
    %v3054 = vld.sshfl [vmem:[#allocation1] sm:$0xff pattern:$0x73625140]
    %3055 = vrot.lane.b32.xlu0 %v3054, 64
    %v3056 = vpop.permute.xlu0 %3055
    %3058 = vst [vmem:[#allocation1] ss:$4 sm:$0xff] %v2542
    %v3059 = vld.sshfl [vmem:[#allocation1] sm:$0xff pattern:$0x73625140]
    %3060 = vrot.lane.b32.xlu0 %v3059, 96
    %v3061 = vpop.permute.xlu0 %3060
    %3064 = vst [vmem:[#allocation1] ss:$4 sm:$0xff] %v1237
    %v3065 = vld.sshfl [vmem:[#allocation1] sm:$0xff pattern:$0x73625140]
    %3066 = vrot.lane.b32.xlu0 %v3065, 96
    %v3067 = vpop.permute.xlu0 %3066
    %3070 = vst [vmem:[#allocation1] ss:$4 sm:$0xff] %v2536
    %v3071 = vld.sshfl [vmem:[#allocation1] sm:$0xff pattern:$0x73625140]
    %3072 = vrot.lane.b32.xlu0 %v3071, 32
    %v3073 = vpop.permute.xlu0 %3072
    %3076 = vst [vmem:[#allocation1] ss:$4 sm:$0xff] %v2602
    %v3077 = vld.sshfl [vmem:[#allocation1] sm:$0xff pattern:$0x73625140]
    %3078 = vrot.lane.b32.xlu0 %v3077, 64
    %v3079 = vpop.permute.xlu0 %3078
    %v3081 = vsel %vm264, %v3051, %v3056
    %v3082 = vsel %vm1446, %v3081, %v3061
    %vm3083 = vcmask 785408
    %v3084 = vsel %vm3083, %v3082, %v2608
    %v3085 = vsel %vm264, %v3067, %v1303
    %v3086 = vsel %vm1446, %v3085, %v3073
    %v3087 = vsel %vm3083, %v3086, %v3079
    %v3090 = vrot.slane %v3087, 6
    %vm3091 = vcmask 1041408
    %v3092 = vsel %vm3091, %v3084, %v3090
    %3094 = vst [vmem:[%s8] sm:$0xf] %v3092
    // Predicated region
    $region34: #{lstm_model_forward.1} parent=1 // pred_check
      _
    $region35: #{lstm_model_forward.1} parent=1 // pred_check_branch
      %3096 = sbr.rel (0) target = $region37
    $region36: #{lstm_model_forward.1} parent=1 // pred_region
      _
    $region37: #{lstm_model_forward.1} parent=1 // pred_fallthru
      _
    // Predicated region
    $region38: #{lstm_model_forward.1} parent=1 // pred_check
      _
    $region39: #{lstm_model_forward.1} parent=1 // pred_check_branch
      %3098 = sbr.rel (0) target = $region41
    $region40: #{lstm_model_forward.1} parent=1 // pred_region
      _
    $region41: #{lstm_model_forward.1} parent=1 // pred_fallthru
      _
    // Predicated region
    $region42: #{lstm_model_forward.1} parent=1 // pred_check
      _
    $region43: #{lstm_model_forward.1} parent=1 // pred_check_branch
      %3100 = sbr.rel (0) target = $region45
    $region44: #{lstm_model_forward.1} parent=1 // pred_region
      _
    $region45: #{lstm_model_forward.1} parent=1 // pred_fallthru
      _
    // Predicated region
    $region46: #{lstm_model_forward.1} parent=1 // pred_check
      _
    $region47: #{lstm_model_forward.1} parent=1 // pred_check_branch
      %3102 = sbr.rel (0) target = $region49
    $region48: #{lstm_model_forward.1} parent=1 // pred_region
      _
    $region49: #{lstm_model_forward.1} parent=1 // pred_fallthru
      _
    %3103 = vsyncpa [#allocation3], 1

</llo_original>
